<compile_context>
chip_gen: v5e
topology: v5e:2x2
jax: 0.10.0
libtpu: 0.0.40
codegen_flags: <defaults>
</compile_context>

<pallas_src>
import functools

import jax
import jax.numpy as jnp
from jax.experimental import pallas as pl
from jax.experimental.pallas import tpu as pltpu

STEM_K = 3 * 3 * 3    # im2col patch size of the 3x3 stem conv on RGB input
STEM_C = 32           # EfficientNet-B0 stem output channels
BACKBONE_F = 1000     # backbone classifier output features (PyTorch)
FEAT_PAD = 1024       # lane-dense padded feature width used inside the kernel


def _critic_kernel(p_ref, ws_ref, bs_ref, wc_ref, bc_ref,
                   w1_ref, b1_ref, w2_ref, b2_ref,
                   w3_ref, b3_ref, w4_ref, b4_ref,
                   o_ref, acc_ref, *, tb, tp, p_total, collapse_stem):
    j = pl.program_id(1)

    @pl.when(j == 0)
    def _init():
        acc_ref[...] = jnp.zeros_like(acc_ref)

    # ---- synthetic backbone stem: 3x3/s2 conv as a bf16 MXU matmul (f32 acc),
    #      SiLU in f32, and a global-average-pool partial sum over this P tile.
    p = p_ref[...]                                           # (TB, TP, K) bf16
    if collapse_stem:
        # TP % 16 == 0 -> merging / splitting the leading dims is layout
        # preserving; one large-M matmul instead of TB small batched matmuls.
        h = jnp.dot(p.reshape(tb * tp, p.shape[-1]), ws_ref[...],
                    preferred_element_type=jnp.float32) + bs_ref[...]
        h = h * jax.nn.sigmoid(h)                            # SiLU (EUP, f32)
        acc_ref[...] += jnp.sum(h.reshape(tb, tp, STEM_C), axis=1)
    else:
        h = jnp.einsum("bpk,kc->bpc", p, ws_ref[...],
                       preferred_element_type=jnp.float32) + bs_ref[...]
        h = h * jax.nn.sigmoid(h)
        acc_ref[...] += jnp.sum(h, axis=1)

    # ---- last P tile: finish GAP, backbone fc, then the exact 4-layer MLP head.
    @pl.when(j == pl.num_programs(1) - 1)
    def _head():
        pooled = acc_ref[...] * (1.0 / p_total)              # (TB, 32) GAP
        feats = jnp.dot(pooled.astype(jnp.bfloat16), wc_ref[...],
                        preferred_element_type=jnp.float32) + bc_ref[...]
        h = jnp.maximum(feats, 0.0)                          # nn.ReLU
        h = jnp.dot(h.astype(jnp.bfloat16), w1_ref[...],
                    preferred_element_type=jnp.float32) + b1_ref[...]
        h = jnp.maximum(h, 0.0)                              # ReLU
        h = jnp.dot(h.astype(jnp.bfloat16), w2_ref[...],
                    preferred_element_type=jnp.float32) + b2_ref[...]
        h = jnp.maximum(h, 0.0)                              # ReLU
        h = jnp.dot(h.astype(jnp.bfloat16), w3_ref[...],
                    preferred_element_type=jnp.float32) + b3_ref[...]
        h = jnp.maximum(h, 0.0)                              # (TB, 128)
        # Final 128 -> 1 layer, emitted lane-dense as a (1, TB) row (unmasked
        # stores) by contracting the feature axes of w4 (1,128) and h (TB,128).
        out = jax.lax.dot_general(w4_ref[...], h, (((1,), (1,)), ((), ())),
                                  preferred_element_type=jnp.float32)
        o_ref[...] = out + b4_ref[...]                       # (1, TB)


def init_params(key):
    def dense(k, fin, fout):
        kw, kb = jax.random.split(k)
        w = jax.random.normal(kw, (fin, fout), jnp.float32) / jnp.sqrt(fin)
        b = jax.random.normal(kb, (1, fout), jnp.float32) * 0.01
        return w, b

    ks = jax.random.split(key, 6)
    p = {}
    w, b = dense(ks[0], STEM_K, STEM_C)
    p["w_stem"], p["b_stem"] = w.astype(jnp.bfloat16), b

    # Backbone classifier 32 -> 1000, zero-padded to 1024: padded columns and
    # bias entries are 0, so ReLU(feats) padded lanes are exactly 0 and the
    # (also zeroed) padded w1 rows contribute nothing -> numerically exact.
    w, b = dense(ks[1], STEM_C, BACKBONE_F)
    p["w_cls"] = jnp.pad(w, ((0, 0), (0, FEAT_PAD - BACKBONE_F))).astype(jnp.bfloat16)
    p["b_cls"] = jnp.pad(b, ((0, 0), (0, FEAT_PAD - BACKBONE_F)))

    w, p["b1"] = dense(ks[2], BACKBONE_F, 512)
    p["w1"] = jnp.pad(w, ((0, FEAT_PAD - BACKBONE_F), (0, 0))).astype(jnp.bfloat16)

    w, p["b2"] = dense(ks[3], 512, 256)
    p["w2"] = w.astype(jnp.bfloat16)
    w, p["b3"] = dense(ks[4], 256, 128)
    p["w3"] = w.astype(jnp.bfloat16)
    w4, b4 = dense(ks[5], 128, 1)
    p["w4"] = w4.T                     # stored (1, 128) for the final row-dot
    p["b4"] = b4                       # (1, 1)
    return p


def _batch_tile(batch):
    # 256 fills the 256-wide v6e/v7x MXU M dim; prefer tiles leaving >= 2 grid
    # steps so v7x's two TensorCores both get batch work.  Multiples of 128
    # keep the (1, TB) output block lane-dense; otherwise fall back to full B.
    for cand in (256, 128):
        if batch % cand == 0 and batch // cand >= 2:
            return cand
    for cand in (256, 128):
        if batch % cand == 0:
            return cand
    return batch


def _p_tile(p_total, tb, elem_cap=16384):
    # Cap TB*TP so (patch tile x pipeline buffers + f32 stem activation) stays
    # well inside v7x's ~48 MiB usable VMEM (half of v5e/v6e); the K=27 lane
    # axis pads to 128 lanes in VMEM, inflating the footprint ~4.7x.
    max_tp = max(8, ((elem_cap // max(tb, 1)) // 8) * 8)
    if p_total <= max_tp:
        return p_total
    best = 0
    for d in range(8, max_tp + 1, 8):
        if p_total % d == 0:
            best = d
    if best:
        return best
    # TODO(synk): a ragged last P tile (no multiple-of-8 divisor under the cap)
    # would need masking; fall back to the full extent (correct, VMEM-heavy).
    return p_total


@jax.jit
def critic_forward(x_nchw, params):
    B = x_nchw.shape[0]
    # im2col for the 3x3 / stride-2 / pad-1 stem conv (wrapper glue, not hot path).
    patches = jax.lax.conv_general_dilated_patches(
        x_nchw, filter_shape=(3, 3), window_strides=(2, 2),
        padding=((1, 1), (1, 1)))                     # (B, K, OH, OW) f32
    _, K, OH, OW = patches.shape
    P = OH * OW
    # bf16 patch stream: halves the dominant HBM read; matmuls accumulate in f32.
    patches = patches.reshape(B, K, P).transpose(0, 2, 1).astype(jnp.bfloat16)

    TB = _batch_tile(B)
    TP = _p_tile(P, TB)
    nb, np_ = B // TB, P // TP
    grid = (nb, np_)
    collapse_stem = (TP % 16 == 0)

    def tiled(i, j):      # patches stream with the grid
        return (i, j, 0)

    def resident(i, j):   # weights/biases: same block every step -> stay in VMEM
        return (0, 0)

    # Deeper buffering on the only streaming input once there are enough grid
    # steps for the patch DMA to be exposed behind the short per-step compute.
    if nb * np_ >= 3:
        patches_spec = pl.BlockSpec((TB, TP, K), tiled, pipeline_mode=pl.Buffered(3))
    else:
        patches_spec = pl.BlockSpec((TB, TP, K), tiled)

    in_specs = [
        patches_spec,
        pl.BlockSpec((K, STEM_C), resident),
        pl.BlockSpec((1, STEM_C), resident),
        pl.BlockSpec((STEM_C, FEAT_PAD), resident),
        pl.BlockSpec((1, FEAT_PAD), resident),
        pl.BlockSpec((FEAT_PAD, 512), resident),
        pl.BlockSpec((1, 512), resident),
        pl.BlockSpec((512, 256), resident),
        pl.BlockSpec((1, 256), resident),
        pl.BlockSpec((256, 128), resident),
        pl.BlockSpec((1, 128), resident),
        pl.BlockSpec((1, 128), resident),     # w4 stored transposed (1, 128)
        pl.BlockSpec((1, 1), resident),
    ]
    out_specs = pl.BlockSpec((1, TB), lambda i, j: (0, i))

    weight_bytes = sum(int(v.size) * v.dtype.itemsize for v in params.values())
    flops = 2 * B * (P * K * STEM_C + STEM_C * FEAT_PAD + FEAT_PAD * 512
                     + 512 * 256 + 256 * 128 + 128)
    cost = pl.CostEstimate(
        flops=int(flops),
        transcendentals=int(B * P * STEM_C),          # stem SiLU sigmoids
        bytes_accessed=int(patches.size) * 2 + weight_bytes + B * 4)

    kernel = functools.partial(_critic_kernel, tb=TB, tp=TP, p_total=P,
                               collapse_stem=collapse_stem)

    out = pl.pallas_call(
        kernel,
        out_shape=jax.ShapeDtypeStruct((1, B), jnp.float32),
        grid=grid,
        in_specs=in_specs,
        out_specs=out_specs,
        scratch_shapes=[pltpu.VMEM((TB, STEM_C), jnp.float32)],   # GAP partial sums
        compiler_params=pltpu.CompilerParams(
            dimension_semantics=("parallel", "arbitrary"),
            vmem_limit_bytes=48 * 1024 * 1024),
        cost_estimate=cost,
    )(patches,
      params["w_stem"], params["b_stem"], params["w_cls"], params["b_cls"],
      params["w1"], params["b1"], params["w2"], params["b2"],
      params["w3"], params["b3"], params["w4"], params["b4"])
    return out.T                                      # (B, 1)


if __name__ == "__main__":
    key = jax.random.PRNGKey(0)
    kx, kp = jax.random.split(key)
    # Small, EfficientNet-compatible input: batch=2, 3 channels, 16x16 spatial.
    x = jax.random.normal(kx, (2, 3, 16, 16), jnp.float32)
    params = init_params(kp)

    y = jax.block_until_ready(critic_forward(x, params))
    assert y.shape == (2, 1) and y.dtype == jnp.float32
    print("KERNEL_OK")
</pallas_src>

<mosaic_0001>
module attributes {stable_mosaic.version = 11 : i64} {
  func.func @_critic_kernel(%arg0: i32, %arg1: i32, %arg2: memref<2x64x27xbf16, #tpu.memory_space<vmem>>, %arg3: memref<27x32xbf16, #tpu.memory_space<vmem>>, %arg4: memref<1x32xf32, #tpu.memory_space<vmem>>, %arg5: memref<32x1024xbf16, #tpu.memory_space<vmem>>, %arg6: memref<1x1024xf32, #tpu.memory_space<vmem>>, %arg7: memref<1024x512xbf16, #tpu.memory_space<vmem>>, %arg8: memref<1x512xf32, #tpu.memory_space<vmem>>, %arg9: memref<512x256xbf16, #tpu.memory_space<vmem>>, %arg10: memref<1x256xf32, #tpu.memory_space<vmem>>, %arg11: memref<256x128xbf16, #tpu.memory_space<vmem>>, %arg12: memref<1x128xf32, #tpu.memory_space<vmem>>, %arg13: memref<1x128xf32, #tpu.memory_space<vmem>>, %arg14: memref<1x1xf32, #tpu.memory_space<vmem>>, %arg15: memref<1x2xf32, #tpu.memory_space<vmem>>, %arg16: memref<2x32xf32, #tpu.memory_space<vmem>>) attributes {dimension_semantics = [#tpu.dimension_semantics<parallel>, #tpu.dimension_semantics<arbitrary>], iteration_bounds = array<i64: 1, 1>, scalar_prefetch = 0 : i64, scratch_operands = 1 : i64, tpu.core_type = #tpu.core_type<tc>, window_params = [{transform_indices = @transform_0, window_bounds = array<i64: 2, 64, 27>}, {pipeline_mode = #tpu.pipeline_mode<synchronous>, transform_indices = @transform_1, window_bounds = array<i64: 27, 32>}, {pipeline_mode = #tpu.pipeline_mode<synchronous>, transform_indices = @transform_2, window_bounds = array<i64: 1, 32>}, {pipeline_mode = #tpu.pipeline_mode<synchronous>, transform_indices = @transform_3, window_bounds = array<i64: 32, 1024>}, {pipeline_mode = #tpu.pipeline_mode<synchronous>, transform_indices = @transform_4, window_bounds = array<i64: 1, 1024>}, {pipeline_mode = #tpu.pipeline_mode<synchronous>, transform_indices = @transform_5, window_bounds = array<i64: 1024, 512>}, {pipeline_mode = #tpu.pipeline_mode<synchronous>, transform_indices = @transform_6, window_bounds = array<i64: 1, 512>}, {pipeline_mode = #tpu.pipeline_mode<synchronous>, transform_indices = @transform_7, window_bounds = array<i64: 512, 256>}, {pipeline_mode = #tpu.pipeline_mode<synchronous>, transform_indices = @transform_8, window_bounds = array<i64: 1, 256>}, {pipeline_mode = #tpu.pipeline_mode<synchronous>, transform_indices = @transform_9, window_bounds = array<i64: 256, 128>}, {pipeline_mode = #tpu.pipeline_mode<synchronous>, transform_indices = @transform_10, window_bounds = array<i64: 1, 128>}, {pipeline_mode = #tpu.pipeline_mode<synchronous>, transform_indices = @transform_11, window_bounds = array<i64: 1, 128>}, {pipeline_mode = #tpu.pipeline_mode<synchronous>, transform_indices = @transform_12, window_bounds = array<i64: 1, 1>}, {transform_indices = @transform_13, window_bounds = array<i64: 1, 2>}]} {
    %c0_i32 = arith.constant 0 : i32
    %0 = arith.cmpi eq, %arg1, %c0_i32 : i32
    %1 = arith.extui %0 : i1 to i32
    %c0_i32_0 = arith.constant 0 : i32
    %2 = arith.cmpi ne, %1, %c0_i32_0 : i32
    scf.if %2 {
      %cst_15 = arith.constant 0.000000e+00 : f32
      %24 = vector.broadcast %cst_15 : f32 to vector<2x32xf32>
      %c0_16 = arith.constant 0 : index
      %c0_17 = arith.constant 0 : index
      %25 = vector.load %arg16[%c0_16, %c0_17] : memref<2x32xf32, #tpu.memory_space<vmem>>, vector<2x32xf32>
      tpu.vector_store %arg16[%c0_16, %c0_17], %24 {strides = array<i32>} : memref<2x32xf32, #tpu.memory_space<vmem>>, vector<2x32xf32>,
    } else {
    }
    %c0 = arith.constant 0 : index
    %c0_1 = arith.constant 0 : index
    %c0_2 = arith.constant 0 : index
    %3 = vector.load %arg2[%c0, %c0_1, %c0_2] : memref<2x64x27xbf16, #tpu.memory_space<vmem>>, vector<2x64x27xbf16>
    %4 = vector.shape_cast %3 : vector<2x64x27xbf16> to vector<128x27xbf16>
    %c0_3 = arith.constant 0 : index
    %c0_4 = arith.constant 0 : index
    %5 = vector.load %arg3[%c0_3, %c0_4] : memref<27x32xbf16, #tpu.memory_space<vmem>>, vector<27x32xbf16>
    %cst = arith.constant dense<0.000000e+00> : vector<128x32xf32>
    %6 = tpu.matmul %4, %5, %cst {dimension_numbers = #tpu.dot_dimension_numbers<[1], [0], [0], [1], [0, 0, 1, 1], [], []>} : vector<128x27xbf16>, vector<27x32xbf16>, vector<128x32xf32> -> vector<128x32xf32>
    %c0_5 = arith.constant 0 : index
    %c0_6 = arith.constant 0 : index
    %7 = vector.load %arg4[%c0_5, %c0_6] : memref<1x32xf32, #tpu.memory_space<vmem>>, vector<1x32xf32>
    %8 = vector.broadcast %7 : vector<1x32xf32> to vector<128x32xf32>
    %9 = arith.addf %6, %8 : vector<128x32xf32>
    %10 = arith.negf %9 : vector<128x32xf32>
    %11 = math.exp %10 : vector<128x32xf32>
    %cst_7 = arith.constant 1.000000e+00 : f32
    %12 = vector.broadcast %cst_7 : f32 to vector<128x32xf32>
    %13 = arith.addf %12, %11 : vector<128x32xf32>
    %14 = arith.divf %12, %13 : vector<128x32xf32>
    %15 = arith.mulf %9, %14 : vector<128x32xf32>
    %c0_8 = arith.constant 0 : index
    %c0_9 = arith.constant 0 : index
    %16 = vector.load %arg16[%c0_8, %c0_9] : memref<2x32xf32, #tpu.memory_space<vmem>>, vector<2x32xf32>
    %17 = vector.shape_cast %15 : vector<128x32xf32> to vector<2x64x32xf32>
    %cst_10 = arith.constant dense<0.000000e+00> : vector<2x32xf32>
    %18 = vector.multi_reduction <add>, %17, %cst_10 [1] : vector<2x64x32xf32> to vector<2x32xf32>
    %19 = arith.addf %16, %18 : vector<2x32xf32>
    %c0_11 = arith.constant 0 : index
    %c0_12 = arith.constant 0 : index
    %20 = vector.load %arg16[%c0_11, %c0_12] : memref<2x32xf32, #tpu.memory_space<vmem>>, vector<2x32xf32>
    tpu.vector_store %arg16[%c0_11, %c0_12], %19 {strides = array<i32>} : memref<2x32xf32, #tpu.memory_space<vmem>>, vector<2x32xf32>,
    %c0_i32_13 = arith.constant 0 : i32
    %21 = arith.cmpi eq, %arg1, %c0_i32_13 : i32
    %22 = arith.extui %21 : i1 to i32
    %c0_i32_14 = arith.constant 0 : i32
    %23 = arith.cmpi ne, %22, %c0_i32_14 : i32
    scf.if %23 {
      %c0_15 = arith.constant 0 : index
      %c0_16 = arith.constant 0 : index
      %24 = vector.load %arg16[%c0_15, %c0_16] : memref<2x32xf32, #tpu.memory_space<vmem>>, vector<2x32xf32>
      %cst_17 = arith.constant 1.562500e-02 : f32
      %25 = vector.broadcast %cst_17 : f32 to vector<2x32xf32>
      %26 = arith.mulf %24, %25 : vector<2x32xf32>
      %27 = arith.truncf %26 : vector<2x32xf32> to vector<2x32xbf16>
      %c0_18 = arith.constant 0 : index
      %c0_19 = arith.constant 0 : index
      %28 = vector.load %arg5[%c0_18, %c0_19] : memref<32x1024xbf16, #tpu.memory_space<vmem>>, vector<32x1024xbf16>
      %cst_20 = arith.constant dense<0.000000e+00> : vector<2x1024xf32>
      %29 = tpu.matmul %27, %28, %cst_20 {dimension_numbers = #tpu.dot_dimension_numbers<[1], [0], [0], [1], [0, 0, 1, 1], [], []>} : vector<2x32xbf16>, vector<32x1024xbf16>, vector<2x1024xf32> -> vector<2x1024xf32>
      %c0_21 = arith.constant 0 : index
      %c0_22 = arith.constant 0 : index
      %30 = vector.load %arg6[%c0_21, %c0_22] : memref<1x1024xf32, #tpu.memory_space<vmem>>, vector<1x1024xf32>
      %31 = vector.broadcast %30 : vector<1x1024xf32> to vector<2x1024xf32>
      %32 = arith.addf %29, %31 : vector<2x1024xf32>
      %cst_23 = arith.constant 0.000000e+00 : f32
      %33 = vector.broadcast %cst_23 : f32 to vector<2x1024xf32>
      %34 = arith.maximumf %32, %33 : vector<2x1024xf32>
      %35 = arith.truncf %34 : vector<2x1024xf32> to vector<2x1024xbf16>
      %c0_24 = arith.constant 0 : index
      %c0_25 = arith.constant 0 : index
      %36 = vector.load %arg7[%c0_24, %c0_25] : memref<1024x512xbf16, #tpu.memory_space<vmem>>, vector<1024x512xbf16>
      %cst_26 = arith.constant dense<0.000000e+00> : vector<2x512xf32>
      %37 = tpu.matmul %35, %36, %cst_26 {dimension_numbers = #tpu.dot_dimension_numbers<[1], [0], [0], [1], [0, 0, 1, 1], [], []>} : vector<2x1024xbf16>, vector<1024x512xbf16>, vector<2x512xf32> -> vector<2x512xf32>
      %c0_27 = arith.constant 0 : index
      %c0_28 = arith.constant 0 : index
      %38 = vector.load %arg8[%c0_27, %c0_28] : memref<1x512xf32, #tpu.memory_space<vmem>>, vector<1x512xf32>
      %39 = vector.broadcast %38 : vector<1x512xf32> to vector<2x512xf32>
      %40 = arith.addf %37, %39 : vector<2x512xf32>
      %cst_29 = arith.constant 0.000000e+00 : f32
      %41 = vector.broadcast %cst_29 : f32 to vector<2x512xf32>
      %42 = arith.maximumf %40, %41 : vector<2x512xf32>
      %43 = arith.truncf %42 : vector<2x512xf32> to vector<2x512xbf16>
      %c0_30 = arith.constant 0 : index
      %c0_31 = arith.constant 0 : index
      %44 = vector.load %arg9[%c0_30, %c0_31] : memref<512x256xbf16, #tpu.memory_space<vmem>>, vector<512x256xbf16>
      %cst_32 = arith.constant dense<0.000000e+00> : vector<2x256xf32>
      %45 = tpu.matmul %43, %44, %cst_32 {dimension_numbers = #tpu.dot_dimension_numbers<[1], [0], [0], [1], [0, 0, 1, 1], [], []>} : vector<2x512xbf16>, vector<512x256xbf16>, vector<2x256xf32> -> vector<2x256xf32>
      %c0_33 = arith.constant 0 : index
      %c0_34 = arith.constant 0 : index
      %46 = vector.load %arg10[%c0_33, %c0_34] : memref<1x256xf32, #tpu.memory_space<vmem>>, vector<1x256xf32>
      %47 = vector.broadcast %46 : vector<1x256xf32> to vector<2x256xf32>
      %48 = arith.addf %45, %47 : vector<2x256xf32>
      %cst_35 = arith.constant 0.000000e+00 : f32
      %49 = vector.broadcast %cst_35 : f32 to vector<2x256xf32>
      %50 = arith.maximumf %48, %49 : vector<2x256xf32>
      %51 = arith.truncf %50 : vector<2x256xf32> to vector<2x256xbf16>
      %c0_36 = arith.constant 0 : index
      %c0_37 = arith.constant 0 : index
      %52 = vector.load %arg11[%c0_36, %c0_37] : memref<256x128xbf16, #tpu.memory_space<vmem>>, vector<256x128xbf16>
      %cst_38 = arith.constant dense<0.000000e+00> : vector<2x128xf32>
      %53 = tpu.matmul %51, %52, %cst_38 {dimension_numbers = #tpu.dot_dimension_numbers<[1], [0], [0], [1], [0, 0, 1, 1], [], []>} : vector<2x256xbf16>, vector<256x128xbf16>, vector<2x128xf32> -> vector<2x128xf32>
      %c0_39 = arith.constant 0 : index
      %c0_40 = arith.constant 0 : index
      %54 = vector.load %arg12[%c0_39, %c0_40] : memref<1x128xf32, #tpu.memory_space<vmem>>, vector<1x128xf32>
      %55 = vector.broadcast %54 : vector<1x128xf32> to vector<2x128xf32>
      %56 = arith.addf %53, %55 : vector<2x128xf32>
      %cst_41 = arith.constant 0.000000e+00 : f32
      %57 = vector.broadcast %cst_41 : f32 to vector<2x128xf32>
      %58 = arith.maximumf %56, %57 : vector<2x128xf32>
      %c0_42 = arith.constant 0 : index
      %c0_43 = arith.constant 0 : index
      %59 = vector.load %arg13[%c0_42, %c0_43] : memref<1x128xf32, #tpu.memory_space<vmem>>, vector<1x128xf32>
      %cst_44 = arith.constant dense<0.000000e+00> : vector<1x2xf32>
      %60 = tpu.matmul %59, %58, %cst_44 {dimension_numbers = #tpu.dot_dimension_numbers<[1], [1], [0], [0], [0, 0, 1, 0], [], []>} : vector<1x128xf32>, vector<2x128xf32>, vector<1x2xf32> -> vector<1x2xf32>
      %c0_45 = arith.constant 0 : index
      %c0_46 = arith.constant 0 : index
      %61 = vector.load %arg14[%c0_45, %c0_46] : memref<1x1xf32, #tpu.memory_space<vmem>>, vector<1x1xf32>
      %62 = vector.broadcast %61 : vector<1x1xf32> to vector<1x2xf32>
      %63 = arith.addf %60, %62 : vector<1x2xf32>
      %c0_47 = arith.constant 0 : index
      %c0_48 = arith.constant 0 : index
      %64 = vector.load %arg15[%c0_47, %c0_48] : memref<1x2xf32, #tpu.memory_space<vmem>>, vector<1x2xf32>
      tpu.vector_store %arg15[%c0_47, %c0_48], %63 {strides = array<i32>} : memref<1x2xf32, #tpu.memory_space<vmem>>, vector<1x2xf32>,
    } else {
    }
    return
  }
  func.func @transform_0(%arg0: i32, %arg1: i32) -> (i32, i32, i32) {
    %c0_i32 = arith.constant 0 : i32
    %c0_i32_0 = arith.constant 0 : i32
    return %arg0, %arg1, %c0_i32 : i32, i32, i32
  }
  func.func @transform_1(%arg0: i32, %arg1: i32) -> (i32, i32) {
    %c0_i32 = arith.constant 0 : i32
    %c0_i32_0 = arith.constant 0 : i32
    %c0_i32_1 = arith.constant 0 : i32
    return %c0_i32, %c0_i32_0 : i32, i32
  }
  func.func @transform_2(%arg0: i32, %arg1: i32) -> (i32, i32) {
    %c0_i32 = arith.constant 0 : i32
    %c0_i32_0 = arith.constant 0 : i32
    %c0_i32_1 = arith.constant 0 : i32
    return %c0_i32, %c0_i32_0 : i32, i32
  }
  func.func @transform_3(%arg0: i32, %arg1: i32) -> (i32, i32) {
    %c0_i32 = arith.constant 0 : i32
    %c0_i32_0 = arith.constant 0 : i32
    %c0_i32_1 = arith.constant 0 : i32
    return %c0_i32, %c0_i32_0 : i32, i32
  }
  func.func @transform_4(%arg0: i32, %arg1: i32) -> (i32, i32) {
    %c0_i32 = arith.constant 0 : i32
    %c0_i32_0 = arith.constant 0 : i32
    %c0_i32_1 = arith.constant 0 : i32
    return %c0_i32, %c0_i32_0 : i32, i32
  }
  func.func @transform_5(%arg0: i32, %arg1: i32) -> (i32, i32) {
    %c0_i32 = arith.constant 0 : i32
    %c0_i32_0 = arith.constant 0 : i32
    %c0_i32_1 = arith.constant 0 : i32
    return %c0_i32, %c0_i32_0 : i32, i32
  }
  func.func @transform_6(%arg0: i32, %arg1: i32) -> (i32, i32) {
    %c0_i32 = arith.constant 0 : i32
    %c0_i32_0 = arith.constant 0 : i32
    %c0_i32_1 = arith.constant 0 : i32
    return %c0_i32, %c0_i32_0 : i32, i32
  }
  func.func @transform_7(%arg0: i32, %arg1: i32) -> (i32, i32) {
    %c0_i32 = arith.constant 0 : i32
    %c0_i32_0 = arith.constant 0 : i32
    %c0_i32_1 = arith.constant 0 : i32
    return %c0_i32, %c0_i32_0 : i32, i32
  }
  func.func @transform_8(%arg0: i32, %arg1: i32) -> (i32, i32) {
    %c0_i32 = arith.constant 0 : i32
    %c0_i32_0 = arith.constant 0 : i32
    %c0_i32_1 = arith.constant 0 : i32
    return %c0_i32, %c0_i32_0 : i32, i32
  }
  func.func @transform_9(%arg0: i32, %arg1: i32) -> (i32, i32) {
    %c0_i32 = arith.constant 0 : i32
    %c0_i32_0 = arith.constant 0 : i32
    %c0_i32_1 = arith.constant 0 : i32
    return %c0_i32, %c0_i32_0 : i32, i32
  }
  func.func @transform_10(%arg0: i32, %arg1: i32) -> (i32, i32) {
    %c0_i32 = arith.constant 0 : i32
    %c0_i32_0 = arith.constant 0 : i32
    %c0_i32_1 = arith.constant 0 : i32
    return %c0_i32, %c0_i32_0 : i32, i32
  }
  func.func @transform_11(%arg0: i32, %arg1: i32) -> (i32, i32) {
    %c0_i32 = arith.constant 0 : i32
    %c0_i32_0 = arith.constant 0 : i32
    %c0_i32_1 = arith.constant 0 : i32
    return %c0_i32, %c0_i32_0 : i32, i32
  }
  func.func @transform_12(%arg0: i32, %arg1: i32) -> (i32, i32) {
    %c0_i32 = arith.constant 0 : i32
    %c0_i32_0 = arith.constant 0 : i32
    %c0_i32_1 = arith.constant 0 : i32
    return %c0_i32, %c0_i32_0 : i32, i32
  }
  func.func @transform_13(%arg0: i32, %arg1: i32) -> (i32, i32) {
    %c0_i32 = arith.constant 0 : i32
    %c0_i32_0 = arith.constant 0 : i32
    return %c0_i32, %arg0 : i32, i32
  }
}

</mosaic_0001>

<llo_original>
// kernel: critic_forward.1
$region0: #{critic_forward.1}
  #allocation0 [shape = 'u32[]', space=smem, size = 0x4, offset = 0x4, fixed_abs, tag = 'smem constant byte address 0x4 - core index']
  #allocation1 [shape = 'u32[72,128]{1,0:T(1,128)}', space=vmem, size = 0x9000, scoped, tag = 'internal scratch']
  #allocation2 [shape = 'f32[2,32]{1,0:T(2,128)}', space=vmem, size = 0x400, scoped, tag = 'scratch operand']
  #allocation3 [shape = 'f32[1,1]{1,0:T(1,128)S(1)}', space=vmem, size = 0x200, scoped, tag = 'scoped memory for critic_forward.1']
  %s0 = inlined_call_operand.vmem [shape: bf16[2,64,27], index: 0, kind: input, shape index: {}]
  %s1 = inlined_call_operand.vmem [shape: bf16[27,32], index: 1, kind: input, shape index: {}]
  %s2 = inlined_call_operand.vmem [shape: f32[1,32], index: 2, kind: input, shape index: {}]
  %s3 = inlined_call_operand.vmem [shape: bf16[32,1024], index: 3, kind: input, shape index: {}]
  %s4 = inlined_call_operand.vmem [shape: f32[1,1024], index: 4, kind: input, shape index: {}]
  %s5 = inlined_call_operand.hbm [shape: bf16[1024,512], index: 5, kind: input, shape index: {}]
  %s6 = inlined_call_operand.vmem [shape: f32[1,512], index: 6, kind: input, shape index: {}]
  %s7 = inlined_call_operand.vmem [shape: bf16[512,256], index: 7, kind: input, shape index: {}]
  %s8 = inlined_call_operand.vmem [shape: f32[1,256], index: 8, kind: input, shape index: {}]
  %s9 = inlined_call_operand.vmem [shape: bf16[256,128], index: 9, kind: input, shape index: {}]
  %s10 = inlined_call_operand.vmem [shape: f32[1,128], index: 10, kind: input, shape index: {}]
  %s11 = inlined_call_operand.vmem [shape: f32[1,128], index: 11, kind: input, shape index: {}]
  %s12 = inlined_call_operand.<no memory space> [shape: f32[1,1], index: 12, kind: input, shape index: {}]
  %s13 = inlined_call_operand.hbm [shape: f32[1,2], index: 13, kind: output, shape index: {}]
  %s14 = sld [smem:[#allocation0]]
  $region74: #{critic_forward.1} parent=0
    _
  %s16 = ssub.s32 1, %s14
  %s17 = scalar_select 0, %s16, %s14
  %v18 = vstv %s12
  %19 = vst [vmem:[#allocation3] sm:$0x1] %v18
  $region1: #{critic_forward.1} parent=0
    #allocation4 [shape = 'u8[1048576]{0}', space=vmem, size = 0x100000, scoped, tag = 'input window, operand 5, single buffered']
    #allocation5 [shape = 's32[1]{0}', space=sflag, size = 0x4, scoped, tag = 'scoped memory for critic_forward.1']
    #allocation6 [shape = 's32[1]{0}', space=sflag, size = 0x4, scoped, tag = 'scoped memory for critic_forward.1']
    #allocation7 [shape = 'u8[512]{0}', space=vmem, size = 0x400, scoped, tag = 'output window, operand 0, single buffered']
    %20 = vsyncpa [#allocation5], 0
    %21 = vsyncpa [#allocation6], 0
    // Predicated region
    $region2: #{critic_forward.1} parent=1 // pred_check
      _
    $region3: #{critic_forward.1} parent=1 // pred_check_branch
      %23 = sbr.rel (0) target = $region5
    $region4: #{critic_forward.1} parent=1 // pred_region
      _
    $region5: #{critic_forward.1} parent=1 // pred_fallthru
      _
    // Predicated region
    $region6: #{critic_forward.1} parent=1 // pred_check
      _
    $region7: #{critic_forward.1} parent=1 // pred_check_branch
      %25 = sbr.rel (0) target = $region9
    $region8: #{critic_forward.1} parent=1 // pred_region
      _
    $region9: #{critic_forward.1} parent=1 // pred_fallthru
      _
    // Predicated region
    $region10: #{critic_forward.1} parent=1 // pred_check
      _
    $region11: #{critic_forward.1} parent=1 // pred_check_branch
      %27 = sbr.rel (0) target = $region13
    $region12: #{critic_forward.1} parent=1 // pred_region
      _
    $region13: #{critic_forward.1} parent=1 // pred_fallthru
      _
    // Predicated region
    $region14: #{critic_forward.1} parent=1 // pred_check
      _
    $region15: #{critic_forward.1} parent=1 // pred_check_branch
      %29 = sbr.rel (0) target = $region17
    $region16: #{critic_forward.1} parent=1 // pred_region
      _
    $region17: #{critic_forward.1} parent=1 // pred_fallthru
      _
    // Predicated region
    $region18: #{critic_forward.1} parent=1 // pred_check
      _
    $region19: #{critic_forward.1} parent=1 // pred_check_branch
      %31 = sbr.rel (0) target = $region21
    $region20: #{critic_forward.1} parent=1 // pred_region
      _
    $region21: #{critic_forward.1} parent=1 // pred_fallthru
      _
    // Predicated region
    $region22: #{critic_forward.1} parent=1 // pred_check
      _
    $region23: #{critic_forward.1} parent=1 // pred_check_branch
      %33 = sbr.rel (0) target = $region25
    $region24: #{critic_forward.1} parent=1 // pred_region
      %35 = vsyncadd [#allocation5], 0
      %s36 = sshll.u32 %s5, 4
      %s37 = int_to_ptr.hbm [resolvable:$true] %s36
      %s38 = sshll.u32 [#allocation4], 4
      %s39 = int_to_ptr.vmem [resolvable:$true] %s38
      %44 = dma.hbm_to_vmem [thread:$0]  %s37, 32768, %s39, [#allocation5], 256, 256, 16
    $region25: #{critic_forward.1} parent=1 // pred_fallthru
      _
    // Predicated region
    $region26: #{critic_forward.1} parent=1 // pred_check
      _
    $region27: #{critic_forward.1} parent=1 // pred_check_branch
      %46 = sbr.rel (0) target = $region29
    $region28: #{critic_forward.1} parent=1 // pred_region
      _
    $region29: #{critic_forward.1} parent=1 // pred_fallthru
      _
    // Predicated region
    $region30: #{critic_forward.1} parent=1 // pred_check
      _
    $region31: #{critic_forward.1} parent=1 // pred_check_branch
      %48 = sbr.rel (0) target = $region33
    $region32: #{critic_forward.1} parent=1 // pred_region
      _
    $region33: #{critic_forward.1} parent=1 // pred_fallthru
      _
    // Predicated region
    $region34: #{critic_forward.1} parent=1 // pred_check
      _
    $region35: #{critic_forward.1} parent=1 // pred_check_branch
      %50 = sbr.rel (0) target = $region37
    $region36: #{critic_forward.1} parent=1 // pred_region
      _
    $region37: #{critic_forward.1} parent=1 // pred_fallthru
      _
    // Predicated region
    $region38: #{critic_forward.1} parent=1 // pred_check
      _
    $region39: #{critic_forward.1} parent=1 // pred_check_branch
      %52 = sbr.rel (0) target = $region41
    $region40: #{critic_forward.1} parent=1 // pred_region
      _
    $region41: #{critic_forward.1} parent=1 // pred_fallthru
      _
    // Predicated region
    $region42: #{critic_forward.1} parent=1 // pred_check
      _
    $region43: #{critic_forward.1} parent=1 // pred_check_branch
      %54 = sbr.rel (0) target = $region45
    $region44: #{critic_forward.1} parent=1 // pred_region
      _
    $region45: #{critic_forward.1} parent=1 // pred_fallthru
      _
    // Predicated region
    $region46: #{critic_forward.1} parent=1 // pred_check
      _
    $region47: #{critic_forward.1} parent=1 // pred_check_branch
      %56 = sbr.rel (0) target = $region49
    $region48: #{critic_forward.1} parent=1 // pred_region
      _
    $region49: #{critic_forward.1} parent=1 // pred_fallthru
      _
    // Predicated region
    $region50: #{critic_forward.1} parent=1 // pred_check
      _
    $region51: #{critic_forward.1} parent=1 // pred_check_branch
      %58 = sbr.rel (0) target = $region53
    $region52: #{critic_forward.1} parent=1 // pred_region
      _
    $region53: #{critic_forward.1} parent=1 // pred_fallthru
      _
    // Predicated region
    $region54: #{critic_forward.1} parent=1 // pred_check
      _
    $region55: #{critic_forward.1} parent=1 // pred_check_branch
      %60 = sbr.rel (0) target = $region57
    $region56: #{critic_forward.1} parent=1 // pred_region
      %62 = dma.done [#allocation5], 32768
    $region57: #{critic_forward.1} parent=1 // pred_fallthru
      _
    %p64 = scmp.eq.s32.totalorder 0, 0
    // Predicated region
    $region58: #{critic_forward.1} parent=1 // pred_check
      %p65 = pneg %p64
    $region59: #{critic_forward.1} parent=1 // pred_check_branch
      %67 = sbr.rel (%p65) target = $region61
    $region60: #{critic_forward.1} parent=1 // pred_region
      %vm68 = vcmask 254976
      %69 = vst.msk [vmem:[#allocation2] sm:$0x3] %vm68, 0.0
    $region61: #{critic_forward.1} parent=1 // pred_fallthru
      _
    %v70 = vld [vmem:[%s0] sm:$0xf]
    %v71 = vld [vmem:[%s0 + $0x4] sm:$0xf]
    %v72 = vld [vmem:[%s0 + $0x8] sm:$0xf]
    %v73 = vld [vmem:[%s0 + $0xc] sm:$0xf]
    %v74 = vld [vmem:[%s0 + $0x10] sm:$0xf]
    %v75 = vld [vmem:[%s0 + $0x14] sm:$0xf]
    %v76 = vld [vmem:[%s0 + $0x18] sm:$0xf]
    %v77 = vld [vmem:[%s0 + $0x1c] sm:$0xf]
    %v78 = vld [vmem:[%s0 + $0x20] sm:$0xf]
    %v79 = vld [vmem:[%s0 + $0x24] sm:$0xf]
    %v80 = vld [vmem:[%s0 + $0x28] sm:$0xf]
    %v81 = vld [vmem:[%s0 + $0x2c] sm:$0xf]
    %v82 = vld [vmem:[%s0 + $0x30] sm:$0xf]
    %v83 = vld [vmem:[%s0 + $0x34] sm:$0xf]
    %v84 = vld [vmem:[%s0 + $0x38] sm:$0xf]
    %v85 = vld [vmem:[%s0 + $0x3c] sm:$0xf]
    %v86 = vld [vmem:[%s1] sm:$0xf]
    %v87 = vld [vmem:[%s1 + $0x4] sm:$0xf]
    %v88 = vld [vmem:[%s1 + $0x8] sm:$0xf]
    %v89 = vld [vmem:[%s1 + $0xc] sm:$0x3]
    %v90 = vld [vmem:[%s2] sm:$0x1]
    %v92 = vperm.slane %v90, 0
    %v110 = vunpack.c.l.b16 %v70
    %v111 = vunpack.c.l.b16 %v71
    %v112 = vunpack.c.l.b16 %v72
    %v113 = vunpack.c.l.b16 %v73
    %v114 = vunpack.c.l.b16 %v74
    %v115 = vunpack.c.l.b16 %v75
    %v116 = vunpack.c.l.b16 %v76
    %v117 = vunpack.c.l.b16 %v77
    %v118 = vunpack.c.l.b16 %v78
    %v119 = vunpack.c.l.b16 %v79
    %v120 = vunpack.c.l.b16 %v80
    %v121 = vunpack.c.l.b16 %v81
    %v122 = vunpack.c.l.b16 %v82
    %v123 = vunpack.c.l.b16 %v83
    %v124 = vunpack.c.l.b16 %v84
    %v125 = vunpack.c.l.b16 %v85
    %v126 = vpack.c.b16 %v111, %v110
    %v127 = vpack.c.b16 %v113, %v112
    %v128 = vpack.c.b16 %v115, %v114
    %v129 = vpack.c.b16 %v117, %v116
    %v130 = vpack.c.b16 %v119, %v118
    %v131 = vpack.c.b16 %v121, %v120
    %v132 = vpack.c.b16 %v123, %v122
    %v133 = vpack.c.b16 %v125, %v124
    %v138 = vunpack.c.l.b16 %v86
    %v139 = vunpack.c.l.b16 %v87
    %v140 = vunpack.c.l.b16 %v88
    %v141 = vunpack.c.l.b16 %v89
    %v142 = vpack.c.b16 %v139, %v138
    %v143 = vpack.c.b16 %v141, %v140
    %vm145 = vcmask 220160
    %v147 = vsel %vm145, %v126, 0
    %v150 = vsel %vm145, %v127, 0
    %v153 = vsel %vm145, %v128, 0
    %v156 = vsel %vm145, %v129, 0
    %v159 = vsel %vm145, %v130, 0
    %v162 = vsel %vm145, %v131, 0
    %v165 = vsel %vm145, %v132, 0
    %v168 = vsel %vm145, %v133, 0
    %vm170 = vcmask 1044480
    %vm171 = vcmask 1045504
    %v172 = vsel %vm170, 4294967295, 65535
    %v173 = vsel %vm171, %v172, 0
    %v175 = vand.u32 %v143, %v173
    %177 = vmatpush.bf16.msra.mxu0 0
    %178 = vmatpush.bf16.msra.mxu0 0
    %179 = vmatpush.bf16.msra.mxu0 0
    %180 = vmatpush.bf16.msra.mxu0 0
    %181 = vmatpush.bf16.msra.mxu0 0
    %182 = vmatpush.bf16.msra.mxu0 0
    %183 = vmatpush.bf16.msra.mxu0 %v175
    %184 = vmatpush.bf16.msra.mxu0 %v142
    %185 = vmatmul.bf16.gmra.mxu0 %v147
    %v186 = vpop.f32.mrf.mxu0
    %v187 = vadd.f32 %v92, %v186
    %v188 = vpop.f32.mrf.mxu0
    %v189 = vadd.f32 %v92, %v188
    %190 = vmatmul.bf16.gmra.mxu0 %v150
    %v191 = vpop.f32.mrf.mxu0
    %v192 = vadd.f32 %v92, %v191
    %v193 = vpop.f32.mrf.mxu0
    %v194 = vadd.f32 %v92, %v193
    %195 = vmatmul.bf16.gmra.mxu0 %v153
    %v196 = vpop.f32.mrf.mxu0
    %v197 = vadd.f32 %v92, %v196
    %v198 = vpop.f32.mrf.mxu0
    %v199 = vadd.f32 %v92, %v198
    %200 = vmatmul.bf16.gmra.mxu0 %v156
    %v201 = vpop.f32.mrf.mxu0
    %v202 = vadd.f32 %v92, %v201
    %v203 = vpop.f32.mrf.mxu0
    %v204 = vadd.f32 %v92, %v203
    %205 = vmatmul.bf16.gmra.mxu0 %v159
    %v206 = vpop.f32.mrf.mxu0
    %v207 = vadd.f32 %v92, %v206
    %v208 = vpop.f32.mrf.mxu0
    %v209 = vadd.f32 %v92, %v208
    %210 = vmatmul.bf16.gmra.mxu0 %v162
    %v211 = vpop.f32.mrf.mxu0
    %v212 = vadd.f32 %v92, %v211
    %v213 = vpop.f32.mrf.mxu0
    %v214 = vadd.f32 %v92, %v213
    %215 = vmatmul.bf16.gmra.mxu0 %v165
    %v216 = vpop.f32.mrf.mxu0
    %v217 = vadd.f32 %v92, %v216
    %v218 = vpop.f32.mrf.mxu0
    %v219 = vadd.f32 %v92, %v218
    %220 = vmatmul.bf16.gmra.mxu0 %v168
    %v221 = vpop.f32.mrf.mxu0
    %v222 = vadd.f32 %v92, %v221
    %v223 = vpop.f32.mrf.mxu0
    %v224 = vadd.f32 %v92, %v223
    %225 = vdwg.mxu0
    %v226 = vxor.u32 %v187, 2147483648
    %v227 = vxor.u32 %v189, 2147483648
    %v228 = vxor.u32 %v192, 2147483648
    %v229 = vxor.u32 %v194, 2147483648
    %v230 = vxor.u32 %v197, 2147483648
    %v231 = vxor.u32 %v199, 2147483648
    %v232 = vxor.u32 %v202, 2147483648
    %v233 = vxor.u32 %v204, 2147483648
    %v234 = vxor.u32 %v207, 2147483648
    %v235 = vxor.u32 %v209, 2147483648
    %v236 = vxor.u32 %v212, 2147483648
    %v237 = vxor.u32 %v214, 2147483648
    %v238 = vxor.u32 %v217, 2147483648
    %v239 = vxor.u32 %v219, 2147483648
    %v240 = vxor.u32 %v222, 2147483648
    %v241 = vxor.u32 %v224, 2147483648
    %v242 = vmul.f32 %v226, 1.442695
    %v243 = vpow.pop %v242
    %v244 = vmul.f32 %v227, 1.442695
    %v245 = vpow.pop %v244
    %v246 = vmul.f32 %v228, 1.442695
    %v247 = vpow.pop %v246
    %v248 = vmul.f32 %v229, 1.442695
    %v249 = vpow.pop %v248
    %v250 = vmul.f32 %v230, 1.442695
    %v251 = vpow.pop %v250
    %v252 = vmul.f32 %v231, 1.442695
    %v253 = vpow.pop %v252
    %v254 = vmul.f32 %v232, 1.442695
    %v255 = vpow.pop %v254
    %v256 = vmul.f32 %v233, 1.442695
    %v257 = vpow.pop %v256
    %v258 = vmul.f32 %v234, 1.442695
    %v259 = vpow.pop %v258
    %v260 = vmul.f32 %v235, 1.442695
    %v261 = vpow.pop %v260
    %v262 = vmul.f32 %v236, 1.442695
    %v263 = vpow.pop %v262
    %v264 = vmul.f32 %v237, 1.442695
    %v265 = vpow.pop %v264
    %v266 = vmul.f32 %v238, 1.442695
    %v267 = vpow.pop %v266
    %v268 = vmul.f32 %v239, 1.442695
    %v269 = vpow.pop %v268
    %v270 = vmul.f32 %v240, 1.442695
    %v271 = vpow.pop %v270
    %v272 = vmul.f32 %v241, 1.442695
    %v273 = vpow.pop %v272
    %v274 = vadd.f32 %v243, 1.0
    %v275 = vadd.f32 %v245, 1.0
    %v276 = vadd.f32 %v247, 1.0
    %v277 = vadd.f32 %v249, 1.0
    %v278 = vadd.f32 %v251, 1.0
    %v279 = vadd.f32 %v253, 1.0
    %v280 = vadd.f32 %v255, 1.0
    %v281 = vadd.f32 %v257, 1.0
    %v282 = vadd.f32 %v259, 1.0
    %v283 = vadd.f32 %v261, 1.0
    %v284 = vadd.f32 %v263, 1.0
    %v285 = vadd.f32 %v265, 1.0
    %v286 = vadd.f32 %v267, 1.0
    %v287 = vadd.f32 %v269, 1.0
    %v288 = vadd.f32 %v271, 1.0
    %v289 = vadd.f32 %v273, 1.0
    %v290 = vrcp.pop %v274
    %v291 = vmul.f32 %v274, %v290
    %v292 = vsub.f32 1.0, %v291
    %v293 = vmul.f32 %v290, %v292
    %v294 = vadd.f32 %v290, %v293
    %vm295 = vweird.f32 %v274
    %vm296 = vweird.f32 %v290
    %vm297 = vmor %vm295, %vm296
    %v298 = vsel %vm297, %v290, %v294
    %v299 = vand.u32 2147483647, %v274
    %vm300 = vcmp.eq.f32.partialorder %v299, 8.507059e+37
    %v301 = vand.u32 %v274, 2147483648
    %v302 = vor.u32 1.1754944e-38, %v301
    %v303 = vsel %vm300, %v302, %v298
    %v304 = vmul.f32 1.0, %v303
    %v305 = vrcp.pop %v275
    %v306 = vmul.f32 %v275, %v305
    %v307 = vsub.f32 1.0, %v306
    %v308 = vmul.f32 %v305, %v307
    %v309 = vadd.f32 %v305, %v308
    %vm310 = vweird.f32 %v275
    %vm311 = vweird.f32 %v305
    %vm312 = vmor %vm310, %vm311
    %v313 = vsel %vm312, %v305, %v309
    %v314 = vand.u32 2147483647, %v275
    %vm315 = vcmp.eq.f32.partialorder %v314, 8.507059e+37
    %v316 = vand.u32 %v275, 2147483648
    %v317 = vor.u32 1.1754944e-38, %v316
    %v318 = vsel %vm315, %v317, %v313
    %v319 = vmul.f32 1.0, %v318
    %v320 = vrcp.pop %v276
    %v321 = vmul.f32 %v276, %v320
    %v322 = vsub.f32 1.0, %v321
    %v323 = vmul.f32 %v320, %v322
    %v324 = vadd.f32 %v320, %v323
    %vm325 = vweird.f32 %v276
    %vm326 = vweird.f32 %v320
    %vm327 = vmor %vm325, %vm326
    %v328 = vsel %vm327, %v320, %v324
    %v329 = vand.u32 2147483647, %v276
    %vm330 = vcmp.eq.f32.partialorder %v329, 8.507059e+37
    %v331 = vand.u32 %v276, 2147483648
    %v332 = vor.u32 1.1754944e-38, %v331
    %v333 = vsel %vm330, %v332, %v328
    %v334 = vmul.f32 1.0, %v333
    %v335 = vrcp.pop %v277
    %v336 = vmul.f32 %v277, %v335
    %v337 = vsub.f32 1.0, %v336
    %v338 = vmul.f32 %v335, %v337
    %v339 = vadd.f32 %v335, %v338
    %vm340 = vweird.f32 %v277
    %vm341 = vweird.f32 %v335
    %vm342 = vmor %vm340, %vm341
    %v343 = vsel %vm342, %v335, %v339
    %v344 = vand.u32 2147483647, %v277
    %vm345 = vcmp.eq.f32.partialorder %v344, 8.507059e+37
    %v346 = vand.u32 %v277, 2147483648
    %v347 = vor.u32 1.1754944e-38, %v346
    %v348 = vsel %vm345, %v347, %v343
    %v349 = vmul.f32 1.0, %v348
    %v350 = vrcp.pop %v278
    %v351 = vmul.f32 %v278, %v350
    %v352 = vsub.f32 1.0, %v351
    %v353 = vmul.f32 %v350, %v352
    %v354 = vadd.f32 %v350, %v353
    %vm355 = vweird.f32 %v278
    %vm356 = vweird.f32 %v350
    %vm357 = vmor %vm355, %vm356
    %v358 = vsel %vm357, %v350, %v354
    %v359 = vand.u32 2147483647, %v278
    %vm360 = vcmp.eq.f32.partialorder %v359, 8.507059e+37
    %v361 = vand.u32 %v278, 2147483648
    %v362 = vor.u32 1.1754944e-38, %v361
    %v363 = vsel %vm360, %v362, %v358
    %v364 = vmul.f32 1.0, %v363
    %v365 = vrcp.pop %v279
    %v366 = vmul.f32 %v279, %v365
    %v367 = vsub.f32 1.0, %v366
    %v368 = vmul.f32 %v365, %v367
    %v369 = vadd.f32 %v365, %v368
    %vm370 = vweird.f32 %v279
    %vm371 = vweird.f32 %v365
    %vm372 = vmor %vm370, %vm371
    %v373 = vsel %vm372, %v365, %v369
    %v374 = vand.u32 2147483647, %v279
    %vm375 = vcmp.eq.f32.partialorder %v374, 8.507059e+37
    %v376 = vand.u32 %v279, 2147483648
    %v377 = vor.u32 1.1754944e-38, %v376
    %v378 = vsel %vm375, %v377, %v373
    %v379 = vmul.f32 1.0, %v378
    %v380 = vrcp.pop %v280
    %v381 = vmul.f32 %v280, %v380
    %v382 = vsub.f32 1.0, %v381
    %v383 = vmul.f32 %v380, %v382
    %v384 = vadd.f32 %v380, %v383
    %vm385 = vweird.f32 %v280
    %vm386 = vweird.f32 %v380
    %vm387 = vmor %vm385, %vm386
    %v388 = vsel %vm387, %v380, %v384
    %v389 = vand.u32 2147483647, %v280
    %vm390 = vcmp.eq.f32.partialorder %v389, 8.507059e+37
    %v391 = vand.u32 %v280, 2147483648
    %v392 = vor.u32 1.1754944e-38, %v391
    %v393 = vsel %vm390, %v392, %v388
    %v394 = vmul.f32 1.0, %v393
    %v395 = vrcp.pop %v281
    %v396 = vmul.f32 %v281, %v395
    %v397 = vsub.f32 1.0, %v396
    %v398 = vmul.f32 %v395, %v397
    %v399 = vadd.f32 %v395, %v398
    %vm400 = vweird.f32 %v281
    %vm401 = vweird.f32 %v395
    %vm402 = vmor %vm400, %vm401
    %v403 = vsel %vm402, %v395, %v399
    %v404 = vand.u32 2147483647, %v281
    %vm405 = vcmp.eq.f32.partialorder %v404, 8.507059e+37
    %v406 = vand.u32 %v281, 2147483648
    %v407 = vor.u32 1.1754944e-38, %v406
    %v408 = vsel %vm405, %v407, %v403
    %v409 = vmul.f32 1.0, %v408
    %v410 = vrcp.pop %v282
    %v411 = vmul.f32 %v282, %v410
    %v412 = vsub.f32 1.0, %v411
    %v413 = vmul.f32 %v410, %v412
    %v414 = vadd.f32 %v410, %v413
    %vm415 = vweird.f32 %v282
    %vm416 = vweird.f32 %v410
    %vm417 = vmor %vm415, %vm416
    %v418 = vsel %vm417, %v410, %v414
    %v419 = vand.u32 2147483647, %v282
    %vm420 = vcmp.eq.f32.partialorder %v419, 8.507059e+37
    %v421 = vand.u32 %v282, 2147483648
    %v422 = vor.u32 1.1754944e-38, %v421
    %v423 = vsel %vm420, %v422, %v418
    %v424 = vmul.f32 1.0, %v423
    %v425 = vrcp.pop %v283
    %v426 = vmul.f32 %v283, %v425
    %v427 = vsub.f32 1.0, %v426
    %v428 = vmul.f32 %v425, %v427
    %v429 = vadd.f32 %v425, %v428
    %vm430 = vweird.f32 %v283
    %vm431 = vweird.f32 %v425
    %vm432 = vmor %vm430, %vm431
    %v433 = vsel %vm432, %v425, %v429
    %v434 = vand.u32 2147483647, %v283
    %vm435 = vcmp.eq.f32.partialorder %v434, 8.507059e+37
    %v436 = vand.u32 %v283, 2147483648
    %v437 = vor.u32 1.1754944e-38, %v436
    %v438 = vsel %vm435, %v437, %v433
    %v439 = vmul.f32 1.0, %v438
    %v440 = vrcp.pop %v284
    %v441 = vmul.f32 %v284, %v440
    %v442 = vsub.f32 1.0, %v441
    %v443 = vmul.f32 %v440, %v442
    %v444 = vadd.f32 %v440, %v443
    %vm445 = vweird.f32 %v284
    %vm446 = vweird.f32 %v440
    %vm447 = vmor %vm445, %vm446
    %v448 = vsel %vm447, %v440, %v444
    %v449 = vand.u32 2147483647, %v284
    %vm450 = vcmp.eq.f32.partialorder %v449, 8.507059e+37
    %v451 = vand.u32 %v284, 2147483648
    %v452 = vor.u32 1.1754944e-38, %v451
    %v453 = vsel %vm450, %v452, %v448
    %v454 = vmul.f32 1.0, %v453
    %v455 = vrcp.pop %v285
    %v456 = vmul.f32 %v285, %v455
    %v457 = vsub.f32 1.0, %v456
    %v458 = vmul.f32 %v455, %v457
    %v459 = vadd.f32 %v455, %v458
    %vm460 = vweird.f32 %v285
    %vm461 = vweird.f32 %v455
    %vm462 = vmor %vm460, %vm461
    %v463 = vsel %vm462, %v455, %v459
    %v464 = vand.u32 2147483647, %v285
    %vm465 = vcmp.eq.f32.partialorder %v464, 8.507059e+37
    %v466 = vand.u32 %v285, 2147483648
    %v467 = vor.u32 1.1754944e-38, %v466
    %v468 = vsel %vm465, %v467, %v463
    %v469 = vmul.f32 1.0, %v468
    %v470 = vrcp.pop %v286
    %v471 = vmul.f32 %v286, %v470
    %v472 = vsub.f32 1.0, %v471
    %v473 = vmul.f32 %v470, %v472
    %v474 = vadd.f32 %v470, %v473
    %vm475 = vweird.f32 %v286
    %vm476 = vweird.f32 %v470
    %vm477 = vmor %vm475, %vm476
    %v478 = vsel %vm477, %v470, %v474
    %v479 = vand.u32 2147483647, %v286
    %vm480 = vcmp.eq.f32.partialorder %v479, 8.507059e+37
    %v481 = vand.u32 %v286, 2147483648
    %v482 = vor.u32 1.1754944e-38, %v481
    %v483 = vsel %vm480, %v482, %v478
    %v484 = vmul.f32 1.0, %v483
    %v485 = vrcp.pop %v287
    %v486 = vmul.f32 %v287, %v485
    %v487 = vsub.f32 1.0, %v486
    %v488 = vmul.f32 %v485, %v487
    %v489 = vadd.f32 %v485, %v488
    %vm490 = vweird.f32 %v287
    %vm491 = vweird.f32 %v485
    %vm492 = vmor %vm490, %vm491
    %v493 = vsel %vm492, %v485, %v489
    %v494 = vand.u32 2147483647, %v287
    %vm495 = vcmp.eq.f32.partialorder %v494, 8.507059e+37
    %v496 = vand.u32 %v287, 2147483648
    %v497 = vor.u32 1.1754944e-38, %v496
    %v498 = vsel %vm495, %v497, %v493
    %v499 = vmul.f32 1.0, %v498
    %v500 = vrcp.pop %v288
    %v501 = vmul.f32 %v288, %v500
    %v502 = vsub.f32 1.0, %v501
    %v503 = vmul.f32 %v500, %v502
    %v504 = vadd.f32 %v500, %v503
    %vm505 = vweird.f32 %v288
    %vm506 = vweird.f32 %v500
    %vm507 = vmor %vm505, %vm506
    %v508 = vsel %vm507, %v500, %v504
    %v509 = vand.u32 2147483647, %v288
    %vm510 = vcmp.eq.f32.partialorder %v509, 8.507059e+37
    %v511 = vand.u32 %v288, 2147483648
    %v512 = vor.u32 1.1754944e-38, %v511
    %v513 = vsel %vm510, %v512, %v508
    %v514 = vmul.f32 1.0, %v513
    %v515 = vrcp.pop %v289
    %v516 = vmul.f32 %v289, %v515
    %v517 = vsub.f32 1.0, %v516
    %v518 = vmul.f32 %v515, %v517
    %v519 = vadd.f32 %v515, %v518
    %vm520 = vweird.f32 %v289
    %vm521 = vweird.f32 %v515
    %vm522 = vmor %vm520, %vm521
    %v523 = vsel %vm522, %v515, %v519
    %v524 = vand.u32 2147483647, %v289
    %vm525 = vcmp.eq.f32.partialorder %v524, 8.507059e+37
    %v526 = vand.u32 %v289, 2147483648
    %v527 = vor.u32 1.1754944e-38, %v526
    %v528 = vsel %vm525, %v527, %v523
    %v529 = vmul.f32 1.0, %v528
    %v530 = vmul.f32 %v187, %v304
    %v531 = vmul.f32 %v189, %v319
    %v532 = vmul.f32 %v192, %v334
    %v533 = vmul.f32 %v194, %v349
    %v534 = vmul.f32 %v197, %v364
    %v535 = vmul.f32 %v199, %v379
    %v536 = vmul.f32 %v202, %v394
    %v537 = vmul.f32 %v204, %v409
    %v538 = vmul.f32 %v207, %v424
    %v539 = vmul.f32 %v209, %v439
    %v540 = vmul.f32 %v212, %v454
    %v541 = vmul.f32 %v214, %v469
    %v542 = vmul.f32 %v217, %v484
    %v543 = vmul.f32 %v219, %v499
    %v544 = vmul.f32 %v222, %v514
    %v545 = vmul.f32 %v224, %v529
    %v546 = vld [vmem:[#allocation2] sm:$0x3]
    %vm547 = vcmask 261120
    %v548 = vsel %vm547, %v530, 0.0
    %v549 = vsel %vm547, %v531, 0.0
    %v550 = vadd.f32 %v548, %v549
    %v551 = vsel %vm547, %v532, 0.0
    %v552 = vadd.f32 %v550, %v551
    %v553 = vsel %vm547, %v533, 0.0
    %v554 = vadd.f32 %v552, %v553
    %v555 = vsel %vm547, %v534, 0.0
    %v556 = vadd.f32 %v554, %v555
    %v557 = vsel %vm547, %v535, 0.0
    %v558 = vadd.f32 %v556, %v557
    %v559 = vsel %vm547, %v536, 0.0
    %v560 = vadd.f32 %v558, %v559
    %v561 = vsel %vm547, %v537, 0.0
    %v562 = vadd.f32 %v560, %v561
    %v563 = vrot.slane %v562, 4
    %v564 = vadd.f32 %v562, %v563
    %v565 = vrot.slane %v564, 2
    %v566 = vadd.f32 %v564, %v565
    %v567 = vrot.slane %v566, 1
    %v568 = vadd.f32 %v566, %v567
    %v569 = vsel %vm547, %v538, 0.0
    %v570 = vsel %vm547, %v539, 0.0
    %v571 = vadd.f32 %v569, %v570
    %v572 = vsel %vm547, %v540, 0.0
    %v573 = vadd.f32 %v571, %v572
    %v574 = vsel %vm547, %v541, 0.0
    %v575 = vadd.f32 %v573, %v574
    %v576 = vsel %vm547, %v542, 0.0
    %v577 = vadd.f32 %v575, %v576
    %v578 = vsel %vm547, %v543, 0.0
    %v579 = vadd.f32 %v577, %v578
    %v580 = vsel %vm547, %v544, 0.0
    %v581 = vadd.f32 %v579, %v580
    %v582 = vsel %vm547, %v545, 0.0
    %v583 = vadd.f32 %v581, %v582
    %v584 = vrot.slane %v583, 4
    %v585 = vadd.f32 %v583, %v584
    %v586 = vrot.slane %v585, 2
    %v587 = vadd.f32 %v585, %v586
    %v588 = vrot.slane %v587, 1
    %v589 = vadd.f32 %v587, %v588
    %vm592 = vcmask 1041409
    %v593 = vsel %vm592, %v589, %v568
    %v595 = vadd.f32 %v546, %v593
    %vm596 = vcmask 254976
    %597 = vst.msk [vmem:[#allocation2] sm:$0x3] %vm596, %v595
    // Predicated region
    $region62: #{critic_forward.1} parent=1 // pred_check
      %p598 = pneg %p64
    $region63: #{critic_forward.1} parent=1 // pred_check_branch
      %600 = sbr.rel (%p598) target = $region65
    $region64: #{critic_forward.1} parent=1 // pred_region
      %v601 = vld [vmem:[#allocation2] sm:$0x3]
      %v602 = vmul.f32 %v601, 0.015625
      %v603 = vpack.c.bf16 %v602, %v602
      %v604 = vld [vmem:[%s3] sm:$0xff]
      %v605 = vld [vmem:[%s3 + $0x8] sm:$0xff]
      %v606 = vld [vmem:[%s3 + $0x10] sm:$0xff]
      %v607 = vld [vmem:[%s3 + $0x18] sm:$0xff]
      %v608 = vld [vmem:[%s3 + $0x20] sm:$0xff]
      %v609 = vld [vmem:[%s3 + $0x28] sm:$0xff]
      %v610 = vld [vmem:[%s3 + $0x30] sm:$0xff]
      %v611 = vld [vmem:[%s3 + $0x38] sm:$0xff]
      %v612 = vld [vmem:[%s3 + $0x40] sm:$0xff]
      %v613 = vld [vmem:[%s3 + $0x48] sm:$0xff]
      %v614 = vld [vmem:[%s3 + $0x50] sm:$0xff]
      %v615 = vld [vmem:[%s3 + $0x58] sm:$0xff]
      %v616 = vld [vmem:[%s3 + $0x60] sm:$0xff]
      %v617 = vld [vmem:[%s3 + $0x68] sm:$0xff]
      %v618 = vld [vmem:[%s3 + $0x70] sm:$0xff]
      %v619 = vld [vmem:[%s3 + $0x78] sm:$0xff]
      %v620 = vld [vmem:[%s4] sm:$0xff]
      %v622 = vperm.slane %v620, 0
      %v623 = vperm.slane %v620, 1
      %v624 = vperm.slane %v620, 2
      %v625 = vperm.slane %v620, 3
      %v626 = vperm.slane %v620, 4
      %v627 = vperm.slane %v620, 5
      %v628 = vperm.slane %v620, 6
      %v629 = vperm.slane %v620, 7
      %v654 = vunpack.c.l.b16 %v604
      %v655 = vunpack.c.h.b16 %v604
      %v656 = vunpack.c.l.b16 %v605
      %v657 = vunpack.c.h.b16 %v605
      %v658 = vunpack.c.l.b16 %v606
      %v659 = vunpack.c.h.b16 %v606
      %v660 = vunpack.c.l.b16 %v607
      %v661 = vunpack.c.h.b16 %v607
      %v662 = vunpack.c.l.b16 %v608
      %v663 = vunpack.c.h.b16 %v608
      %v664 = vunpack.c.l.b16 %v609
      %v665 = vunpack.c.h.b16 %v609
      %v666 = vunpack.c.l.b16 %v610
      %v667 = vunpack.c.h.b16 %v610
      %v668 = vunpack.c.l.b16 %v611
      %v669 = vunpack.c.h.b16 %v611
      %v670 = vunpack.c.l.b16 %v612
      %v671 = vunpack.c.h.b16 %v612
      %v672 = vunpack.c.l.b16 %v613
      %v673 = vunpack.c.h.b16 %v613
      %v674 = vunpack.c.l.b16 %v614
      %v675 = vunpack.c.h.b16 %v614
      %v676 = vunpack.c.l.b16 %v615
      %v677 = vunpack.c.h.b16 %v615
      %v678 = vunpack.c.l.b16 %v616
      %v679 = vunpack.c.h.b16 %v616
      %v680 = vunpack.c.l.b16 %v617
      %v681 = vunpack.c.h.b16 %v617
      %v682 = vunpack.c.l.b16 %v618
      %v683 = vunpack.c.h.b16 %v618
      %v684 = vunpack.c.l.b16 %v619
      %v685 = vunpack.c.h.b16 %v619
      %v686 = vpack.c.b16 %v662, %v654
      %v687 = vpack.c.b16 %v663, %v655
      %v688 = vpack.c.b16 %v664, %v656
      %v689 = vpack.c.b16 %v665, %v657
      %v690 = vpack.c.b16 %v666, %v658
      %v691 = vpack.c.b16 %v667, %v659
      %v692 = vpack.c.b16 %v668, %v660
      %v693 = vpack.c.b16 %v669, %v661
      %v694 = vpack.c.b16 %v678, %v670
      %v695 = vpack.c.b16 %v679, %v671
      %v696 = vpack.c.b16 %v680, %v672
      %v697 = vpack.c.b16 %v681, %v673
      %v698 = vpack.c.b16 %v682, %v674
      %v699 = vpack.c.b16 %v683, %v675
      %v700 = vpack.c.b16 %v684, %v676
      %v701 = vpack.c.b16 %v685, %v677
      %v719 = vsel %vm547, %v603, 0
      %721 = vmatpush.bf16.msra.mxu0 0
      %722 = vmatpush.bf16.msra.mxu0 0
      %723 = vmatpush.bf16.msra.mxu0 0
      %724 = vmatpush.bf16.msra.mxu0 0
      %725 = vmatpush.bf16.msra.mxu0 0
      %726 = vmatpush.bf16.msra.mxu0 0
      %727 = vmatpush.bf16.msra.mxu0 %v694
      %728 = vmatpush.bf16.msra.mxu0 %v686
      %729 = vmatmul.bf16.gmra.mxu0 %v719
      %v730 = vpop.f32.mrf.mxu0
      %v731 = vadd.f32 %v622, %v730
      %v732 = vpop.f32.mrf.mxu0
      %733 = vdwg.mxu0
      %734 = vmatpush.bf16.msra.mxu0 0
      %735 = vmatpush.bf16.msra.mxu0 0
      %736 = vmatpush.bf16.msra.mxu0 0
      %737 = vmatpush.bf16.msra.mxu0 0
      %738 = vmatpush.bf16.msra.mxu0 0
      %739 = vmatpush.bf16.msra.mxu0 0
      %740 = vmatpush.bf16.msra.mxu0 %v695
      %741 = vmatpush.bf16.msra.mxu0 %v687
      %742 = vmatmul.bf16.gmra.mxu0 %v719
      %v743 = vpop.f32.mrf.mxu0
      %v744 = vadd.f32 %v623, %v743
      %v745 = vpop.f32.mrf.mxu0
      %746 = vdwg.mxu0
      %747 = vmatpush.bf16.msra.mxu0 0
      %748 = vmatpush.bf16.msra.mxu0 0
      %749 = vmatpush.bf16.msra.mxu0 0
      %750 = vmatpush.bf16.msra.mxu0 0
      %751 = vmatpush.bf16.msra.mxu0 0
      %752 = vmatpush.bf16.msra.mxu0 0
      %753 = vmatpush.bf16.msra.mxu0 %v696
      %754 = vmatpush.bf16.msra.mxu0 %v688
      %755 = vmatmul.bf16.gmra.mxu0 %v719
      %v756 = vpop.f32.mrf.mxu0
      %v757 = vadd.f32 %v624, %v756
      %v758 = vpop.f32.mrf.mxu0
      %759 = vdwg.mxu0
      %760 = vmatpush.bf16.msra.mxu0 0
      %761 = vmatpush.bf16.msra.mxu0 0
      %762 = vmatpush.bf16.msra.mxu0 0
      %763 = vmatpush.bf16.msra.mxu0 0
      %764 = vmatpush.bf16.msra.mxu0 0
      %765 = vmatpush.bf16.msra.mxu0 0
      %766 = vmatpush.bf16.msra.mxu0 %v697
      %767 = vmatpush.bf16.msra.mxu0 %v689
      %768 = vmatmul.bf16.gmra.mxu0 %v719
      %v769 = vpop.f32.mrf.mxu0
      %v770 = vadd.f32 %v625, %v769
      %v771 = vpop.f32.mrf.mxu0
      %772 = vdwg.mxu0
      %773 = vmatpush.bf16.msra.mxu0 0
      %774 = vmatpush.bf16.msra.mxu0 0
      %775 = vmatpush.bf16.msra.mxu0 0
      %776 = vmatpush.bf16.msra.mxu0 0
      %777 = vmatpush.bf16.msra.mxu0 0
      %778 = vmatpush.bf16.msra.mxu0 0
      %779 = vmatpush.bf16.msra.mxu0 %v698
      %780 = vmatpush.bf16.msra.mxu0 %v690
      %781 = vmatmul.bf16.gmra.mxu0 %v719
      %v782 = vpop.f32.mrf.mxu0
      %v783 = vadd.f32 %v626, %v782
      %v784 = vpop.f32.mrf.mxu0
      %785 = vdwg.mxu0
      %786 = vmatpush.bf16.msra.mxu0 0
      %787 = vmatpush.bf16.msra.mxu0 0
      %788 = vmatpush.bf16.msra.mxu0 0
      %789 = vmatpush.bf16.msra.mxu0 0
      %790 = vmatpush.bf16.msra.mxu0 0
      %791 = vmatpush.bf16.msra.mxu0 0
      %792 = vmatpush.bf16.msra.mxu0 %v699
      %793 = vmatpush.bf16.msra.mxu0 %v691
      %794 = vmatmul.bf16.gmra.mxu0 %v719
      %v795 = vpop.f32.mrf.mxu0
      %v796 = vadd.f32 %v627, %v795
      %v797 = vpop.f32.mrf.mxu0
      %798 = vdwg.mxu0
      %799 = vmatpush.bf16.msra.mxu0 0
      %800 = vmatpush.bf16.msra.mxu0 0
      %801 = vmatpush.bf16.msra.mxu0 0
      %802 = vmatpush.bf16.msra.mxu0 0
      %803 = vmatpush.bf16.msra.mxu0 0
      %804 = vmatpush.bf16.msra.mxu0 0
      %805 = vmatpush.bf16.msra.mxu0 %v700
      %806 = vmatpush.bf16.msra.mxu0 %v692
      %807 = vmatmul.bf16.gmra.mxu0 %v719
      %v808 = vpop.f32.mrf.mxu0
      %v809 = vadd.f32 %v628, %v808
      %v810 = vpop.f32.mrf.mxu0
      %811 = vdwg.mxu0
      %812 = vmatpush.bf16.msra.mxu0 0
      %813 = vmatpush.bf16.msra.mxu0 0
      %814 = vmatpush.bf16.msra.mxu0 0
      %815 = vmatpush.bf16.msra.mxu0 0
      %816 = vmatpush.bf16.msra.mxu0 0
      %817 = vmatpush.bf16.msra.mxu0 0
      %818 = vmatpush.bf16.msra.mxu0 %v701
      %819 = vmatpush.bf16.msra.mxu0 %v693
      %820 = vmatmul.bf16.gmra.mxu0 %v719
      %v821 = vpop.f32.mrf.mxu0
      %v822 = vadd.f32 %v629, %v821
      %v823 = vpop.f32.mrf.mxu0
      %824 = vdwg.mxu0
      %v825 = vmax.f32 %v731, 0.0
      %v826 = vmax.f32 %v744, 0.0
      %v827 = vmax.f32 %v757, 0.0
      %v828 = vmax.f32 %v770, 0.0
      %v829 = vmax.f32 %v783, 0.0
      %v830 = vmax.f32 %v796, 0.0
      %v831 = vmax.f32 %v809, 0.0
      %v832 = vmax.f32 %v822, 0.0
      %v833 = vpack.c.bf16 %v825, %v825
      %v834 = vpack.c.bf16 %v826, %v826
      %v835 = vpack.c.bf16 %v827, %v827
      %v836 = vpack.c.bf16 %v828, %v828
      %v837 = vpack.c.bf16 %v829, %v829
      %v838 = vpack.c.bf16 %v830, %v830
      %v839 = vpack.c.bf16 %v831, %v831
      %v840 = vpack.c.bf16 %v832, %v832
      %v841 = vld [vmem:[#allocation4] sm:$0xff]
      %v842 = vld [vmem:[#allocation4 + $0x8] sm:$0xff]
      %v843 = vld [vmem:[#allocation4 + $0x10] sm:$0xff]
      %v844 = vld [vmem:[#allocation4 + $0x18] sm:$0xff]
      %v845 = vld [vmem:[#allocation4 + $0x20] sm:$0xff]
      %v846 = vld [vmem:[#allocation4 + $0x28] sm:$0xff]
      %v847 = vld [vmem:[#allocation4 + $0x30] sm:$0xff]
      %v848 = vld [vmem:[#allocation4 + $0x38] sm:$0xff]
      %v849 = vld [vmem:[#allocation4 + $0x40] sm:$0xff]
      %v850 = vld [vmem:[#allocation4 + $0x48] sm:$0xff]
      %v851 = vld [vmem:[#allocation4 + $0x50] sm:$0xff]
      %v852 = vld [vmem:[#allocation4 + $0x58] sm:$0xff]
      %v853 = vld [vmem:[#allocation4 + $0x60] sm:$0xff]
      %v854 = vld [vmem:[#allocation4 + $0x68] sm:$0xff]
      %v855 = vld [vmem:[#allocation4 + $0x70] sm:$0xff]
      %v856 = vld [vmem:[#allocation4 + $0x78] sm:$0xff]
      %v857 = vld [vmem:[#allocation4 + $0x80] sm:$0xff]
      %v858 = vld [vmem:[#allocation4 + $0x88] sm:$0xff]
      %v859 = vld [vmem:[#allocation4 + $0x90] sm:$0xff]
      %v860 = vld [vmem:[#allocation4 + $0x98] sm:$0xff]
      %v861 = vld [vmem:[#allocation4 + $0xa0] sm:$0xff]
      %v862 = vld [vmem:[#allocation4 + $0xa8] sm:$0xff]
      %v863 = vld [vmem:[#allocation4 + $0xb0] sm:$0xff]
      %v864 = vld [vmem:[#allocation4 + $0xb8] sm:$0xff]
      %v865 = vld [vmem:[#allocation4 + $0xc0] sm:$0xff]
      %v866 = vld [vmem:[#allocation4 + $0xc8] sm:$0xff]
      %v867 = vld [vmem:[#allocation4 + $0xd0] sm:$0xff]
      %v868 = vld [vmem:[#allocation4 + $0xd8] sm:$0xff]
      %v869 = vld [vmem:[#allocation4 + $0xe0] sm:$0xff]
      %v870 = vld [vmem:[#allocation4 + $0xe8] sm:$0xff]
      %v871 = vld [vmem:[#allocation4 + $0xf0] sm:$0xff]
      %v872 = vld [vmem:[#allocation4 + $0xf8] sm:$0xff]
      %v873 = vld [vmem:[#allocation4 + $0x100] sm:$0xff]
      %v874 = vld [vmem:[#allocation4 + $0x108] sm:$0xff]
      %v875 = vld [vmem:[#allocation4 + $0x110] sm:$0xff]
      %v876 = vld [vmem:[#allocation4 + $0x118] sm:$0xff]
      %v877 = vld [vmem:[#allocation4 + $0x120] sm:$0xff]
      %v878 = vld [vmem:[#allocation4 + $0x128] sm:$0xff]
      %v879 = vld [vmem:[#allocation4 + $0x130] sm:$0xff]
      %v880 = vld [vmem:[#allocation4 + $0x138] sm:$0xff]
      %v881 = vld [vmem:[#allocation4 + $0x140] sm:$0xff]
      %v882 = vld [vmem:[#allocation4 + $0x148] sm:$0xff]
      %v883 = vld [vmem:[#allocation4 + $0x150] sm:$0xff]
      %v884 = vld [vmem:[#allocation4 + $0x158] sm:$0xff]
      %v885 = vld [vmem:[#allocation4 + $0x160] sm:$0xff]
      %v886 = vld [vmem:[#allocation4 + $0x168] sm:$0xff]
      %v887 = vld [vmem:[#allocation4 + $0x170] sm:$0xff]
      %v888 = vld [vmem:[#allocation4 + $0x178] sm:$0xff]
      %v889 = vld [vmem:[#allocation4 + $0x180] sm:$0xff]
      %v890 = vld [vmem:[#allocation4 + $0x188] sm:$0xff]
      %v891 = vld [vmem:[#allocation4 + $0x190] sm:$0xff]
      %v892 = vld [vmem:[#allocation4 + $0x198] sm:$0xff]
      %v893 = vld [vmem:[#allocation4 + $0x1a0] sm:$0xff]
      %v894 = vld [vmem:[#allocation4 + $0x1a8] sm:$0xff]
      %v895 = vld [vmem:[#allocation4 + $0x1b0] sm:$0xff]
      %v896 = vld [vmem:[#allocation4 + $0x1b8] sm:$0xff]
      %v897 = vld [vmem:[#allocation4 + $0x1c0] sm:$0xff]
      %v898 = vld [vmem:[#allocation4 + $0x1c8] sm:$0xff]
      %v899 = vld [vmem:[#allocation4 + $0x1d0] sm:$0xff]
      %v900 = vld [vmem:[#allocation4 + $0x1d8] sm:$0xff]
      %v901 = vld [vmem:[#allocation4 + $0x1e0] sm:$0xff]
      %v902 = vld [vmem:[#allocation4 + $0x1e8] sm:$0xff]
      %v903 = vld [vmem:[#allocation4 + $0x1f0] sm:$0xff]
      %v904 = vld [vmem:[#allocation4 + $0x1f8] sm:$0xff]
      %v905 = vld [vmem:[#allocation4 + $0x200] sm:$0xff]
      %v906 = vld [vmem:[#allocation4 + $0x208] sm:$0xff]
      %v907 = vld [vmem:[#allocation4 + $0x210] sm:$0xff]
      %v908 = vld [vmem:[#allocation4 + $0x218] sm:$0xff]
      %v909 = vld [vmem:[#allocation4 + $0x220] sm:$0xff]
      %v910 = vld [vmem:[#allocation4 + $0x228] sm:$0xff]
      %v911 = vld [vmem:[#allocation4 + $0x230] sm:$0xff]
      %v912 = vld [vmem:[#allocation4 + $0x238] sm:$0xff]
      %v913 = vld [vmem:[#allocation4 + $0x240] sm:$0xff]
      %v914 = vld [vmem:[#allocation4 + $0x248] sm:$0xff]
      %v915 = vld [vmem:[#allocation4 + $0x250] sm:$0xff]
      %v916 = vld [vmem:[#allocation4 + $0x258] sm:$0xff]
      %v917 = vld [vmem:[#allocation4 + $0x260] sm:$0xff]
      %v918 = vld [vmem:[#allocation4 + $0x268] sm:$0xff]
      %v919 = vld [vmem:[#allocation4 + $0x270] sm:$0xff]
      %v920 = vld [vmem:[#allocation4 + $0x278] sm:$0xff]
      %v921 = vld [vmem:[#allocation4 + $0x280] sm:$0xff]
      %v922 = vld [vmem:[#allocation4 + $0x288] sm:$0xff]
      %v923 = vld [vmem:[#allocation4 + $0x290] sm:$0xff]
      %v924 = vld [vmem:[#allocation4 + $0x298] sm:$0xff]
      %v925 = vld [vmem:[#allocation4 + $0x2a0] sm:$0xff]
      %v926 = vld [vmem:[#allocation4 + $0x2a8] sm:$0xff]
      %v927 = vld [vmem:[#allocation4 + $0x2b0] sm:$0xff]
      %v928 = vld [vmem:[#allocation4 + $0x2b8] sm:$0xff]
      %v929 = vld [vmem:[#allocation4 + $0x2c0] sm:$0xff]
      %v930 = vld [vmem:[#allocation4 + $0x2c8] sm:$0xff]
      %v931 = vld [vmem:[#allocation4 + $0x2d0] sm:$0xff]
      %v932 = vld [vmem:[#allocation4 + $0x2d8] sm:$0xff]
      %v933 = vld [vmem:[#allocation4 + $0x2e0] sm:$0xff]
      %v934 = vld [vmem:[#allocation4 + $0x2e8] sm:$0xff]
      %v935 = vld [vmem:[#allocation4 + $0x2f0] sm:$0xff]
      %v936 = vld [vmem:[#allocation4 + $0x2f8] sm:$0xff]
      %v937 = vld [vmem:[#allocation4 + $0x300] sm:$0xff]
      %v938 = vld [vmem:[#allocation4 + $0x308] sm:$0xff]
      %v939 = vld [vmem:[#allocation4 + $0x310] sm:$0xff]
      %v940 = vld [vmem:[#allocation4 + $0x318] sm:$0xff]
      %v941 = vld [vmem:[#allocation4 + $0x320] sm:$0xff]
      %v942 = vld [vmem:[#allocation4 + $0x328] sm:$0xff]
      %v943 = vld [vmem:[#allocation4 + $0x330] sm:$0xff]
      %v944 = vld [vmem:[#allocation4 + $0x338] sm:$0xff]
      %v945 = vld [vmem:[#allocation4 + $0x340] sm:$0xff]
      %v946 = vld [vmem:[#allocation4 + $0x348] sm:$0xff]
      %v947 = vld [vmem:[#allocation4 + $0x350] sm:$0xff]
      %v948 = vld [vmem:[#allocation4 + $0x358] sm:$0xff]
      %v949 = vld [vmem:[#allocation4 + $0x360] sm:$0xff]
      %v950 = vld [vmem:[#allocation4 + $0x368] sm:$0xff]
      %v951 = vld [vmem:[#allocation4 + $0x370] sm:$0xff]
      %v952 = vld [vmem:[#allocation4 + $0x378] sm:$0xff]
      %v953 = vld [vmem:[#allocation4 + $0x380] sm:$0xff]
      %v954 = vld [vmem:[#allocation4 + $0x388] sm:$0xff]
      %v955 = vld [vmem:[#allocation4 + $0x390] sm:$0xff]
      %v956 = vld [vmem:[#allocation4 + $0x398] sm:$0xff]
      %v957 = vld [vmem:[#allocation4 + $0x3a0] sm:$0xff]
      %v958 = vld [vmem:[#allocation4 + $0x3a8] sm:$0xff]
      %v959 = vld [vmem:[#allocation4 + $0x3b0] sm:$0xff]
      %v960 = vld [vmem:[#allocation4 + $0x3b8] sm:$0xff]
      %v961 = vld [vmem:[#allocation4 + $0x3c0] sm:$0xff]
      %v962 = vld [vmem:[#allocation4 + $0x3c8] sm:$0xff]
      %v963 = vld [vmem:[#allocation4 + $0x3d0] sm:$0xff]
      %v964 = vld [vmem:[#allocation4 + $0x3d8] sm:$0xff]
      %v965 = vld [vmem:[#allocation4 + $0x3e0] sm:$0xff]
      %v966 = vld [vmem:[#allocation4 + $0x3e8] sm:$0xff]
      %v967 = vld [vmem:[#allocation4 + $0x3f0] sm:$0xff]
      %v968 = vld [vmem:[#allocation4 + $0x3f8] sm:$0xff]
      %v969 = vld [vmem:[#allocation4 + $0x400] sm:$0xff]
      %v970 = vld [vmem:[#allocation4 + $0x408] sm:$0xff]
      %v971 = vld [vmem:[#allocation4 + $0x410] sm:$0xff]
      %v972 = vld [vmem:[#allocation4 + $0x418] sm:$0xff]
      %v973 = vld [vmem:[#allocation4 + $0x420] sm:$0xff]
      %v974 = vld [vmem:[#allocation4 + $0x428] sm:$0xff]
      %v975 = vld [vmem:[#allocation4 + $0x430] sm:$0xff]
      %v976 = vld [vmem:[#allocation4 + $0x438] sm:$0xff]
      %v977 = vld [vmem:[#allocation4 + $0x440] sm:$0xff]
      %v978 = vld [vmem:[#allocation4 + $0x448] sm:$0xff]
      %v979 = vld [vmem:[#allocation4 + $0x450] sm:$0xff]
      %v980 = vld [vmem:[#allocation4 + $0x458] sm:$0xff]
      %v981 = vld [vmem:[#allocation4 + $0x460] sm:$0xff]
      %v982 = vld [vmem:[#allocation4 + $0x468] sm:$0xff]
      %v983 = vld [vmem:[#allocation4 + $0x470] sm:$0xff]
      %v984 = vld [vmem:[#allocation4 + $0x478] sm:$0xff]
      %v985 = vld [vmem:[#allocation4 + $0x480] sm:$0xff]
      %v986 = vld [vmem:[#allocation4 + $0x488] sm:$0xff]
      %v987 = vld [vmem:[#allocation4 + $0x490] sm:$0xff]
      %v988 = vld [vmem:[#allocation4 + $0x498] sm:$0xff]
      %v989 = vld [vmem:[#allocation4 + $0x4a0] sm:$0xff]
      %v990 = vld [vmem:[#allocation4 + $0x4a8] sm:$0xff]
      %v991 = vld [vmem:[#allocation4 + $0x4b0] sm:$0xff]
      %v992 = vld [vmem:[#allocation4 + $0x4b8] sm:$0xff]
      %v993 = vld [vmem:[#allocation4 + $0x4c0] sm:$0xff]
      %v994 = vld [vmem:[#allocation4 + $0x4c8] sm:$0xff]
      %v995 = vld [vmem:[#allocation4 + $0x4d0] sm:$0xff]
      %v996 = vld [vmem:[#allocation4 + $0x4d8] sm:$0xff]
      %v997 = vld [vmem:[#allocation4 + $0x4e0] sm:$0xff]
      %v998 = vld [vmem:[#allocation4 + $0x4e8] sm:$0xff]
      %v999 = vld [vmem:[#allocation4 + $0x4f0] sm:$0xff]
      %v1000 = vld [vmem:[#allocation4 + $0x4f8] sm:$0xff]
      %v1001 = vld [vmem:[#allocation4 + $0x500] sm:$0xff]
      %v1002 = vld [vmem:[#allocation4 + $0x508] sm:$0xff]
      %v1003 = vld [vmem:[#allocation4 + $0x510] sm:$0xff]
      %v1004 = vld [vmem:[#allocation4 + $0x518] sm:$0xff]
      %v1005 = vld [vmem:[#allocation4 + $0x520] sm:$0xff]
      %v1006 = vld [vmem:[#allocation4 + $0x528] sm:$0xff]
      %v1007 = vld [vmem:[#allocation4 + $0x530] sm:$0xff]
      %v1008 = vld [vmem:[#allocation4 + $0x538] sm:$0xff]
      %v1009 = vld [vmem:[#allocation4 + $0x540] sm:$0xff]
      %v1010 = vld [vmem:[#allocation4 + $0x548] sm:$0xff]
      %v1011 = vld [vmem:[#allocation4 + $0x550] sm:$0xff]
      %v1012 = vld [vmem:[#allocation4 + $0x558] sm:$0xff]
      %v1013 = vld [vmem:[#allocation4 + $0x560] sm:$0xff]
      %v1014 = vld [vmem:[#allocation4 + $0x568] sm:$0xff]
      %v1015 = vld [vmem:[#allocation4 + $0x570] sm:$0xff]
      %v1016 = vld [vmem:[#allocation4 + $0x578] sm:$0xff]
      %v1017 = vld [vmem:[#allocation4 + $0x580] sm:$0xff]
      %v1018 = vld [vmem:[#allocation4 + $0x588] sm:$0xff]
      %v1019 = vld [vmem:[#allocation4 + $0x590] sm:$0xff]
      %v1020 = vld [vmem:[#allocation4 + $0x598] sm:$0xff]
      %v1021 = vld [vmem:[#allocation4 + $0x5a0] sm:$0xff]
      %v1022 = vld [vmem:[#allocation4 + $0x5a8] sm:$0xff]
      %v1023 = vld [vmem:[#allocation4 + $0x5b0] sm:$0xff]
      %v1024 = vld [vmem:[#allocation4 + $0x5b8] sm:$0xff]
      %v1025 = vld [vmem:[#allocation4 + $0x5c0] sm:$0xff]
      %v1026 = vld [vmem:[#allocation4 + $0x5c8] sm:$0xff]
      %v1027 = vld [vmem:[#allocation4 + $0x5d0] sm:$0xff]
      %v1028 = vld [vmem:[#allocation4 + $0x5d8] sm:$0xff]
      %v1029 = vld [vmem:[#allocation4 + $0x5e0] sm:$0xff]
      %v1030 = vld [vmem:[#allocation4 + $0x5e8] sm:$0xff]
      %v1031 = vld [vmem:[#allocation4 + $0x5f0] sm:$0xff]
      %v1032 = vld [vmem:[#allocation4 + $0x5f8] sm:$0xff]
      %v1033 = vld [vmem:[#allocation4 + $0x600] sm:$0xff]
      %v1034 = vld [vmem:[#allocation4 + $0x608] sm:$0xff]
      %v1035 = vld [vmem:[#allocation4 + $0x610] sm:$0xff]
      %v1036 = vld [vmem:[#allocation4 + $0x618] sm:$0xff]
      %v1037 = vld [vmem:[#allocation4 + $0x620] sm:$0xff]
      %v1038 = vld [vmem:[#allocation4 + $0x628] sm:$0xff]
      %v1039 = vld [vmem:[#allocation4 + $0x630] sm:$0xff]
      %v1040 = vld [vmem:[#allocation4 + $0x638] sm:$0xff]
      %v1041 = vld [vmem:[#allocation4 + $0x640] sm:$0xff]
      %v1042 = vld [vmem:[#allocation4 + $0x648] sm:$0xff]
      %v1043 = vld [vmem:[#allocation4 + $0x650] sm:$0xff]
      %v1044 = vld [vmem:[#allocation4 + $0x658] sm:$0xff]
      %v1045 = vld [vmem:[#allocation4 + $0x660] sm:$0xff]
      %v1046 = vld [vmem:[#allocation4 + $0x668] sm:$0xff]
      %v1047 = vld [vmem:[#allocation4 + $0x670] sm:$0xff]
      %v1048 = vld [vmem:[#allocation4 + $0x678] sm:$0xff]
      %v1049 = vld [vmem:[#allocation4 + $0x680] sm:$0xff]
      %v1050 = vld [vmem:[#allocation4 + $0x688] sm:$0xff]
      %v1051 = vld [vmem:[#allocation4 + $0x690] sm:$0xff]
      %v1052 = vld [vmem:[#allocation4 + $0x698] sm:$0xff]
      %v1053 = vld [vmem:[#allocation4 + $0x6a0] sm:$0xff]
      %v1054 = vld [vmem:[#allocation4 + $0x6a8] sm:$0xff]
      %v1055 = vld [vmem:[#allocation4 + $0x6b0] sm:$0xff]
      %v1056 = vld [vmem:[#allocation4 + $0x6b8] sm:$0xff]
      %v1057 = vld [vmem:[#allocation4 + $0x6c0] sm:$0xff]
      %v1058 = vld [vmem:[#allocation4 + $0x6c8] sm:$0xff]
      %v1059 = vld [vmem:[#allocation4 + $0x6d0] sm:$0xff]
      %v1060 = vld [vmem:[#allocation4 + $0x6d8] sm:$0xff]
      %v1061 = vld [vmem:[#allocation4 + $0x6e0] sm:$0xff]
      %v1062 = vld [vmem:[#allocation4 + $0x6e8] sm:$0xff]
      %v1063 = vld [vmem:[#allocation4 + $0x6f0] sm:$0xff]
      %v1064 = vld [vmem:[#allocation4 + $0x6f8] sm:$0xff]
      %v1065 = vld [vmem:[#allocation4 + $0x700] sm:$0xff]
      %v1066 = vld [vmem:[#allocation4 + $0x708] sm:$0xff]
      %v1067 = vld [vmem:[#allocation4 + $0x710] sm:$0xff]
      %v1068 = vld [vmem:[#allocation4 + $0x718] sm:$0xff]
      %v1069 = vld [vmem:[#allocation4 + $0x720] sm:$0xff]
      %v1070 = vld [vmem:[#allocation4 + $0x728] sm:$0xff]
      %v1071 = vld [vmem:[#allocation4 + $0x730] sm:$0xff]
      %v1072 = vld [vmem:[#allocation4 + $0x738] sm:$0xff]
      %v1073 = vld [vmem:[#allocation4 + $0x740] sm:$0xff]
      %v1074 = vld [vmem:[#allocation4 + $0x748] sm:$0xff]
      %v1075 = vld [vmem:[#allocation4 + $0x750] sm:$0xff]
      %v1076 = vld [vmem:[#allocation4 + $0x758] sm:$0xff]
      %v1077 = vld [vmem:[#allocation4 + $0x760] sm:$0xff]
      %v1078 = vld [vmem:[#allocation4 + $0x768] sm:$0xff]
      %v1079 = vld [vmem:[#allocation4 + $0x770] sm:$0xff]
      %v1080 = vld [vmem:[#allocation4 + $0x778] sm:$0xff]
      %v1081 = vld [vmem:[#allocation4 + $0x780] sm:$0xff]
      %v1082 = vld [vmem:[#allocation4 + $0x788] sm:$0xff]
      %v1083 = vld [vmem:[#allocation4 + $0x790] sm:$0xff]
      %v1084 = vld [vmem:[#allocation4 + $0x798] sm:$0xff]
      %v1085 = vld [vmem:[#allocation4 + $0x7a0] sm:$0xff]
      %v1086 = vld [vmem:[#allocation4 + $0x7a8] sm:$0xff]
      %v1087 = vld [vmem:[#allocation4 + $0x7b0] sm:$0xff]
      %v1088 = vld [vmem:[#allocation4 + $0x7b8] sm:$0xff]
      %v1089 = vld [vmem:[#allocation4 + $0x7c0] sm:$0xff]
      %v1090 = vld [vmem:[#allocation4 + $0x7c8] sm:$0xff]
      %v1091 = vld [vmem:[#allocation4 + $0x7d0] sm:$0xff]
      %v1092 = vld [vmem:[#allocation4 + $0x7d8] sm:$0xff]
      %v1093 = vld [vmem:[#allocation4 + $0x7e0] sm:$0xff]
      %v1094 = vld [vmem:[#allocation4 + $0x7e8] sm:$0xff]
      %v1095 = vld [vmem:[#allocation4 + $0x7f0] sm:$0xff]
      %v1096 = vld [vmem:[#allocation4 + $0x7f8] sm:$0xff]
      %v1097 = vld [vmem:[%s6] sm:$0xf]
      %v1099 = vperm.slane %v1097, 0
      %v1100 = vperm.slane %v1097, 1
      %v1101 = vperm.slane %v1097, 2
      %v1102 = vperm.slane %v1097, 3
      %v1363 = vunpack.c.l.b16 %v841
      %v1364 = vunpack.c.h.b16 %v841
      %v1365 = vunpack.c.l.b16 %v842
      %v1366 = vunpack.c.h.b16 %v842
      %v1367 = vunpack.c.l.b16 %v843
      %v1368 = vunpack.c.h.b16 %v843
      %v1369 = vunpack.c.l.b16 %v844
      %v1370 = vunpack.c.h.b16 %v844
      %v1371 = vunpack.c.l.b16 %v845
      %v1372 = vunpack.c.h.b16 %v845
      %v1373 = vunpack.c.l.b16 %v846
      %v1374 = vunpack.c.h.b16 %v846
      %v1375 = vunpack.c.l.b16 %v847
      %v1376 = vunpack.c.h.b16 %v847
      %v1377 = vunpack.c.l.b16 %v848
      %v1378 = vunpack.c.h.b16 %v848
      %v1379 = vunpack.c.l.b16 %v849
      %v1380 = vunpack.c.h.b16 %v849
      %v1381 = vunpack.c.l.b16 %v850
      %v1382 = vunpack.c.h.b16 %v850
      %v1383 = vunpack.c.l.b16 %v851
      %v1384 = vunpack.c.h.b16 %v851
      %v1385 = vunpack.c.l.b16 %v852
      %v1386 = vunpack.c.h.b16 %v852
      %v1387 = vunpack.c.l.b16 %v853
      %v1388 = vunpack.c.h.b16 %v853
      %v1389 = vunpack.c.l.b16 %v854
      %v1390 = vunpack.c.h.b16 %v854
      %v1391 = vunpack.c.l.b16 %v855
      %v1392 = vunpack.c.h.b16 %v855
      %v1393 = vunpack.c.l.b16 %v856
      %v1394 = vunpack.c.h.b16 %v856
      %v1395 = vunpack.c.l.b16 %v857
      %v1396 = vunpack.c.h.b16 %v857
      %v1397 = vunpack.c.l.b16 %v858
      %v1398 = vunpack.c.h.b16 %v858
      %v1399 = vunpack.c.l.b16 %v859
      %v1400 = vunpack.c.h.b16 %v859
      %v1401 = vunpack.c.l.b16 %v860
      %v1402 = vunpack.c.h.b16 %v860
      %v1403 = vunpack.c.l.b16 %v861
      %v1404 = vunpack.c.h.b16 %v861
      %v1405 = vunpack.c.l.b16 %v862
      %v1406 = vunpack.c.h.b16 %v862
      %v1407 = vunpack.c.l.b16 %v863
      %v1408 = vunpack.c.h.b16 %v863
      %v1409 = vunpack.c.l.b16 %v864
      %v1410 = vunpack.c.h.b16 %v864
      %v1411 = vunpack.c.l.b16 %v865
      %v1412 = vunpack.c.h.b16 %v865
      %v1413 = vunpack.c.l.b16 %v866
      %v1414 = vunpack.c.h.b16 %v866
      %v1415 = vunpack.c.l.b16 %v867
      %v1416 = vunpack.c.h.b16 %v867
      %v1417 = vunpack.c.l.b16 %v868
      %v1418 = vunpack.c.h.b16 %v868
      %v1419 = vunpack.c.l.b16 %v869
      %v1420 = vunpack.c.h.b16 %v869
      %v1421 = vunpack.c.l.b16 %v870
      %v1422 = vunpack.c.h.b16 %v870
      %v1423 = vunpack.c.l.b16 %v871
      %v1424 = vunpack.c.h.b16 %v871
      %v1425 = vunpack.c.l.b16 %v872
      %v1426 = vunpack.c.h.b16 %v872
      %v1427 = vunpack.c.l.b16 %v873
      %v1428 = vunpack.c.h.b16 %v873
      %v1429 = vunpack.c.l.b16 %v874
      %v1430 = vunpack.c.h.b16 %v874
      %v1431 = vunpack.c.l.b16 %v875
      %v1432 = vunpack.c.h.b16 %v875
      %v1433 = vunpack.c.l.b16 %v876
      %v1434 = vunpack.c.h.b16 %v876
      %v1435 = vunpack.c.l.b16 %v877
      %v1436 = vunpack.c.h.b16 %v877
      %v1437 = vunpack.c.l.b16 %v878
      %v1438 = vunpack.c.h.b16 %v878
      %v1439 = vunpack.c.l.b16 %v879
      %v1440 = vunpack.c.h.b16 %v879
      %v1441 = vunpack.c.l.b16 %v880
      %v1442 = vunpack.c.h.b16 %v880
      %v1443 = vunpack.c.l.b16 %v881
      %v1444 = vunpack.c.h.b16 %v881
      %v1445 = vunpack.c.l.b16 %v882
      %v1446 = vunpack.c.h.b16 %v882
      %v1447 = vunpack.c.l.b16 %v883
      %v1448 = vunpack.c.h.b16 %v883
      %v1449 = vunpack.c.l.b16 %v884
      %v1450 = vunpack.c.h.b16 %v884
      %v1451 = vunpack.c.l.b16 %v885
      %v1452 = vunpack.c.h.b16 %v885
      %v1453 = vunpack.c.l.b16 %v886
      %v1454 = vunpack.c.h.b16 %v886
      %v1455 = vunpack.c.l.b16 %v887
      %v1456 = vunpack.c.h.b16 %v887
      %v1457 = vunpack.c.l.b16 %v888
      %v1458 = vunpack.c.h.b16 %v888
      %v1459 = vunpack.c.l.b16 %v889
      %v1460 = vunpack.c.h.b16 %v889
      %v1461 = vunpack.c.l.b16 %v890
      %v1462 = vunpack.c.h.b16 %v890
      %v1463 = vunpack.c.l.b16 %v891
      %v1464 = vunpack.c.h.b16 %v891
      %v1465 = vunpack.c.l.b16 %v892
      %v1466 = vunpack.c.h.b16 %v892
      %v1467 = vunpack.c.l.b16 %v893
      %v1468 = vunpack.c.h.b16 %v893
      %v1469 = vunpack.c.l.b16 %v894
      %v1470 = vunpack.c.h.b16 %v894
      %v1471 = vunpack.c.l.b16 %v895
      %v1472 = vunpack.c.h.b16 %v895
      %v1473 = vunpack.c.l.b16 %v896
      %v1474 = vunpack.c.h.b16 %v896
      %v1475 = vunpack.c.l.b16 %v897
      %v1476 = vunpack.c.h.b16 %v897
      %v1477 = vunpack.c.l.b16 %v898
      %v1478 = vunpack.c.h.b16 %v898
      %v1479 = vunpack.c.l.b16 %v899
      %v1480 = vunpack.c.h.b16 %v899
      %v1481 = vunpack.c.l.b16 %v900
      %v1482 = vunpack.c.h.b16 %v900
      %v1483 = vunpack.c.l.b16 %v901
      %v1484 = vunpack.c.h.b16 %v901
      %v1485 = vunpack.c.l.b16 %v902
      %v1486 = vunpack.c.h.b16 %v902
      %v1487 = vunpack.c.l.b16 %v903
      %v1488 = vunpack.c.h.b16 %v903
      %v1489 = vunpack.c.l.b16 %v904
      %v1490 = vunpack.c.h.b16 %v904
      %v1491 = vunpack.c.l.b16 %v905
      %v1492 = vunpack.c.h.b16 %v905
      %v1493 = vunpack.c.l.b16 %v906
      %v1494 = vunpack.c.h.b16 %v906
      %v1495 = vunpack.c.l.b16 %v907
      %v1496 = vunpack.c.h.b16 %v907
      %v1497 = vunpack.c.l.b16 %v908
      %v1498 = vunpack.c.h.b16 %v908
      %v1499 = vunpack.c.l.b16 %v909
      %v1500 = vunpack.c.h.b16 %v909
      %v1501 = vunpack.c.l.b16 %v910
      %v1502 = vunpack.c.h.b16 %v910
      %v1503 = vunpack.c.l.b16 %v911
      %v1504 = vunpack.c.h.b16 %v911
      %v1505 = vunpack.c.l.b16 %v912
      %v1506 = vunpack.c.h.b16 %v912
      %v1507 = vunpack.c.l.b16 %v913
      %v1508 = vunpack.c.h.b16 %v913
      %v1509 = vunpack.c.l.b16 %v914
      %v1510 = vunpack.c.h.b16 %v914
      %v1511 = vunpack.c.l.b16 %v915
      %v1512 = vunpack.c.h.b16 %v915
      %v1513 = vunpack.c.l.b16 %v916
      %v1514 = vunpack.c.h.b16 %v916
      %v1515 = vunpack.c.l.b16 %v917
      %v1516 = vunpack.c.h.b16 %v917
      %v1517 = vunpack.c.l.b16 %v918
      %v1518 = vunpack.c.h.b16 %v918
      %v1519 = vunpack.c.l.b16 %v919
      %v1520 = vunpack.c.h.b16 %v919
      %v1521 = vunpack.c.l.b16 %v920
      %v1522 = vunpack.c.h.b16 %v920
      %v1523 = vunpack.c.l.b16 %v921
      %v1524 = vunpack.c.h.b16 %v921
      %v1525 = vunpack.c.l.b16 %v922
      %v1526 = vunpack.c.h.b16 %v922
      %v1527 = vunpack.c.l.b16 %v923
      %v1528 = vunpack.c.h.b16 %v923
      %v1529 = vunpack.c.l.b16 %v924
      %v1530 = vunpack.c.h.b16 %v924
      %v1531 = vunpack.c.l.b16 %v925
      %v1532 = vunpack.c.h.b16 %v925
      %v1533 = vunpack.c.l.b16 %v926
      %v1534 = vunpack.c.h.b16 %v926
      %v1535 = vunpack.c.l.b16 %v927
      %v1536 = vunpack.c.h.b16 %v927
      %v1537 = vunpack.c.l.b16 %v928
      %v1538 = vunpack.c.h.b16 %v928
      %v1539 = vunpack.c.l.b16 %v929
      %v1540 = vunpack.c.h.b16 %v929
      %v1541 = vunpack.c.l.b16 %v930
      %v1542 = vunpack.c.h.b16 %v930
      %v1543 = vunpack.c.l.b16 %v931
      %v1544 = vunpack.c.h.b16 %v931
      %v1545 = vunpack.c.l.b16 %v932
      %v1546 = vunpack.c.h.b16 %v932
      %v1547 = vunpack.c.l.b16 %v933
      %v1548 = vunpack.c.h.b16 %v933
      %v1549 = vunpack.c.l.b16 %v934
      %v1550 = vunpack.c.h.b16 %v934
      %v1551 = vunpack.c.l.b16 %v935
      %v1552 = vunpack.c.h.b16 %v935
      %v1553 = vunpack.c.l.b16 %v936
      %v1554 = vunpack.c.h.b16 %v936
      %v1555 = vunpack.c.l.b16 %v937
      %v1556 = vunpack.c.h.b16 %v937
      %v1557 = vunpack.c.l.b16 %v938
      %v1558 = vunpack.c.h.b16 %v938
      %v1559 = vunpack.c.l.b16 %v939
      %v1560 = vunpack.c.h.b16 %v939
      %v1561 = vunpack.c.l.b16 %v940
      %v1562 = vunpack.c.h.b16 %v940
      %v1563 = vunpack.c.l.b16 %v941
      %v1564 = vunpack.c.h.b16 %v941
      %v1565 = vunpack.c.l.b16 %v942
      %v1566 = vunpack.c.h.b16 %v942
      %v1567 = vunpack.c.l.b16 %v943
      %v1568 = vunpack.c.h.b16 %v943
      %v1569 = vunpack.c.l.b16 %v944
      %v1570 = vunpack.c.h.b16 %v944
      %v1571 = vunpack.c.l.b16 %v945
      %v1572 = vunpack.c.h.b16 %v945
      %v1573 = vunpack.c.l.b16 %v946
      %v1574 = vunpack.c.h.b16 %v946
      %v1575 = vunpack.c.l.b16 %v947
      %v1576 = vunpack.c.h.b16 %v947
      %v1577 = vunpack.c.l.b16 %v948
      %v1578 = vunpack.c.h.b16 %v948
      %v1579 = vunpack.c.l.b16 %v949
      %v1580 = vunpack.c.h.b16 %v949
      %v1581 = vunpack.c.l.b16 %v950
      %v1582 = vunpack.c.h.b16 %v950
      %v1583 = vunpack.c.l.b16 %v951
      %v1584 = vunpack.c.h.b16 %v951
      %v1585 = vunpack.c.l.b16 %v952
      %v1586 = vunpack.c.h.b16 %v952
      %v1587 = vunpack.c.l.b16 %v953
      %v1588 = vunpack.c.h.b16 %v953
      %v1589 = vunpack.c.l.b16 %v954
      %v1590 = vunpack.c.h.b16 %v954
      %v1591 = vunpack.c.l.b16 %v955
      %v1592 = vunpack.c.h.b16 %v955
      %v1593 = vunpack.c.l.b16 %v956
      %v1594 = vunpack.c.h.b16 %v956
      %v1595 = vunpack.c.l.b16 %v957
      %v1596 = vunpack.c.h.b16 %v957
      %v1597 = vunpack.c.l.b16 %v958
      %v1598 = vunpack.c.h.b16 %v958
      %v1599 = vunpack.c.l.b16 %v959
      %v1600 = vunpack.c.h.b16 %v959
      %v1601 = vunpack.c.l.b16 %v960
      %v1602 = vunpack.c.h.b16 %v960
      %v1603 = vunpack.c.l.b16 %v961
      %v1604 = vunpack.c.h.b16 %v961
      %v1605 = vunpack.c.l.b16 %v962
      %v1606 = vunpack.c.h.b16 %v962
      %v1607 = vunpack.c.l.b16 %v963
      %v1608 = vunpack.c.h.b16 %v963
      %v1609 = vunpack.c.l.b16 %v964
      %v1610 = vunpack.c.h.b16 %v964
      %v1611 = vunpack.c.l.b16 %v965
      %v1612 = vunpack.c.h.b16 %v965
      %v1613 = vunpack.c.l.b16 %v966
      %v1614 = vunpack.c.h.b16 %v966
      %v1615 = vunpack.c.l.b16 %v967
      %v1616 = vunpack.c.h.b16 %v967
      %v1617 = vunpack.c.l.b16 %v968
      %v1618 = vunpack.c.h.b16 %v968
      %v1619 = vunpack.c.l.b16 %v969
      %v1620 = vunpack.c.h.b16 %v969
      %v1621 = vunpack.c.l.b16 %v970
      %v1622 = vunpack.c.h.b16 %v970
      %v1623 = vunpack.c.l.b16 %v971
      %v1624 = vunpack.c.h.b16 %v971
      %v1625 = vunpack.c.l.b16 %v972
      %v1626 = vunpack.c.h.b16 %v972
      %v1627 = vunpack.c.l.b16 %v973
      %v1628 = vunpack.c.h.b16 %v973
      %v1629 = vunpack.c.l.b16 %v974
      %v1630 = vunpack.c.h.b16 %v974
      %v1631 = vunpack.c.l.b16 %v975
      %v1632 = vunpack.c.h.b16 %v975
      %v1633 = vunpack.c.l.b16 %v976
      %v1634 = vunpack.c.h.b16 %v976
      %v1635 = vunpack.c.l.b16 %v977
      %v1636 = vunpack.c.h.b16 %v977
      %v1637 = vunpack.c.l.b16 %v978
      %v1638 = vunpack.c.h.b16 %v978
      %v1639 = vunpack.c.l.b16 %v979
      %v1640 = vunpack.c.h.b16 %v979
      %v1641 = vunpack.c.l.b16 %v980
      %v1642 = vunpack.c.h.b16 %v980
      %v1643 = vunpack.c.l.b16 %v981
      %v1644 = vunpack.c.h.b16 %v981
      %v1645 = vunpack.c.l.b16 %v982
      %v1646 = vunpack.c.h.b16 %v982
      %v1647 = vunpack.c.l.b16 %v983
      %v1648 = vunpack.c.h.b16 %v983
      %v1649 = vunpack.c.l.b16 %v984
      %v1650 = vunpack.c.h.b16 %v984
      %v1651 = vunpack.c.l.b16 %v985
      %v1652 = vunpack.c.h.b16 %v985
      %v1653 = vunpack.c.l.b16 %v986
      %v1654 = vunpack.c.h.b16 %v986
      %v1655 = vunpack.c.l.b16 %v987
      %v1656 = vunpack.c.h.b16 %v987
      %v1657 = vunpack.c.l.b16 %v988
      %v1658 = vunpack.c.h.b16 %v988
      %v1659 = vunpack.c.l.b16 %v989
      %v1660 = vunpack.c.h.b16 %v989
      %v1661 = vunpack.c.l.b16 %v990
      %v1662 = vunpack.c.h.b16 %v990
      %v1663 = vunpack.c.l.b16 %v991
      %v1664 = vunpack.c.h.b16 %v991
      %v1665 = vunpack.c.l.b16 %v992
      %v1666 = vunpack.c.h.b16 %v992
      %v1667 = vunpack.c.l.b16 %v993
      %v1668 = vunpack.c.h.b16 %v993
      %v1669 = vunpack.c.l.b16 %v994
      %v1670 = vunpack.c.h.b16 %v994
      %v1671 = vunpack.c.l.b16 %v995
      %v1672 = vunpack.c.h.b16 %v995
      %v1673 = vunpack.c.l.b16 %v996
      %v1674 = vunpack.c.h.b16 %v996
      %v1675 = vunpack.c.l.b16 %v997
      %v1676 = vunpack.c.h.b16 %v997
      %v1677 = vunpack.c.l.b16 %v998
      %v1678 = vunpack.c.h.b16 %v998
      %v1679 = vunpack.c.l.b16 %v999
      %v1680 = vunpack.c.h.b16 %v999
      %v1681 = vunpack.c.l.b16 %v1000
      %v1682 = vunpack.c.h.b16 %v1000
      %v1683 = vunpack.c.l.b16 %v1001
      %v1684 = vunpack.c.h.b16 %v1001
      %v1685 = vunpack.c.l.b16 %v1002
      %v1686 = vunpack.c.h.b16 %v1002
      %v1687 = vunpack.c.l.b16 %v1003
      %v1688 = vunpack.c.h.b16 %v1003
      %v1689 = vunpack.c.l.b16 %v1004
      %v1690 = vunpack.c.h.b16 %v1004
      %v1691 = vunpack.c.l.b16 %v1005
      %v1692 = vunpack.c.h.b16 %v1005
      %v1693 = vunpack.c.l.b16 %v1006
      %v1694 = vunpack.c.h.b16 %v1006
      %v1695 = vunpack.c.l.b16 %v1007
      %v1696 = vunpack.c.h.b16 %v1007
      %v1697 = vunpack.c.l.b16 %v1008
      %v1698 = vunpack.c.h.b16 %v1008
      %v1699 = vunpack.c.l.b16 %v1009
      %v1700 = vunpack.c.h.b16 %v1009
      %v1701 = vunpack.c.l.b16 %v1010
      %v1702 = vunpack.c.h.b16 %v1010
      %v1703 = vunpack.c.l.b16 %v1011
      %v1704 = vunpack.c.h.b16 %v1011
      %v1705 = vunpack.c.l.b16 %v1012
      %v1706 = vunpack.c.h.b16 %v1012
      %v1707 = vunpack.c.l.b16 %v1013
      %v1708 = vunpack.c.h.b16 %v1013
      %v1709 = vunpack.c.l.b16 %v1014
      %v1710 = vunpack.c.h.b16 %v1014
      %v1711 = vunpack.c.l.b16 %v1015
      %v1712 = vunpack.c.h.b16 %v1015
      %v1713 = vunpack.c.l.b16 %v1016
      %v1714 = vunpack.c.h.b16 %v1016
      %v1715 = vunpack.c.l.b16 %v1017
      %v1716 = vunpack.c.h.b16 %v1017
      %v1717 = vunpack.c.l.b16 %v1018
      %v1718 = vunpack.c.h.b16 %v1018
      %v1719 = vunpack.c.l.b16 %v1019
      %v1720 = vunpack.c.h.b16 %v1019
      %v1721 = vunpack.c.l.b16 %v1020
      %v1722 = vunpack.c.h.b16 %v1020
      %v1723 = vunpack.c.l.b16 %v1021
      %v1724 = vunpack.c.h.b16 %v1021
      %v1725 = vunpack.c.l.b16 %v1022
      %v1726 = vunpack.c.h.b16 %v1022
      %v1727 = vunpack.c.l.b16 %v1023
      %v1728 = vunpack.c.h.b16 %v1023
      %v1729 = vunpack.c.l.b16 %v1024
      %v1730 = vunpack.c.h.b16 %v1024
      %v1731 = vunpack.c.l.b16 %v1025
      %v1732 = vunpack.c.h.b16 %v1025
      %v1733 = vunpack.c.l.b16 %v1026
      %v1734 = vunpack.c.h.b16 %v1026
      %v1735 = vunpack.c.l.b16 %v1027
      %v1736 = vunpack.c.h.b16 %v1027
      %v1737 = vunpack.c.l.b16 %v1028
      %v1738 = vunpack.c.h.b16 %v1028
      %v1739 = vunpack.c.l.b16 %v1029
      %v1740 = vunpack.c.h.b16 %v1029
      %v1741 = vunpack.c.l.b16 %v1030
      %v1742 = vunpack.c.h.b16 %v1030
      %v1743 = vunpack.c.l.b16 %v1031
      %v1744 = vunpack.c.h.b16 %v1031
      %v1745 = vunpack.c.l.b16 %v1032
      %v1746 = vunpack.c.h.b16 %v1032
      %v1747 = vunpack.c.l.b16 %v1033
      %v1748 = vunpack.c.h.b16 %v1033
      %v1749 = vunpack.c.l.b16 %v1034
      %v1750 = vunpack.c.h.b16 %v1034
      %v1751 = vunpack.c.l.b16 %v1035
      %v1752 = vunpack.c.h.b16 %v1035
      %v1753 = vunpack.c.l.b16 %v1036
      %v1754 = vunpack.c.h.b16 %v1036
      %v1755 = vunpack.c.l.b16 %v1037
      %v1756 = vunpack.c.h.b16 %v1037
      %v1757 = vunpack.c.l.b16 %v1038
      %v1758 = vunpack.c.h.b16 %v1038
      %v1759 = vunpack.c.l.b16 %v1039
      %v1760 = vunpack.c.h.b16 %v1039
      %v1761 = vunpack.c.l.b16 %v1040
      %v1762 = vunpack.c.h.b16 %v1040
      %v1763 = vunpack.c.l.b16 %v1041
      %v1764 = vunpack.c.h.b16 %v1041
      %v1765 = vunpack.c.l.b16 %v1042
      %v1766 = vunpack.c.h.b16 %v1042
      %v1767 = vunpack.c.l.b16 %v1043
      %v1768 = vunpack.c.h.b16 %v1043
      %v1769 = vunpack.c.l.b16 %v1044
      %v1770 = vunpack.c.h.b16 %v1044
      %v1771 = vunpack.c.l.b16 %v1045
      %v1772 = vunpack.c.h.b16 %v1045
      %v1773 = vunpack.c.l.b16 %v1046
      %v1774 = vunpack.c.h.b16 %v1046
      %v1775 = vunpack.c.l.b16 %v1047
      %v1776 = vunpack.c.h.b16 %v1047
      %v1777 = vunpack.c.l.b16 %v1048
      %v1778 = vunpack.c.h.b16 %v1048
      %v1779 = vunpack.c.l.b16 %v1049
      %v1780 = vunpack.c.h.b16 %v1049
      %v1781 = vunpack.c.l.b16 %v1050
      %v1782 = vunpack.c.h.b16 %v1050
      %v1783 = vunpack.c.l.b16 %v1051
      %v1784 = vunpack.c.h.b16 %v1051
      %v1785 = vunpack.c.l.b16 %v1052
      %v1786 = vunpack.c.h.b16 %v1052
      %v1787 = vunpack.c.l.b16 %v1053
      %v1788 = vunpack.c.h.b16 %v1053
      %v1789 = vunpack.c.l.b16 %v1054
      %v1790 = vunpack.c.h.b16 %v1054
      %v1791 = vunpack.c.l.b16 %v1055
      %v1792 = vunpack.c.h.b16 %v1055
      %v1793 = vunpack.c.l.b16 %v1056
      %v1794 = vunpack.c.h.b16 %v1056
      %v1795 = vunpack.c.l.b16 %v1057
      %v1796 = vunpack.c.h.b16 %v1057
      %v1797 = vunpack.c.l.b16 %v1058
      %v1798 = vunpack.c.h.b16 %v1058
      %v1799 = vunpack.c.l.b16 %v1059
      %v1800 = vunpack.c.h.b16 %v1059
      %v1801 = vunpack.c.l.b16 %v1060
      %v1802 = vunpack.c.h.b16 %v1060
      %v1803 = vunpack.c.l.b16 %v1061
      %v1804 = vunpack.c.h.b16 %v1061
      %v1805 = vunpack.c.l.b16 %v1062
      %v1806 = vunpack.c.h.b16 %v1062
      %v1807 = vunpack.c.l.b16 %v1063
      %v1808 = vunpack.c.h.b16 %v1063
      %v1809 = vunpack.c.l.b16 %v1064
      %v1810 = vunpack.c.h.b16 %v1064
      %v1811 = vunpack.c.l.b16 %v1065
      %v1812 = vunpack.c.h.b16 %v1065
      %v1813 = vunpack.c.l.b16 %v1066
      %v1814 = vunpack.c.h.b16 %v1066
      %v1815 = vunpack.c.l.b16 %v1067
      %v1816 = vunpack.c.h.b16 %v1067
      %v1817 = vunpack.c.l.b16 %v1068
      %v1818 = vunpack.c.h.b16 %v1068
      %v1819 = vunpack.c.l.b16 %v1069
      %v1820 = vunpack.c.h.b16 %v1069
      %v1821 = vunpack.c.l.b16 %v1070
      %v1822 = vunpack.c.h.b16 %v1070
      %v1823 = vunpack.c.l.b16 %v1071
      %v1824 = vunpack.c.h.b16 %v1071
      %v1825 = vunpack.c.l.b16 %v1072
      %v1826 = vunpack.c.h.b16 %v1072
      %v1827 = vunpack.c.l.b16 %v1073
      %v1828 = vunpack.c.h.b16 %v1073
      %v1829 = vunpack.c.l.b16 %v1074
      %v1830 = vunpack.c.h.b16 %v1074
      %v1831 = vunpack.c.l.b16 %v1075
      %v1832 = vunpack.c.h.b16 %v1075
      %v1833 = vunpack.c.l.b16 %v1076
      %v1834 = vunpack.c.h.b16 %v1076
      %v1835 = vunpack.c.l.b16 %v1077
      %v1836 = vunpack.c.h.b16 %v1077
      %v1837 = vunpack.c.l.b16 %v1078
      %v1838 = vunpack.c.h.b16 %v1078
      %v1839 = vunpack.c.l.b16 %v1079
      %v1840 = vunpack.c.h.b16 %v1079
      %v1841 = vunpack.c.l.b16 %v1080
      %v1842 = vunpack.c.h.b16 %v1080
      %v1843 = vunpack.c.l.b16 %v1081
      %v1844 = vunpack.c.h.b16 %v1081
      %v1845 = vunpack.c.l.b16 %v1082
      %v1846 = vunpack.c.h.b16 %v1082
      %v1847 = vunpack.c.l.b16 %v1083
      %v1848 = vunpack.c.h.b16 %v1083
      %v1849 = vunpack.c.l.b16 %v1084
      %v1850 = vunpack.c.h.b16 %v1084
      %v1851 = vunpack.c.l.b16 %v1085
      %v1852 = vunpack.c.h.b16 %v1085
      %v1853 = vunpack.c.l.b16 %v1086
      %v1854 = vunpack.c.h.b16 %v1086
      %v1855 = vunpack.c.l.b16 %v1087
      %v1856 = vunpack.c.h.b16 %v1087
      %v1857 = vunpack.c.l.b16 %v1088
      %v1858 = vunpack.c.h.b16 %v1088
      %v1859 = vunpack.c.l.b16 %v1089
      %v1860 = vunpack.c.h.b16 %v1089
      %v1861 = vunpack.c.l.b16 %v1090
      %v1862 = vunpack.c.h.b16 %v1090
      %v1863 = vunpack.c.l.b16 %v1091
      %v1864 = vunpack.c.h.b16 %v1091
      %v1865 = vunpack.c.l.b16 %v1092
      %v1866 = vunpack.c.h.b16 %v1092
      %v1867 = vunpack.c.l.b16 %v1093
      %v1868 = vunpack.c.h.b16 %v1093
      %v1869 = vunpack.c.l.b16 %v1094
      %v1870 = vunpack.c.h.b16 %v1094
      %v1871 = vunpack.c.l.b16 %v1095
      %v1872 = vunpack.c.h.b16 %v1095
      %v1873 = vunpack.c.l.b16 %v1096
      %v1874 = vunpack.c.h.b16 %v1096
      %v1875 = vpack.c.b16 %v1367, %v1363
      %v1876 = vpack.c.b16 %v1368, %v1364
      %v1877 = vpack.c.b16 %v1369, %v1365
      %v1878 = vpack.c.b16 %v1370, %v1366
      %v1879 = vpack.c.b16 %v1375, %v1371
      %v1880 = vpack.c.b16 %v1376, %v1372
      %v1881 = vpack.c.b16 %v1377, %v1373
      %v1882 = vpack.c.b16 %v1378, %v1374
      %v1883 = vpack.c.b16 %v1383, %v1379
      %v1884 = vpack.c.b16 %v1384, %v1380
      %v1885 = vpack.c.b16 %v1385, %v1381
      %v1886 = vpack.c.b16 %v1386, %v1382
      %v1887 = vpack.c.b16 %v1391, %v1387
      %v1888 = vpack.c.b16 %v1392, %v1388
      %v1889 = vpack.c.b16 %v1393, %v1389
      %v1890 = vpack.c.b16 %v1394, %v1390
      %v1891 = vpack.c.b16 %v1399, %v1395
      %v1892 = vpack.c.b16 %v1400, %v1396
      %v1893 = vpack.c.b16 %v1401, %v1397
      %v1894 = vpack.c.b16 %v1402, %v1398
      %v1895 = vpack.c.b16 %v1407, %v1403
      %v1896 = vpack.c.b16 %v1408, %v1404
      %v1897 = vpack.c.b16 %v1409, %v1405
      %v1898 = vpack.c.b16 %v1410, %v1406
      %v1899 = vpack.c.b16 %v1415, %v1411
      %v1900 = vpack.c.b16 %v1416, %v1412
      %v1901 = vpack.c.b16 %v1417, %v1413
      %v1902 = vpack.c.b16 %v1418, %v1414
      %v1903 = vpack.c.b16 %v1423, %v1419
      %v1904 = vpack.c.b16 %v1424, %v1420
      %v1905 = vpack.c.b16 %v1425, %v1421
      %v1906 = vpack.c.b16 %v1426, %v1422
      %v1907 = vpack.c.b16 %v1431, %v1427
      %v1908 = vpack.c.b16 %v1432, %v1428
      %v1909 = vpack.c.b16 %v1433, %v1429
      %v1910 = vpack.c.b16 %v1434, %v1430
      %v1911 = vpack.c.b16 %v1439, %v1435
      %v1912 = vpack.c.b16 %v1440, %v1436
      %v1913 = vpack.c.b16 %v1441, %v1437
      %v1914 = vpack.c.b16 %v1442, %v1438
      %v1915 = vpack.c.b16 %v1447, %v1443
      %v1916 = vpack.c.b16 %v1448, %v1444
      %v1917 = vpack.c.b16 %v1449, %v1445
      %v1918 = vpack.c.b16 %v1450, %v1446
      %v1919 = vpack.c.b16 %v1455, %v1451
      %v1920 = vpack.c.b16 %v1456, %v1452
      %v1921 = vpack.c.b16 %v1457, %v1453
      %v1922 = vpack.c.b16 %v1458, %v1454
      %v1923 = vpack.c.b16 %v1463, %v1459
      %v1924 = vpack.c.b16 %v1464, %v1460
      %v1925 = vpack.c.b16 %v1465, %v1461
      %v1926 = vpack.c.b16 %v1466, %v1462
      %v1927 = vpack.c.b16 %v1471, %v1467
      %v1928 = vpack.c.b16 %v1472, %v1468
      %v1929 = vpack.c.b16 %v1473, %v1469
      %v1930 = vpack.c.b16 %v1474, %v1470
      %v1931 = vpack.c.b16 %v1479, %v1475
      %v1932 = vpack.c.b16 %v1480, %v1476
      %v1933 = vpack.c.b16 %v1481, %v1477
      %v1934 = vpack.c.b16 %v1482, %v1478
      %v1935 = vpack.c.b16 %v1487, %v1483
      %v1936 = vpack.c.b16 %v1488, %v1484
      %v1937 = vpack.c.b16 %v1489, %v1485
      %v1938 = vpack.c.b16 %v1490, %v1486
      %v1939 = vpack.c.b16 %v1495, %v1491
      %v1940 = vpack.c.b16 %v1496, %v1492
      %v1941 = vpack.c.b16 %v1497, %v1493
      %v1942 = vpack.c.b16 %v1498, %v1494
      %v1943 = vpack.c.b16 %v1503, %v1499
      %v1944 = vpack.c.b16 %v1504, %v1500
      %v1945 = vpack.c.b16 %v1505, %v1501
      %v1946 = vpack.c.b16 %v1506, %v1502
      %v1947 = vpack.c.b16 %v1511, %v1507
      %v1948 = vpack.c.b16 %v1512, %v1508
      %v1949 = vpack.c.b16 %v1513, %v1509
      %v1950 = vpack.c.b16 %v1514, %v1510
      %v1951 = vpack.c.b16 %v1519, %v1515
      %v1952 = vpack.c.b16 %v1520, %v1516
      %v1953 = vpack.c.b16 %v1521, %v1517
      %v1954 = vpack.c.b16 %v1522, %v1518
      %v1955 = vpack.c.b16 %v1527, %v1523
      %v1956 = vpack.c.b16 %v1528, %v1524
      %v1957 = vpack.c.b16 %v1529, %v1525
      %v1958 = vpack.c.b16 %v1530, %v1526
      %v1959 = vpack.c.b16 %v1535, %v1531
      %v1960 = vpack.c.b16 %v1536, %v1532
      %v1961 = vpack.c.b16 %v1537, %v1533
      %v1962 = vpack.c.b16 %v1538, %v1534
      %v1963 = vpack.c.b16 %v1543, %v1539
      %v1964 = vpack.c.b16 %v1544, %v1540
      %v1965 = vpack.c.b16 %v1545, %v1541
      %v1966 = vpack.c.b16 %v1546, %v1542
      %v1967 = vpack.c.b16 %v1551, %v1547
      %v1968 = vpack.c.b16 %v1552, %v1548
      %v1969 = vpack.c.b16 %v1553, %v1549
      %v1970 = vpack.c.b16 %v1554, %v1550
      %v1971 = vpack.c.b16 %v1559, %v1555
      %v1972 = vpack.c.b16 %v1560, %v1556
      %v1973 = vpack.c.b16 %v1561, %v1557
      %v1974 = vpack.c.b16 %v1562, %v1558
      %v1975 = vpack.c.b16 %v1567, %v1563
      %v1976 = vpack.c.b16 %v1568, %v1564
      %v1977 = vpack.c.b16 %v1569, %v1565
      %v1978 = vpack.c.b16 %v1570, %v1566
      %v1979 = vpack.c.b16 %v1575, %v1571
      %v1980 = vpack.c.b16 %v1576, %v1572
      %v1981 = vpack.c.b16 %v1577, %v1573
      %v1982 = vpack.c.b16 %v1578, %v1574
      %v1983 = vpack.c.b16 %v1583, %v1579
      %v1984 = vpack.c.b16 %v1584, %v1580
      %v1985 = vpack.c.b16 %v1585, %v1581
      %v1986 = vpack.c.b16 %v1586, %v1582
      %v1987 = vpack.c.b16 %v1591, %v1587
      %v1988 = vpack.c.b16 %v1592, %v1588
      %v1989 = vpack.c.b16 %v1593, %v1589
      %v1990 = vpack.c.b16 %v1594, %v1590
      %v1991 = vpack.c.b16 %v1599, %v1595
      %v1992 = vpack.c.b16 %v1600, %v1596
      %v1993 = vpack.c.b16 %v1601, %v1597
      %v1994 = vpack.c.b16 %v1602, %v1598
      %v1995 = vpack.c.b16 %v1607, %v1603
      %v1996 = vpack.c.b16 %v1608, %v1604
      %v1997 = vpack.c.b16 %v1609, %v1605
      %v1998 = vpack.c.b16 %v1610, %v1606
      %v1999 = vpack.c.b16 %v1615, %v1611
      %v2000 = vpack.c.b16 %v1616, %v1612
      %v2001 = vpack.c.b16 %v1617, %v1613
      %v2002 = vpack.c.b16 %v1618, %v1614
      %v2003 = vpack.c.b16 %v1623, %v1619
      %v2004 = vpack.c.b16 %v1624, %v1620
      %v2005 = vpack.c.b16 %v1625, %v1621
      %v2006 = vpack.c.b16 %v1626, %v1622
      %v2007 = vpack.c.b16 %v1631, %v1627
      %v2008 = vpack.c.b16 %v1632, %v1628
      %v2009 = vpack.c.b16 %v1633, %v1629
      %v2010 = vpack.c.b16 %v1634, %v1630
      %v2011 = vpack.c.b16 %v1639, %v1635
      %v2012 = vpack.c.b16 %v1640, %v1636
      %v2013 = vpack.c.b16 %v1641, %v1637
      %v2014 = vpack.c.b16 %v1642, %v1638
      %v2015 = vpack.c.b16 %v1647, %v1643
      %v2016 = vpack.c.b16 %v1648, %v1644
      %v2017 = vpack.c.b16 %v1649, %v1645
      %v2018 = vpack.c.b16 %v1650, %v1646
      %v2019 = vpack.c.b16 %v1655, %v1651
      %v2020 = vpack.c.b16 %v1656, %v1652
      %v2021 = vpack.c.b16 %v1657, %v1653
      %v2022 = vpack.c.b16 %v1658, %v1654
      %v2023 = vpack.c.b16 %v1663, %v1659
      %v2024 = vpack.c.b16 %v1664, %v1660
      %v2025 = vpack.c.b16 %v1665, %v1661
      %v2026 = vpack.c.b16 %v1666, %v1662
      %v2027 = vpack.c.b16 %v1671, %v1667
      %v2028 = vpack.c.b16 %v1672, %v1668
      %v2029 = vpack.c.b16 %v1673, %v1669
      %v2030 = vpack.c.b16 %v1674, %v1670
      %v2031 = vpack.c.b16 %v1679, %v1675
      %v2032 = vpack.c.b16 %v1680, %v1676
      %v2033 = vpack.c.b16 %v1681, %v1677
      %v2034 = vpack.c.b16 %v1682, %v1678
      %v2035 = vpack.c.b16 %v1687, %v1683
      %v2036 = vpack.c.b16 %v1688, %v1684
      %v2037 = vpack.c.b16 %v1689, %v1685
      %v2038 = vpack.c.b16 %v1690, %v1686
      %v2039 = vpack.c.b16 %v1695, %v1691
      %v2040 = vpack.c.b16 %v1696, %v1692
      %v2041 = vpack.c.b16 %v1697, %v1693
      %v2042 = vpack.c.b16 %v1698, %v1694
      %v2043 = vpack.c.b16 %v1703, %v1699
      %v2044 = vpack.c.b16 %v1704, %v1700
      %v2045 = vpack.c.b16 %v1705, %v1701
      %v2046 = vpack.c.b16 %v1706, %v1702
      %v2047 = vpack.c.b16 %v1711, %v1707
      %v2048 = vpack.c.b16 %v1712, %v1708
      %v2049 = vpack.c.b16 %v1713, %v1709
      %v2050 = vpack.c.b16 %v1714, %v1710
      %v2051 = vpack.c.b16 %v1719, %v1715
      %v2052 = vpack.c.b16 %v1720, %v1716
      %v2053 = vpack.c.b16 %v1721, %v1717
      %v2054 = vpack.c.b16 %v1722, %v1718
      %v2055 = vpack.c.b16 %v1727, %v1723
      %v2056 = vpack.c.b16 %v1728, %v1724
      %v2057 = vpack.c.b16 %v1729, %v1725
      %v2058 = vpack.c.b16 %v1730, %v1726
      %v2059 = vpack.c.b16 %v1735, %v1731
      %v2060 = vpack.c.b16 %v1736, %v1732
      %v2061 = vpack.c.b16 %v1737, %v1733
      %v2062 = vpack.c.b16 %v1738, %v1734
      %v2063 = vpack.c.b16 %v1743, %v1739
      %v2064 = vpack.c.b16 %v1744, %v1740
      %v2065 = vpack.c.b16 %v1745, %v1741
      %v2066 = vpack.c.b16 %v1746, %v1742
      %v2067 = vpack.c.b16 %v1751, %v1747
      %v2068 = vpack.c.b16 %v1752, %v1748
      %v2069 = vpack.c.b16 %v1753, %v1749
      %v2070 = vpack.c.b16 %v1754, %v1750
      %v2071 = vpack.c.b16 %v1759, %v1755
      %v2072 = vpack.c.b16 %v1760, %v1756
      %v2073 = vpack.c.b16 %v1761, %v1757
      %v2074 = vpack.c.b16 %v1762, %v1758
      %v2075 = vpack.c.b16 %v1767, %v1763
      %v2076 = vpack.c.b16 %v1768, %v1764
      %v2077 = vpack.c.b16 %v1769, %v1765
      %v2078 = vpack.c.b16 %v1770, %v1766
      %v2079 = vpack.c.b16 %v1775, %v1771
      %v2080 = vpack.c.b16 %v1776, %v1772
      %v2081 = vpack.c.b16 %v1777, %v1773
      %v2082 = vpack.c.b16 %v1778, %v1774
      %v2083 = vpack.c.b16 %v1783, %v1779
      %v2084 = vpack.c.b16 %v1784, %v1780
      %v2085 = vpack.c.b16 %v1785, %v1781
      %v2086 = vpack.c.b16 %v1786, %v1782
      %v2087 = vpack.c.b16 %v1791, %v1787
      %v2088 = vpack.c.b16 %v1792, %v1788
      %v2089 = vpack.c.b16 %v1793, %v1789
      %v2090 = vpack.c.b16 %v1794, %v1790
      %v2091 = vpack.c.b16 %v1799, %v1795
      %v2092 = vpack.c.b16 %v1800, %v1796
      %v2093 = vpack.c.b16 %v1801, %v1797
      %v2094 = vpack.c.b16 %v1802, %v1798
      %v2095 = vpack.c.b16 %v1807, %v1803
      %v2096 = vpack.c.b16 %v1808, %v1804
      %v2097 = vpack.c.b16 %v1809, %v1805
      %v2098 = vpack.c.b16 %v1810, %v1806
      %v2099 = vpack.c.b16 %v1815, %v1811
      %v2100 = vpack.c.b16 %v1816, %v1812
      %v2101 = vpack.c.b16 %v1817, %v1813
      %v2102 = vpack.c.b16 %v1818, %v1814
      %v2103 = vpack.c.b16 %v1823, %v1819
      %v2104 = vpack.c.b16 %v1824, %v1820
      %v2105 = vpack.c.b16 %v1825, %v1821
      %v2106 = vpack.c.b16 %v1826, %v1822
      %v2107 = vpack.c.b16 %v1831, %v1827
      %v2108 = vpack.c.b16 %v1832, %v1828
      %v2109 = vpack.c.b16 %v1833, %v1829
      %v2110 = vpack.c.b16 %v1834, %v1830
      %v2111 = vpack.c.b16 %v1839, %v1835
      %v2112 = vpack.c.b16 %v1840, %v1836
      %v2113 = vpack.c.b16 %v1841, %v1837
      %v2114 = vpack.c.b16 %v1842, %v1838
      %v2115 = vpack.c.b16 %v1847, %v1843
      %v2116 = vpack.c.b16 %v1848, %v1844
      %v2117 = vpack.c.b16 %v1849, %v1845
      %v2118 = vpack.c.b16 %v1850, %v1846
      %v2119 = vpack.c.b16 %v1855, %v1851
      %v2120 = vpack.c.b16 %v1856, %v1852
      %v2121 = vpack.c.b16 %v1857, %v1853
      %v2122 = vpack.c.b16 %v1858, %v1854
      %v2123 = vpack.c.b16 %v1863, %v1859
      %v2124 = vpack.c.b16 %v1864, %v1860
      %v2125 = vpack.c.b16 %v1865, %v1861
      %v2126 = vpack.c.b16 %v1866, %v1862
      %v2127 = vpack.c.b16 %v1871, %v1867
      %v2128 = vpack.c.b16 %v1872, %v1868
      %v2129 = vpack.c.b16 %v1873, %v1869
      %v2130 = vpack.c.b16 %v1874, %v1870
      %2387 = vmatpush.bf16.msra.mxu0 %v1903
      %2388 = vmatpush.bf16.msra.mxu0 %v1899
      %2389 = vmatpush.bf16.msra.mxu0 %v1895
      %2390 = vmatpush.bf16.msra.mxu0 %v1891
      %2391 = vmatpush.bf16.msra.mxu0 %v1887
      %2392 = vmatpush.bf16.msra.mxu0 %v1883
      %2393 = vmatpush.bf16.msra.mxu0 %v1879
      %2394 = vmatpush.bf16.msra.mxu0 %v1875
      %2395 = vmatmul.bf16.gmra.mxu0 %v833
      %v2396 = vpop.f32.mrf.mxu0
      %v2397 = vadd.f32 %v1099, %v2396
      %v2398 = vpop.f32.mrf.mxu0
      %2399 = vdwg.mxu0
      %2400 = vmatpush.bf16.msra.mxu0 %v1935
      %2401 = vmatpush.bf16.msra.mxu0 %v1931
      %2402 = vmatpush.bf16.msra.mxu0 %v1927
      %2403 = vmatpush.bf16.msra.mxu0 %v1923
      %2404 = vmatpush.bf16.msra.mxu0 %v1919
      %2405 = vmatpush.bf16.msra.mxu0 %v1915
      %2406 = vmatpush.bf16.msra.mxu0 %v1911
      %2407 = vmatpush.bf16.msra.mxu0 %v1907
      %2408 = vmatmul.bf16.gmra.mxu0 %v834
      %v2409 = vpop.f32.mrf.mxu0
      %v2410 = vadd.f32 %v2397, %v2409
      %v2411 = vpop.f32.mrf.mxu0
      %2412 = vdwg.mxu0
      %2413 = vmatpush.bf16.msra.mxu0 %v1967
      %2414 = vmatpush.bf16.msra.mxu0 %v1963
      %2415 = vmatpush.bf16.msra.mxu0 %v1959
      %2416 = vmatpush.bf16.msra.mxu0 %v1955
      %2417 = vmatpush.bf16.msra.mxu0 %v1951
      %2418 = vmatpush.bf16.msra.mxu0 %v1947
      %2419 = vmatpush.bf16.msra.mxu0 %v1943
      %2420 = vmatpush.bf16.msra.mxu0 %v1939
      %2421 = vmatmul.bf16.gmra.mxu0 %v835
      %v2422 = vpop.f32.mrf.mxu0
      %v2423 = vadd.f32 %v2410, %v2422
      %v2424 = vpop.f32.mrf.mxu0
      %2425 = vdwg.mxu0
      %2426 = vmatpush.bf16.msra.mxu0 %v1999
      %2427 = vmatpush.bf16.msra.mxu0 %v1995
      %2428 = vmatpush.bf16.msra.mxu0 %v1991
      %2429 = vmatpush.bf16.msra.mxu0 %v1987
      %2430 = vmatpush.bf16.msra.mxu0 %v1983
      %2431 = vmatpush.bf16.msra.mxu0 %v1979
      %2432 = vmatpush.bf16.msra.mxu0 %v1975
      %2433 = vmatpush.bf16.msra.mxu0 %v1971
      %2434 = vmatmul.bf16.gmra.mxu0 %v836
      %v2435 = vpop.f32.mrf.mxu0
      %v2436 = vadd.f32 %v2423, %v2435
      %v2437 = vpop.f32.mrf.mxu0
      %2438 = vdwg.mxu0
      %2439 = vmatpush.bf16.msra.mxu0 %v2031
      %2440 = vmatpush.bf16.msra.mxu0 %v2027
      %2441 = vmatpush.bf16.msra.mxu0 %v2023
      %2442 = vmatpush.bf16.msra.mxu0 %v2019
      %2443 = vmatpush.bf16.msra.mxu0 %v2015
      %2444 = vmatpush.bf16.msra.mxu0 %v2011
      %2445 = vmatpush.bf16.msra.mxu0 %v2007
      %2446 = vmatpush.bf16.msra.mxu0 %v2003
      %2447 = vmatmul.bf16.gmra.mxu0 %v837
      %v2448 = vpop.f32.mrf.mxu0
      %v2449 = vadd.f32 %v2436, %v2448
      %v2450 = vpop.f32.mrf.mxu0
      %2451 = vdwg.mxu0
      %2452 = vmatpush.bf16.msra.mxu0 %v2063
      %2453 = vmatpush.bf16.msra.mxu0 %v2059
      %2454 = vmatpush.bf16.msra.mxu0 %v2055
      %2455 = vmatpush.bf16.msra.mxu0 %v2051
      %2456 = vmatpush.bf16.msra.mxu0 %v2047
      %2457 = vmatpush.bf16.msra.mxu0 %v2043
      %2458 = vmatpush.bf16.msra.mxu0 %v2039
      %2459 = vmatpush.bf16.msra.mxu0 %v2035
      %2460 = vmatmul.bf16.gmra.mxu0 %v838
      %v2461 = vpop.f32.mrf.mxu0
      %v2462 = vadd.f32 %v2449, %v2461
      %v2463 = vpop.f32.mrf.mxu0
      %2464 = vdwg.mxu0
      %2465 = vmatpush.bf16.msra.mxu0 %v2095
      %2466 = vmatpush.bf16.msra.mxu0 %v2091
      %2467 = vmatpush.bf16.msra.mxu0 %v2087
      %2468 = vmatpush.bf16.msra.mxu0 %v2083
      %2469 = vmatpush.bf16.msra.mxu0 %v2079
      %2470 = vmatpush.bf16.msra.mxu0 %v2075
      %2471 = vmatpush.bf16.msra.mxu0 %v2071
      %2472 = vmatpush.bf16.msra.mxu0 %v2067
      %2473 = vmatmul.bf16.gmra.mxu0 %v839
      %v2474 = vpop.f32.mrf.mxu0
      %v2475 = vadd.f32 %v2462, %v2474
      %v2476 = vpop.f32.mrf.mxu0
      %2477 = vdwg.mxu0
      %2478 = vmatpush.bf16.msra.mxu0 %v2127
      %2479 = vmatpush.bf16.msra.mxu0 %v2123
      %2480 = vmatpush.bf16.msra.mxu0 %v2119
      %2481 = vmatpush.bf16.msra.mxu0 %v2115
      %2482 = vmatpush.bf16.msra.mxu0 %v2111
      %2483 = vmatpush.bf16.msra.mxu0 %v2107
      %2484 = vmatpush.bf16.msra.mxu0 %v2103
      %2485 = vmatpush.bf16.msra.mxu0 %v2099
      %2486 = vmatmul.bf16.gmra.mxu0 %v840
      %v2487 = vpop.f32.mrf.mxu0
      %v2488 = vadd.f32 %v2475, %v2487
      %v2489 = vpop.f32.mrf.mxu0
      %2490 = vdwg.mxu0
      %2491 = vmatpush.bf16.msra.mxu0 %v1904
      %2492 = vmatpush.bf16.msra.mxu0 %v1900
      %2493 = vmatpush.bf16.msra.mxu0 %v1896
      %2494 = vmatpush.bf16.msra.mxu0 %v1892
      %2495 = vmatpush.bf16.msra.mxu0 %v1888
      %2496 = vmatpush.bf16.msra.mxu0 %v1884
      %2497 = vmatpush.bf16.msra.mxu0 %v1880
      %2498 = vmatpush.bf16.msra.mxu0 %v1876
      %2499 = vmatmul.bf16.gmra.mxu0 %v833
      %v2500 = vpop.f32.mrf.mxu0
      %v2501 = vadd.f32 %v1100, %v2500
      %v2502 = vpop.f32.mrf.mxu0
      %2503 = vdwg.mxu0
      %2504 = vmatpush.bf16.msra.mxu0 %v1936
      %2505 = vmatpush.bf16.msra.mxu0 %v1932
      %2506 = vmatpush.bf16.msra.mxu0 %v1928
      %2507 = vmatpush.bf16.msra.mxu0 %v1924
      %2508 = vmatpush.bf16.msra.mxu0 %v1920
      %2509 = vmatpush.bf16.msra.mxu0 %v1916
      %2510 = vmatpush.bf16.msra.mxu0 %v1912
      %2511 = vmatpush.bf16.msra.mxu0 %v1908
      %2512 = vmatmul.bf16.gmra.mxu0 %v834
      %v2513 = vpop.f32.mrf.mxu0
      %v2514 = vadd.f32 %v2501, %v2513
      %v2515 = vpop.f32.mrf.mxu0
      %2516 = vdwg.mxu0
      %2517 = vmatpush.bf16.msra.mxu0 %v1968
      %2518 = vmatpush.bf16.msra.mxu0 %v1964
      %2519 = vmatpush.bf16.msra.mxu0 %v1960
      %2520 = vmatpush.bf16.msra.mxu0 %v1956
      %2521 = vmatpush.bf16.msra.mxu0 %v1952
      %2522 = vmatpush.bf16.msra.mxu0 %v1948
      %2523 = vmatpush.bf16.msra.mxu0 %v1944
      %2524 = vmatpush.bf16.msra.mxu0 %v1940
      %2525 = vmatmul.bf16.gmra.mxu0 %v835
      %v2526 = vpop.f32.mrf.mxu0
      %v2527 = vadd.f32 %v2514, %v2526
      %v2528 = vpop.f32.mrf.mxu0
      %2529 = vdwg.mxu0
      %2530 = vmatpush.bf16.msra.mxu0 %v2000
      %2531 = vmatpush.bf16.msra.mxu0 %v1996
      %2532 = vmatpush.bf16.msra.mxu0 %v1992
      %2533 = vmatpush.bf16.msra.mxu0 %v1988
      %2534 = vmatpush.bf16.msra.mxu0 %v1984
      %2535 = vmatpush.bf16.msra.mxu0 %v1980
      %2536 = vmatpush.bf16.msra.mxu0 %v1976
      %2537 = vmatpush.bf16.msra.mxu0 %v1972
      %2538 = vmatmul.bf16.gmra.mxu0 %v836
      %v2539 = vpop.f32.mrf.mxu0
      %v2540 = vadd.f32 %v2527, %v2539
      %v2541 = vpop.f32.mrf.mxu0
      %2542 = vdwg.mxu0
      %2543 = vmatpush.bf16.msra.mxu0 %v2032
      %2544 = vmatpush.bf16.msra.mxu0 %v2028
      %2545 = vmatpush.bf16.msra.mxu0 %v2024
      %2546 = vmatpush.bf16.msra.mxu0 %v2020
      %2547 = vmatpush.bf16.msra.mxu0 %v2016
      %2548 = vmatpush.bf16.msra.mxu0 %v2012
      %2549 = vmatpush.bf16.msra.mxu0 %v2008
      %2550 = vmatpush.bf16.msra.mxu0 %v2004
      %2551 = vmatmul.bf16.gmra.mxu0 %v837
      %v2552 = vpop.f32.mrf.mxu0
      %v2553 = vadd.f32 %v2540, %v2552
      %v2554 = vpop.f32.mrf.mxu0
      %2555 = vdwg.mxu0
      %2556 = vmatpush.bf16.msra.mxu0 %v2064
      %2557 = vmatpush.bf16.msra.mxu0 %v2060
      %2558 = vmatpush.bf16.msra.mxu0 %v2056
      %2559 = vmatpush.bf16.msra.mxu0 %v2052
      %2560 = vmatpush.bf16.msra.mxu0 %v2048
      %2561 = vmatpush.bf16.msra.mxu0 %v2044
      %2562 = vmatpush.bf16.msra.mxu0 %v2040
      %2563 = vmatpush.bf16.msra.mxu0 %v2036
      %2564 = vmatmul.bf16.gmra.mxu0 %v838
      %v2565 = vpop.f32.mrf.mxu0
      %v2566 = vadd.f32 %v2553, %v2565
      %v2567 = vpop.f32.mrf.mxu0
      %2568 = vdwg.mxu0
      %2569 = vmatpush.bf16.msra.mxu0 %v2096
      %2570 = vmatpush.bf16.msra.mxu0 %v2092
      %2571 = vmatpush.bf16.msra.mxu0 %v2088
      %2572 = vmatpush.bf16.msra.mxu0 %v2084
      %2573 = vmatpush.bf16.msra.mxu0 %v2080
      %2574 = vmatpush.bf16.msra.mxu0 %v2076
      %2575 = vmatpush.bf16.msra.mxu0 %v2072
      %2576 = vmatpush.bf16.msra.mxu0 %v2068
      %2577 = vmatmul.bf16.gmra.mxu0 %v839
      %v2578 = vpop.f32.mrf.mxu0
      %v2579 = vadd.f32 %v2566, %v2578
      %v2580 = vpop.f32.mrf.mxu0
      %2581 = vdwg.mxu0
      %2582 = vmatpush.bf16.msra.mxu0 %v2128
      %2583 = vmatpush.bf16.msra.mxu0 %v2124
      %2584 = vmatpush.bf16.msra.mxu0 %v2120
      %2585 = vmatpush.bf16.msra.mxu0 %v2116
      %2586 = vmatpush.bf16.msra.mxu0 %v2112
      %2587 = vmatpush.bf16.msra.mxu0 %v2108
      %2588 = vmatpush.bf16.msra.mxu0 %v2104
      %2589 = vmatpush.bf16.msra.mxu0 %v2100
      %2590 = vmatmul.bf16.gmra.mxu0 %v840
      %v2591 = vpop.f32.mrf.mxu0
      %v2592 = vadd.f32 %v2579, %v2591
      %v2593 = vpop.f32.mrf.mxu0
      %2594 = vdwg.mxu0
      %2595 = vmatpush.bf16.msra.mxu0 %v1905
      %2596 = vmatpush.bf16.msra.mxu0 %v1901
      %2597 = vmatpush.bf16.msra.mxu0 %v1897
      %2598 = vmatpush.bf16.msra.mxu0 %v1893
      %2599 = vmatpush.bf16.msra.mxu0 %v1889
      %2600 = vmatpush.bf16.msra.mxu0 %v1885
      %2601 = vmatpush.bf16.msra.mxu0 %v1881
      %2602 = vmatpush.bf16.msra.mxu0 %v1877
      %2603 = vmatmul.bf16.gmra.mxu0 %v833
      %v2604 = vpop.f32.mrf.mxu0
      %v2605 = vadd.f32 %v1101, %v2604
      %v2606 = vpop.f32.mrf.mxu0
      %2607 = vdwg.mxu0
      %2608 = vmatpush.bf16.msra.mxu0 %v1937
      %2609 = vmatpush.bf16.msra.mxu0 %v1933
      %2610 = vmatpush.bf16.msra.mxu0 %v1929
      %2611 = vmatpush.bf16.msra.mxu0 %v1925
      %2612 = vmatpush.bf16.msra.mxu0 %v1921
      %2613 = vmatpush.bf16.msra.mxu0 %v1917
      %2614 = vmatpush.bf16.msra.mxu0 %v1913
      %2615 = vmatpush.bf16.msra.mxu0 %v1909
      %2616 = vmatmul.bf16.gmra.mxu0 %v834
      %v2617 = vpop.f32.mrf.mxu0
      %v2618 = vadd.f32 %v2605, %v2617
      %v2619 = vpop.f32.mrf.mxu0
      %2620 = vdwg.mxu0
      %2621 = vmatpush.bf16.msra.mxu0 %v1969
      %2622 = vmatpush.bf16.msra.mxu0 %v1965
      %2623 = vmatpush.bf16.msra.mxu0 %v1961
      %2624 = vmatpush.bf16.msra.mxu0 %v1957
      %2625 = vmatpush.bf16.msra.mxu0 %v1953
      %2626 = vmatpush.bf16.msra.mxu0 %v1949
      %2627 = vmatpush.bf16.msra.mxu0 %v1945
      %2628 = vmatpush.bf16.msra.mxu0 %v1941
      %2629 = vmatmul.bf16.gmra.mxu0 %v835
      %v2630 = vpop.f32.mrf.mxu0
      %v2631 = vadd.f32 %v2618, %v2630
      %v2632 = vpop.f32.mrf.mxu0
      %2633 = vdwg.mxu0
      %2634 = vmatpush.bf16.msra.mxu0 %v2001
      %2635 = vmatpush.bf16.msra.mxu0 %v1997
      %2636 = vmatpush.bf16.msra.mxu0 %v1993
      %2637 = vmatpush.bf16.msra.mxu0 %v1989
      %2638 = vmatpush.bf16.msra.mxu0 %v1985
      %2639 = vmatpush.bf16.msra.mxu0 %v1981
      %2640 = vmatpush.bf16.msra.mxu0 %v1977
      %2641 = vmatpush.bf16.msra.mxu0 %v1973
      %2642 = vmatmul.bf16.gmra.mxu0 %v836
      %v2643 = vpop.f32.mrf.mxu0
      %v2644 = vadd.f32 %v2631, %v2643
      %v2645 = vpop.f32.mrf.mxu0
      %2646 = vdwg.mxu0
      %2647 = vmatpush.bf16.msra.mxu0 %v2033
      %2648 = vmatpush.bf16.msra.mxu0 %v2029
      %2649 = vmatpush.bf16.msra.mxu0 %v2025
      %2650 = vmatpush.bf16.msra.mxu0 %v2021
      %2651 = vmatpush.bf16.msra.mxu0 %v2017
      %2652 = vmatpush.bf16.msra.mxu0 %v2013
      %2653 = vmatpush.bf16.msra.mxu0 %v2009
      %2654 = vmatpush.bf16.msra.mxu0 %v2005
      %2655 = vmatmul.bf16.gmra.mxu0 %v837
      %v2656 = vpop.f32.mrf.mxu0
      %v2657 = vadd.f32 %v2644, %v2656
      %v2658 = vpop.f32.mrf.mxu0
      %2659 = vdwg.mxu0
      %2660 = vmatpush.bf16.msra.mxu0 %v2065
      %2661 = vmatpush.bf16.msra.mxu0 %v2061
      %2662 = vmatpush.bf16.msra.mxu0 %v2057
      %2663 = vmatpush.bf16.msra.mxu0 %v2053
      %2664 = vmatpush.bf16.msra.mxu0 %v2049
      %2665 = vmatpush.bf16.msra.mxu0 %v2045
      %2666 = vmatpush.bf16.msra.mxu0 %v2041
      %2667 = vmatpush.bf16.msra.mxu0 %v2037
      %2668 = vmatmul.bf16.gmra.mxu0 %v838
      %v2669 = vpop.f32.mrf.mxu0
      %v2670 = vadd.f32 %v2657, %v2669
      %v2671 = vpop.f32.mrf.mxu0
      %2672 = vdwg.mxu0
      %2673 = vmatpush.bf16.msra.mxu0 %v2097
      %2674 = vmatpush.bf16.msra.mxu0 %v2093
      %2675 = vmatpush.bf16.msra.mxu0 %v2089
      %2676 = vmatpush.bf16.msra.mxu0 %v2085
      %2677 = vmatpush.bf16.msra.mxu0 %v2081
      %2678 = vmatpush.bf16.msra.mxu0 %v2077
      %2679 = vmatpush.bf16.msra.mxu0 %v2073
      %2680 = vmatpush.bf16.msra.mxu0 %v2069
      %2681 = vmatmul.bf16.gmra.mxu0 %v839
      %v2682 = vpop.f32.mrf.mxu0
      %v2683 = vadd.f32 %v2670, %v2682
      %v2684 = vpop.f32.mrf.mxu0
      %2685 = vdwg.mxu0
      %2686 = vmatpush.bf16.msra.mxu0 %v2129
      %2687 = vmatpush.bf16.msra.mxu0 %v2125
      %2688 = vmatpush.bf16.msra.mxu0 %v2121
      %2689 = vmatpush.bf16.msra.mxu0 %v2117
      %2690 = vmatpush.bf16.msra.mxu0 %v2113
      %2691 = vmatpush.bf16.msra.mxu0 %v2109
      %2692 = vmatpush.bf16.msra.mxu0 %v2105
      %2693 = vmatpush.bf16.msra.mxu0 %v2101
      %2694 = vmatmul.bf16.gmra.mxu0 %v840
      %v2695 = vpop.f32.mrf.mxu0
      %v2696 = vadd.f32 %v2683, %v2695
      %v2697 = vpop.f32.mrf.mxu0
      %2698 = vdwg.mxu0
      %2699 = vmatpush.bf16.msra.mxu0 %v1906
      %2700 = vmatpush.bf16.msra.mxu0 %v1902
      %2701 = vmatpush.bf16.msra.mxu0 %v1898
      %2702 = vmatpush.bf16.msra.mxu0 %v1894
      %2703 = vmatpush.bf16.msra.mxu0 %v1890
      %2704 = vmatpush.bf16.msra.mxu0 %v1886
      %2705 = vmatpush.bf16.msra.mxu0 %v1882
      %2706 = vmatpush.bf16.msra.mxu0 %v1878
      %2707 = vmatmul.bf16.gmra.mxu0 %v833
      %v2708 = vpop.f32.mrf.mxu0
      %v2709 = vadd.f32 %v1102, %v2708
      %v2710 = vpop.f32.mrf.mxu0
      %2711 = vdwg.mxu0
      %2712 = vmatpush.bf16.msra.mxu0 %v1938
      %2713 = vmatpush.bf16.msra.mxu0 %v1934
      %2714 = vmatpush.bf16.msra.mxu0 %v1930
      %2715 = vmatpush.bf16.msra.mxu0 %v1926
      %2716 = vmatpush.bf16.msra.mxu0 %v1922
      %2717 = vmatpush.bf16.msra.mxu0 %v1918
      %2718 = vmatpush.bf16.msra.mxu0 %v1914
      %2719 = vmatpush.bf16.msra.mxu0 %v1910
      %2720 = vmatmul.bf16.gmra.mxu0 %v834
      %v2721 = vpop.f32.mrf.mxu0
      %v2722 = vadd.f32 %v2709, %v2721
      %v2723 = vpop.f32.mrf.mxu0
      %2724 = vdwg.mxu0
      %2725 = vmatpush.bf16.msra.mxu0 %v1970
      %2726 = vmatpush.bf16.msra.mxu0 %v1966
      %2727 = vmatpush.bf16.msra.mxu0 %v1962
      %2728 = vmatpush.bf16.msra.mxu0 %v1958
      %2729 = vmatpush.bf16.msra.mxu0 %v1954
      %2730 = vmatpush.bf16.msra.mxu0 %v1950
      %2731 = vmatpush.bf16.msra.mxu0 %v1946
      %2732 = vmatpush.bf16.msra.mxu0 %v1942
      %2733 = vmatmul.bf16.gmra.mxu0 %v835
      %v2734 = vpop.f32.mrf.mxu0
      %v2735 = vadd.f32 %v2722, %v2734
      %v2736 = vpop.f32.mrf.mxu0
      %2737 = vdwg.mxu0
      %2738 = vmatpush.bf16.msra.mxu0 %v2002
      %2739 = vmatpush.bf16.msra.mxu0 %v1998
      %2740 = vmatpush.bf16.msra.mxu0 %v1994
      %2741 = vmatpush.bf16.msra.mxu0 %v1990
      %2742 = vmatpush.bf16.msra.mxu0 %v1986
      %2743 = vmatpush.bf16.msra.mxu0 %v1982
      %2744 = vmatpush.bf16.msra.mxu0 %v1978
      %2745 = vmatpush.bf16.msra.mxu0 %v1974
      %2746 = vmatmul.bf16.gmra.mxu0 %v836
      %v2747 = vpop.f32.mrf.mxu0
      %v2748 = vadd.f32 %v2735, %v2747
      %v2749 = vpop.f32.mrf.mxu0
      %2750 = vdwg.mxu0
      %2751 = vmatpush.bf16.msra.mxu0 %v2034
      %2752 = vmatpush.bf16.msra.mxu0 %v2030
      %2753 = vmatpush.bf16.msra.mxu0 %v2026
      %2754 = vmatpush.bf16.msra.mxu0 %v2022
      %2755 = vmatpush.bf16.msra.mxu0 %v2018
      %2756 = vmatpush.bf16.msra.mxu0 %v2014
      %2757 = vmatpush.bf16.msra.mxu0 %v2010
      %2758 = vmatpush.bf16.msra.mxu0 %v2006
      %2759 = vmatmul.bf16.gmra.mxu0 %v837
      %v2760 = vpop.f32.mrf.mxu0
      %v2761 = vadd.f32 %v2748, %v2760
      %v2762 = vpop.f32.mrf.mxu0
      %2763 = vdwg.mxu0
      %2764 = vmatpush.bf16.msra.mxu0 %v2066
      %2765 = vmatpush.bf16.msra.mxu0 %v2062
      %2766 = vmatpush.bf16.msra.mxu0 %v2058
      %2767 = vmatpush.bf16.msra.mxu0 %v2054
      %2768 = vmatpush.bf16.msra.mxu0 %v2050
      %2769 = vmatpush.bf16.msra.mxu0 %v2046
      %2770 = vmatpush.bf16.msra.mxu0 %v2042
      %2771 = vmatpush.bf16.msra.mxu0 %v2038
      %2772 = vmatmul.bf16.gmra.mxu0 %v838
      %v2773 = vpop.f32.mrf.mxu0
      %v2774 = vadd.f32 %v2761, %v2773
      %v2775 = vpop.f32.mrf.mxu0
      %2776 = vdwg.mxu0
      %2777 = vmatpush.bf16.msra.mxu0 %v2098
      %2778 = vmatpush.bf16.msra.mxu0 %v2094
      %2779 = vmatpush.bf16.msra.mxu0 %v2090
      %2780 = vmatpush.bf16.msra.mxu0 %v2086
      %2781 = vmatpush.bf16.msra.mxu0 %v2082
      %2782 = vmatpush.bf16.msra.mxu0 %v2078
      %2783 = vmatpush.bf16.msra.mxu0 %v2074
      %2784 = vmatpush.bf16.msra.mxu0 %v2070
      %2785 = vmatmul.bf16.gmra.mxu0 %v839
      %v2786 = vpop.f32.mrf.mxu0
      %v2787 = vadd.f32 %v2774, %v2786
      %v2788 = vpop.f32.mrf.mxu0
      %2789 = vdwg.mxu0
      %2790 = vmatpush.bf16.msra.mxu0 %v2130
      %2791 = vmatpush.bf16.msra.mxu0 %v2126
      %2792 = vmatpush.bf16.msra.mxu0 %v2122
      %2793 = vmatpush.bf16.msra.mxu0 %v2118
      %2794 = vmatpush.bf16.msra.mxu0 %v2114
      %2795 = vmatpush.bf16.msra.mxu0 %v2110
      %2796 = vmatpush.bf16.msra.mxu0 %v2106
      %2797 = vmatpush.bf16.msra.mxu0 %v2102
      %2798 = vmatmul.bf16.gmra.mxu0 %v840
      %v2799 = vpop.f32.mrf.mxu0
      %v2800 = vadd.f32 %v2787, %v2799
      %v2801 = vpop.f32.mrf.mxu0
      %2802 = vdwg.mxu0
      %v2803 = vmax.f32 %v2488, 0.0
      %v2804 = vmax.f32 %v2592, 0.0
      %v2805 = vmax.f32 %v2696, 0.0
      %v2806 = vmax.f32 %v2800, 0.0
      %v2807 = vpack.c.bf16 %v2803, %v2803
      %v2808 = vpack.c.bf16 %v2804, %v2804
      %v2809 = vpack.c.bf16 %v2805, %v2805
      %v2810 = vpack.c.bf16 %v2806, %v2806
      %v2811 = vld [vmem:[%s7] sm:$0xff]
      %v2812 = vld [vmem:[%s7 + $0x8] sm:$0xff]
      %v2813 = vld [vmem:[%s7 + $0x10] sm:$0xff]
      %v2814 = vld [vmem:[%s7 + $0x18] sm:$0xff]
      %v2815 = vld [vmem:[%s7 + $0x20] sm:$0xff]
      %v2816 = vld [vmem:[%s7 + $0x28] sm:$0xff]
      %v2817 = vld [vmem:[%s7 + $0x30] sm:$0xff]
      %v2818 = vld [vmem:[%s7 + $0x38] sm:$0xff]
      %v2819 = vld [vmem:[%s7 + $0x40] sm:$0xff]
      %v2820 = vld [vmem:[%s7 + $0x48] sm:$0xff]
      %v2821 = vld [vmem:[%s7 + $0x50] sm:$0xff]
      %v2822 = vld [vmem:[%s7 + $0x58] sm:$0xff]
      %v2823 = vld [vmem:[%s7 + $0x60] sm:$0xff]
      %v2824 = vld [vmem:[%s7 + $0x68] sm:$0xff]
      %v2825 = vld [vmem:[%s7 + $0x70] sm:$0xff]
      %v2826 = vld [vmem:[%s7 + $0x78] sm:$0xff]
      %v2827 = vld [vmem:[%s7 + $0x80] sm:$0xff]
      %v2828 = vld [vmem:[%s7 + $0x88] sm:$0xff]
      %v2829 = vld [vmem:[%s7 + $0x90] sm:$0xff]
      %v2830 = vld [vmem:[%s7 + $0x98] sm:$0xff]
      %v2831 = vld [vmem:[%s7 + $0xa0] sm:$0xff]
      %v2832 = vld [vmem:[%s7 + $0xa8] sm:$0xff]
      %v2833 = vld [vmem:[%s7 + $0xb0] sm:$0xff]
      %v2834 = vld [vmem:[%s7 + $0xb8] sm:$0xff]
      %v2835 = vld [vmem:[%s7 + $0xc0] sm:$0xff]
      %v2836 = vld [vmem:[%s7 + $0xc8] sm:$0xff]
      %v2837 = vld [vmem:[%s7 + $0xd0] sm:$0xff]
      %v2838 = vld [vmem:[%s7 + $0xd8] sm:$0xff]
      %v2839 = vld [vmem:[%s7 + $0xe0] sm:$0xff]
      %v2840 = vld [vmem:[%s7 + $0xe8] sm:$0xff]
      %v2841 = vld [vmem:[%s7 + $0xf0] sm:$0xff]
      %v2842 = vld [vmem:[%s7 + $0xf8] sm:$0xff]
      %v2843 = vld [vmem:[%s7 + $0x100] sm:$0xff]
      %v2844 = vld [vmem:[%s7 + $0x108] sm:$0xff]
      %v2845 = vld [vmem:[%s7 + $0x110] sm:$0xff]
      %v2846 = vld [vmem:[%s7 + $0x118] sm:$0xff]
      %v2847 = vld [vmem:[%s7 + $0x120] sm:$0xff]
      %v2848 = vld [vmem:[%s7 + $0x128] sm:$0xff]
      %v2849 = vld [vmem:[%s7 + $0x130] sm:$0xff]
      %v2850 = vld [vmem:[%s7 + $0x138] sm:$0xff]
      %v2851 = vld [vmem:[%s7 + $0x140] sm:$0xff]
      %v2852 = vld [vmem:[%s7 + $0x148] sm:$0xff]
      %v2853 = vld [vmem:[%s7 + $0x150] sm:$0xff]
      %v2854 = vld [vmem:[%s7 + $0x158] sm:$0xff]
      %v2855 = vld [vmem:[%s7 + $0x160] sm:$0xff]
      %v2856 = vld [vmem:[%s7 + $0x168] sm:$0xff]
      %v2857 = vld [vmem:[%s7 + $0x170] sm:$0xff]
      %v2858 = vld [vmem:[%s7 + $0x178] sm:$0xff]
      %v2859 = vld [vmem:[%s7 + $0x180] sm:$0xff]
      %v2860 = vld [vmem:[%s7 + $0x188] sm:$0xff]
      %v2861 = vld [vmem:[%s7 + $0x190] sm:$0xff]
      %v2862 = vld [vmem:[%s7 + $0x198] sm:$0xff]
      %v2863 = vld [vmem:[%s7 + $0x1a0] sm:$0xff]
      %v2864 = vld [vmem:[%s7 + $0x1a8] sm:$0xff]
      %v2865 = vld [vmem:[%s7 + $0x1b0] sm:$0xff]
      %v2866 = vld [vmem:[%s7 + $0x1b8] sm:$0xff]
      %v2867 = vld [vmem:[%s7 + $0x1c0] sm:$0xff]
      %v2868 = vld [vmem:[%s7 + $0x1c8] sm:$0xff]
      %v2869 = vld [vmem:[%s7 + $0x1d0] sm:$0xff]
      %v2870 = vld [vmem:[%s7 + $0x1d8] sm:$0xff]
      %v2871 = vld [vmem:[%s7 + $0x1e0] sm:$0xff]
      %v2872 = vld [vmem:[%s7 + $0x1e8] sm:$0xff]
      %v2873 = vld [vmem:[%s7 + $0x1f0] sm:$0xff]
      %v2874 = vld [vmem:[%s7 + $0x1f8] sm:$0xff]
      %v2875 = vld [vmem:[%s8] sm:$0x3]
      %v2877 = vperm.slane %v2875, 0
      %v2878 = vperm.slane %v2875, 1
      %v2945 = vunpack.c.l.b16 %v2811
      %v2946 = vunpack.c.h.b16 %v2811
      %v2947 = vunpack.c.l.b16 %v2812
      %v2948 = vunpack.c.h.b16 %v2812
      %v2949 = vunpack.c.l.b16 %v2813
      %v2950 = vunpack.c.h.b16 %v2813
      %v2951 = vunpack.c.l.b16 %v2814
      %v2952 = vunpack.c.h.b16 %v2814
      %v2953 = vunpack.c.l.b16 %v2815
      %v2954 = vunpack.c.h.b16 %v2815
      %v2955 = vunpack.c.l.b16 %v2816
      %v2956 = vunpack.c.h.b16 %v2816
      %v2957 = vunpack.c.l.b16 %v2817
      %v2958 = vunpack.c.h.b16 %v2817
      %v2959 = vunpack.c.l.b16 %v2818
      %v2960 = vunpack.c.h.b16 %v2818
      %v2961 = vunpack.c.l.b16 %v2819
      %v2962 = vunpack.c.h.b16 %v2819
      %v2963 = vunpack.c.l.b16 %v2820
      %v2964 = vunpack.c.h.b16 %v2820
      %v2965 = vunpack.c.l.b16 %v2821
      %v2966 = vunpack.c.h.b16 %v2821
      %v2967 = vunpack.c.l.b16 %v2822
      %v2968 = vunpack.c.h.b16 %v2822
      %v2969 = vunpack.c.l.b16 %v2823
      %v2970 = vunpack.c.h.b16 %v2823
      %v2971 = vunpack.c.l.b16 %v2824
      %v2972 = vunpack.c.h.b16 %v2824
      %v2973 = vunpack.c.l.b16 %v2825
      %v2974 = vunpack.c.h.b16 %v2825
      %v2975 = vunpack.c.l.b16 %v2826
      %v2976 = vunpack.c.h.b16 %v2826
      %v2977 = vunpack.c.l.b16 %v2827
      %v2978 = vunpack.c.h.b16 %v2827
      %v2979 = vunpack.c.l.b16 %v2828
      %v2980 = vunpack.c.h.b16 %v2828
      %v2981 = vunpack.c.l.b16 %v2829
      %v2982 = vunpack.c.h.b16 %v2829
      %v2983 = vunpack.c.l.b16 %v2830
      %v2984 = vunpack.c.h.b16 %v2830
      %v2985 = vunpack.c.l.b16 %v2831
      %v2986 = vunpack.c.h.b16 %v2831
      %v2987 = vunpack.c.l.b16 %v2832
      %v2988 = vunpack.c.h.b16 %v2832
      %v2989 = vunpack.c.l.b16 %v2833
      %v2990 = vunpack.c.h.b16 %v2833
      %v2991 = vunpack.c.l.b16 %v2834
      %v2992 = vunpack.c.h.b16 %v2834
      %v2993 = vunpack.c.l.b16 %v2835
      %v2994 = vunpack.c.h.b16 %v2835
      %v2995 = vunpack.c.l.b16 %v2836
      %v2996 = vunpack.c.h.b16 %v2836
      %v2997 = vunpack.c.l.b16 %v2837
      %v2998 = vunpack.c.h.b16 %v2837
      %v2999 = vunpack.c.l.b16 %v2838
      %v3000 = vunpack.c.h.b16 %v2838
      %v3001 = vunpack.c.l.b16 %v2839
      %v3002 = vunpack.c.h.b16 %v2839
      %v3003 = vunpack.c.l.b16 %v2840
      %v3004 = vunpack.c.h.b16 %v2840
      %v3005 = vunpack.c.l.b16 %v2841
      %v3006 = vunpack.c.h.b16 %v2841
      %v3007 = vunpack.c.l.b16 %v2842
      %v3008 = vunpack.c.h.b16 %v2842
      %v3009 = vunpack.c.l.b16 %v2843
      %v3010 = vunpack.c.h.b16 %v2843
      %v3011 = vunpack.c.l.b16 %v2844
      %v3012 = vunpack.c.h.b16 %v2844
      %v3013 = vunpack.c.l.b16 %v2845
      %v3014 = vunpack.c.h.b16 %v2845
      %v3015 = vunpack.c.l.b16 %v2846
      %v3016 = vunpack.c.h.b16 %v2846
      %v3017 = vunpack.c.l.b16 %v2847
      %v3018 = vunpack.c.h.b16 %v2847
      %v3019 = vunpack.c.l.b16 %v2848
      %v3020 = vunpack.c.h.b16 %v2848
      %v3021 = vunpack.c.l.b16 %v2849
      %v3022 = vunpack.c.h.b16 %v2849
      %v3023 = vunpack.c.l.b16 %v2850
      %v3024 = vunpack.c.h.b16 %v2850
      %v3025 = vunpack.c.l.b16 %v2851
      %v3026 = vunpack.c.h.b16 %v2851
      %v3027 = vunpack.c.l.b16 %v2852
      %v3028 = vunpack.c.h.b16 %v2852
      %v3029 = vunpack.c.l.b16 %v2853
      %v3030 = vunpack.c.h.b16 %v2853
      %v3031 = vunpack.c.l.b16 %v2854
      %v3032 = vunpack.c.h.b16 %v2854
      %v3033 = vunpack.c.l.b16 %v2855
      %v3034 = vunpack.c.h.b16 %v2855
      %v3035 = vunpack.c.l.b16 %v2856
      %v3036 = vunpack.c.h.b16 %v2856
      %v3037 = vunpack.c.l.b16 %v2857
      %v3038 = vunpack.c.h.b16 %v2857
      %v3039 = vunpack.c.l.b16 %v2858
      %v3040 = vunpack.c.h.b16 %v2858
      %v3041 = vunpack.c.l.b16 %v2859
      %v3042 = vunpack.c.h.b16 %v2859
      %v3043 = vunpack.c.l.b16 %v2860
      %v3044 = vunpack.c.h.b16 %v2860
      %v3045 = vunpack.c.l.b16 %v2861
      %v3046 = vunpack.c.h.b16 %v2861
      %v3047 = vunpack.c.l.b16 %v2862
      %v3048 = vunpack.c.h.b16 %v2862
      %v3049 = vunpack.c.l.b16 %v2863
      %v3050 = vunpack.c.h.b16 %v2863
      %v3051 = vunpack.c.l.b16 %v2864
      %v3052 = vunpack.c.h.b16 %v2864
      %v3053 = vunpack.c.l.b16 %v2865
      %v3054 = vunpack.c.h.b16 %v2865
      %v3055 = vunpack.c.l.b16 %v2866
      %v3056 = vunpack.c.h.b16 %v2866
      %v3057 = vunpack.c.l.b16 %v2867
      %v3058 = vunpack.c.h.b16 %v2867
      %v3059 = vunpack.c.l.b16 %v2868
      %v3060 = vunpack.c.h.b16 %v2868
      %v3061 = vunpack.c.l.b16 %v2869
      %v3062 = vunpack.c.h.b16 %v2869
      %v3063 = vunpack.c.l.b16 %v2870
      %v3064 = vunpack.c.h.b16 %v2870
      %v3065 = vunpack.c.l.b16 %v2871
      %v3066 = vunpack.c.h.b16 %v2871
      %v3067 = vunpack.c.l.b16 %v2872
      %v3068 = vunpack.c.h.b16 %v2872
      %v3069 = vunpack.c.l.b16 %v2873
      %v3070 = vunpack.c.h.b16 %v2873
      %v3071 = vunpack.c.l.b16 %v2874
      %v3072 = vunpack.c.h.b16 %v2874
      %v3073 = vpack.c.b16 %v2947, %v2945
      %v3074 = vpack.c.b16 %v2948, %v2946
      %v3075 = vpack.c.b16 %v2951, %v2949
      %v3076 = vpack.c.b16 %v2952, %v2950
      %v3077 = vpack.c.b16 %v2955, %v2953
      %v3078 = vpack.c.b16 %v2956, %v2954
      %v3079 = vpack.c.b16 %v2959, %v2957
      %v3080 = vpack.c.b16 %v2960, %v2958
      %v3081 = vpack.c.b16 %v2963, %v2961
      %v3082 = vpack.c.b16 %v2964, %v2962
      %v3083 = vpack.c.b16 %v2967, %v2965
      %v3084 = vpack.c.b16 %v2968, %v2966
      %v3085 = vpack.c.b16 %v2971, %v2969
      %v3086 = vpack.c.b16 %v2972, %v2970
      %v3087 = vpack.c.b16 %v2975, %v2973
      %v3088 = vpack.c.b16 %v2976, %v2974
      %v3089 = vpack.c.b16 %v2979, %v2977
      %v3090 = vpack.c.b16 %v2980, %v2978
      %v3091 = vpack.c.b16 %v2983, %v2981
      %v3092 = vpack.c.b16 %v2984, %v2982
      %v3093 = vpack.c.b16 %v2987, %v2985
      %v3094 = vpack.c.b16 %v2988, %v2986
      %v3095 = vpack.c.b16 %v2991, %v2989
      %v3096 = vpack.c.b16 %v2992, %v2990
      %v3097 = vpack.c.b16 %v2995, %v2993
      %v3098 = vpack.c.b16 %v2996, %v2994
      %v3099 = vpack.c.b16 %v2999, %v2997
      %v3100 = vpack.c.b16 %v3000, %v2998
      %v3101 = vpack.c.b16 %v3003, %v3001
      %v3102 = vpack.c.b16 %v3004, %v3002
      %v3103 = vpack.c.b16 %v3007, %v3005
      %v3104 = vpack.c.b16 %v3008, %v3006
      %v3105 = vpack.c.b16 %v3011, %v3009
      %v3106 = vpack.c.b16 %v3012, %v3010
      %v3107 = vpack.c.b16 %v3015, %v3013
      %v3108 = vpack.c.b16 %v3016, %v3014
      %v3109 = vpack.c.b16 %v3019, %v3017
      %v3110 = vpack.c.b16 %v3020, %v3018
      %v3111 = vpack.c.b16 %v3023, %v3021
      %v3112 = vpack.c.b16 %v3024, %v3022
      %v3113 = vpack.c.b16 %v3027, %v3025
      %v3114 = vpack.c.b16 %v3028, %v3026
      %v3115 = vpack.c.b16 %v3031, %v3029
      %v3116 = vpack.c.b16 %v3032, %v3030
      %v3117 = vpack.c.b16 %v3035, %v3033
      %v3118 = vpack.c.b16 %v3036, %v3034
      %v3119 = vpack.c.b16 %v3039, %v3037
      %v3120 = vpack.c.b16 %v3040, %v3038
      %v3121 = vpack.c.b16 %v3043, %v3041
      %v3122 = vpack.c.b16 %v3044, %v3042
      %v3123 = vpack.c.b16 %v3047, %v3045
      %v3124 = vpack.c.b16 %v3048, %v3046
      %v3125 = vpack.c.b16 %v3051, %v3049
      %v3126 = vpack.c.b16 %v3052, %v3050
      %v3127 = vpack.c.b16 %v3055, %v3053
      %v3128 = vpack.c.b16 %v3056, %v3054
      %v3129 = vpack.c.b16 %v3059, %v3057
      %v3130 = vpack.c.b16 %v3060, %v3058
      %v3131 = vpack.c.b16 %v3063, %v3061
      %v3132 = vpack.c.b16 %v3064, %v3062
      %v3133 = vpack.c.b16 %v3067, %v3065
      %v3134 = vpack.c.b16 %v3068, %v3066
      %v3135 = vpack.c.b16 %v3071, %v3069
      %v3136 = vpack.c.b16 %v3072, %v3070
      %3201 = vmatpush.bf16.msra.mxu0 %v3087
      %3202 = vmatpush.bf16.msra.mxu0 %v3085
      %3203 = vmatpush.bf16.msra.mxu0 %v3083
      %3204 = vmatpush.bf16.msra.mxu0 %v3081
      %3205 = vmatpush.bf16.msra.mxu0 %v3079
      %3206 = vmatpush.bf16.msra.mxu0 %v3077
      %3207 = vmatpush.bf16.msra.mxu0 %v3075
      %3208 = vmatpush.bf16.msra.mxu0 %v3073
      %3209 = vmatmul.bf16.gmra.mxu0 %v2807
      %v3210 = vpop.f32.mrf.mxu0
      %v3211 = vadd.f32 %v2877, %v3210
      %v3212 = vpop.f32.mrf.mxu0
      %3213 = vdwg.mxu0
      %3214 = vmatpush.bf16.msra.mxu0 %v3103
      %3215 = vmatpush.bf16.msra.mxu0 %v3101
      %3216 = vmatpush.bf16.msra.mxu0 %v3099
      %3217 = vmatpush.bf16.msra.mxu0 %v3097
      %3218 = vmatpush.bf16.msra.mxu0 %v3095
      %3219 = vmatpush.bf16.msra.mxu0 %v3093
      %3220 = vmatpush.bf16.msra.mxu0 %v3091
      %3221 = vmatpush.bf16.msra.mxu0 %v3089
      %3222 = vmatmul.bf16.gmra.mxu0 %v2808
      %v3223 = vpop.f32.mrf.mxu0
      %v3224 = vadd.f32 %v3211, %v3223
      %v3225 = vpop.f32.mrf.mxu0
      %3226 = vdwg.mxu0
      %3227 = vmatpush.bf16.msra.mxu0 %v3119
      %3228 = vmatpush.bf16.msra.mxu0 %v3117
      %3229 = vmatpush.bf16.msra.mxu0 %v3115
      %3230 = vmatpush.bf16.msra.mxu0 %v3113
      %3231 = vmatpush.bf16.msra.mxu0 %v3111
      %3232 = vmatpush.bf16.msra.mxu0 %v3109
      %3233 = vmatpush.bf16.msra.mxu0 %v3107
      %3234 = vmatpush.bf16.msra.mxu0 %v3105
      %3235 = vmatmul.bf16.gmra.mxu0 %v2809
      %v3236 = vpop.f32.mrf.mxu0
      %v3237 = vadd.f32 %v3224, %v3236
      %v3238 = vpop.f32.mrf.mxu0
      %3239 = vdwg.mxu0
      %3240 = vmatpush.bf16.msra.mxu0 %v3135
      %3241 = vmatpush.bf16.msra.mxu0 %v3133
      %3242 = vmatpush.bf16.msra.mxu0 %v3131
      %3243 = vmatpush.bf16.msra.mxu0 %v3129
      %3244 = vmatpush.bf16.msra.mxu0 %v3127
      %3245 = vmatpush.bf16.msra.mxu0 %v3125
      %3246 = vmatpush.bf16.msra.mxu0 %v3123
      %3247 = vmatpush.bf16.msra.mxu0 %v3121
      %3248 = vmatmul.bf16.gmra.mxu0 %v2810
      %v3249 = vpop.f32.mrf.mxu0
      %v3250 = vadd.f32 %v3237, %v3249
      %v3251 = vpop.f32.mrf.mxu0
      %3252 = vdwg.mxu0
      %3253 = vmatpush.bf16.msra.mxu0 %v3088
      %3254 = vmatpush.bf16.msra.mxu0 %v3086
      %3255 = vmatpush.bf16.msra.mxu0 %v3084
      %3256 = vmatpush.bf16.msra.mxu0 %v3082
      %3257 = vmatpush.bf16.msra.mxu0 %v3080
      %3258 = vmatpush.bf16.msra.mxu0 %v3078
      %3259 = vmatpush.bf16.msra.mxu0 %v3076
      %3260 = vmatpush.bf16.msra.mxu0 %v3074
      %3261 = vmatmul.bf16.gmra.mxu0 %v2807
      %v3262 = vpop.f32.mrf.mxu0
      %v3263 = vadd.f32 %v2878, %v3262
      %v3264 = vpop.f32.mrf.mxu0
      %3265 = vdwg.mxu0
      %3266 = vmatpush.bf16.msra.mxu0 %v3104
      %3267 = vmatpush.bf16.msra.mxu0 %v3102
      %3268 = vmatpush.bf16.msra.mxu0 %v3100
      %3269 = vmatpush.bf16.msra.mxu0 %v3098
      %3270 = vmatpush.bf16.msra.mxu0 %v3096
      %3271 = vmatpush.bf16.msra.mxu0 %v3094
      %3272 = vmatpush.bf16.msra.mxu0 %v3092
      %3273 = vmatpush.bf16.msra.mxu0 %v3090
      %3274 = vmatmul.bf16.gmra.mxu0 %v2808
      %v3275 = vpop.f32.mrf.mxu0
      %v3276 = vadd.f32 %v3263, %v3275
      %v3277 = vpop.f32.mrf.mxu0
      %3278 = vdwg.mxu0
      %3279 = vmatpush.bf16.msra.mxu0 %v3120
      %3280 = vmatpush.bf16.msra.mxu0 %v3118
      %3281 = vmatpush.bf16.msra.mxu0 %v3116
      %3282 = vmatpush.bf16.msra.mxu0 %v3114
      %3283 = vmatpush.bf16.msra.mxu0 %v3112
      %3284 = vmatpush.bf16.msra.mxu0 %v3110
      %3285 = vmatpush.bf16.msra.mxu0 %v3108
      %3286 = vmatpush.bf16.msra.mxu0 %v3106
      %3287 = vmatmul.bf16.gmra.mxu0 %v2809
      %v3288 = vpop.f32.mrf.mxu0
      %v3289 = vadd.f32 %v3276, %v3288
      %v3290 = vpop.f32.mrf.mxu0
      %3291 = vdwg.mxu0
      %3292 = vmatpush.bf16.msra.mxu0 %v3136
      %3293 = vmatpush.bf16.msra.mxu0 %v3134
      %3294 = vmatpush.bf16.msra.mxu0 %v3132
      %3295 = vmatpush.bf16.msra.mxu0 %v3130
      %3296 = vmatpush.bf16.msra.mxu0 %v3128
      %3297 = vmatpush.bf16.msra.mxu0 %v3126
      %3298 = vmatpush.bf16.msra.mxu0 %v3124
      %3299 = vmatpush.bf16.msra.mxu0 %v3122
      %3300 = vmatmul.bf16.gmra.mxu0 %v2810
      %v3301 = vpop.f32.mrf.mxu0
      %v3302 = vadd.f32 %v3289, %v3301
      %v3303 = vpop.f32.mrf.mxu0
      %3304 = vdwg.mxu0
      %v3305 = vmax.f32 %v3250, 0.0
      %v3306 = vmax.f32 %v3302, 0.0
      %v3307 = vpack.c.bf16 %v3305, %v3305
      %v3308 = vpack.c.bf16 %v3306, %v3306
      %v3309 = vld [vmem:[%s9] sm:$0xf]
      %v3310 = vld [vmem:[%s9 + $0x4] sm:$0xf]
      %v3311 = vld [vmem:[%s9 + $0x8] sm:$0xf]
      %v3312 = vld [vmem:[%s9 + $0xc] sm:$0xf]
      %v3313 = vld [vmem:[%s9 + $0x10] sm:$0xf]
      %v3314 = vld [vmem:[%s9 + $0x14] sm:$0xf]
      %v3315 = vld [vmem:[%s9 + $0x18] sm:$0xf]
      %v3316 = vld [vmem:[%s9 + $0x1c] sm:$0xf]
      %v3317 = vld [vmem:[%s9 + $0x20] sm:$0xf]
      %v3318 = vld [vmem:[%s9 + $0x24] sm:$0xf]
      %v3319 = vld [vmem:[%s9 + $0x28] sm:$0xf]
      %v3320 = vld [vmem:[%s9 + $0x2c] sm:$0xf]
      %v3321 = vld [vmem:[%s9 + $0x30] sm:$0xf]
      %v3322 = vld [vmem:[%s9 + $0x34] sm:$0xf]
      %v3323 = vld [vmem:[%s9 + $0x38] sm:$0xf]
      %v3324 = vld [vmem:[%s9 + $0x3c] sm:$0xf]
      %v3325 = vld [vmem:[%s9 + $0x40] sm:$0xf]
      %v3326 = vld [vmem:[%s9 + $0x44] sm:$0xf]
      %v3327 = vld [vmem:[%s9 + $0x48] sm:$0xf]
      %v3328 = vld [vmem:[%s9 + $0x4c] sm:$0xf]
      %v3329 = vld [vmem:[%s9 + $0x50] sm:$0xf]
      %v3330 = vld [vmem:[%s9 + $0x54] sm:$0xf]
      %v3331 = vld [vmem:[%s9 + $0x58] sm:$0xf]
      %v3332 = vld [vmem:[%s9 + $0x5c] sm:$0xf]
      %v3333 = vld [vmem:[%s9 + $0x60] sm:$0xf]
      %v3334 = vld [vmem:[%s9 + $0x64] sm:$0xf]
      %v3335 = vld [vmem:[%s9 + $0x68] sm:$0xf]
      %v3336 = vld [vmem:[%s9 + $0x6c] sm:$0xf]
      %v3337 = vld [vmem:[%s9 + $0x70] sm:$0xf]
      %v3338 = vld [vmem:[%s9 + $0x74] sm:$0xf]
      %v3339 = vld [vmem:[%s9 + $0x78] sm:$0xf]
      %v3340 = vld [vmem:[%s9 + $0x7c] sm:$0xf]
      %v3341 = vld [vmem:[%s10] sm:$0x1]
      %v3343 = vperm.slane %v3341, 0
      %v3377 = vunpack.c.l.b16 %v3309
      %v3378 = vunpack.c.l.b16 %v3310
      %v3379 = vunpack.c.l.b16 %v3311
      %v3380 = vunpack.c.l.b16 %v3312
      %v3381 = vunpack.c.l.b16 %v3313
      %v3382 = vunpack.c.l.b16 %v3314
      %v3383 = vunpack.c.l.b16 %v3315
      %v3384 = vunpack.c.l.b16 %v3316
      %v3385 = vunpack.c.l.b16 %v3317
      %v3386 = vunpack.c.l.b16 %v3318
      %v3387 = vunpack.c.l.b16 %v3319
      %v3388 = vunpack.c.l.b16 %v3320
      %v3389 = vunpack.c.l.b16 %v3321
      %v3390 = vunpack.c.l.b16 %v3322
      %v3391 = vunpack.c.l.b16 %v3323
      %v3392 = vunpack.c.l.b16 %v3324
      %v3393 = vunpack.c.l.b16 %v3325
      %v3394 = vunpack.c.l.b16 %v3326
      %v3395 = vunpack.c.l.b16 %v3327
      %v3396 = vunpack.c.l.b16 %v3328
      %v3397 = vunpack.c.l.b16 %v3329
      %v3398 = vunpack.c.l.b16 %v3330
      %v3399 = vunpack.c.l.b16 %v3331
      %v3400 = vunpack.c.l.b16 %v3332
      %v3401 = vunpack.c.l.b16 %v3333
      %v3402 = vunpack.c.l.b16 %v3334
      %v3403 = vunpack.c.l.b16 %v3335
      %v3404 = vunpack.c.l.b16 %v3336
      %v3405 = vunpack.c.l.b16 %v3337
      %v3406 = vunpack.c.l.b16 %v3338
      %v3407 = vunpack.c.l.b16 %v3339
      %v3408 = vunpack.c.l.b16 %v3340
      %v3409 = vpack.c.b16 %v3378, %v3377
      %v3410 = vpack.c.b16 %v3380, %v3379
      %v3411 = vpack.c.b16 %v3382, %v3381
      %v3412 = vpack.c.b16 %v3384, %v3383
      %v3413 = vpack.c.b16 %v3386, %v3385
      %v3414 = vpack.c.b16 %v3388, %v3387
      %v3415 = vpack.c.b16 %v3390, %v3389
      %v3416 = vpack.c.b16 %v3392, %v3391
      %v3417 = vpack.c.b16 %v3394, %v3393
      %v3418 = vpack.c.b16 %v3396, %v3395
      %v3419 = vpack.c.b16 %v3398, %v3397
      %v3420 = vpack.c.b16 %v3400, %v3399
      %v3421 = vpack.c.b16 %v3402, %v3401
      %v3422 = vpack.c.b16 %v3404, %v3403
      %v3423 = vpack.c.b16 %v3406, %v3405
      %v3424 = vpack.c.b16 %v3408, %v3407
      %3441 = vmatpush.bf16.msra.mxu0 %v3416
      %3442 = vmatpush.bf16.msra.mxu0 %v3415
      %3443 = vmatpush.bf16.msra.mxu0 %v3414
      %3444 = vmatpush.bf16.msra.mxu0 %v3413
      %3445 = vmatpush.bf16.msra.mxu0 %v3412
      %3446 = vmatpush.bf16.msra.mxu0 %v3411
      %3447 = vmatpush.bf16.msra.mxu0 %v3410
      %3448 = vmatpush.bf16.msra.mxu0 %v3409
      %3449 = vmatmul.bf16.gmra.mxu0 %v3307
      %v3450 = vpop.f32.mrf.mxu0
      %v3451 = vadd.f32 %v3343, %v3450
      %v3452 = vpop.f32.mrf.mxu0
      %3453 = vdwg.mxu0
      %3454 = vmatpush.bf16.msra.mxu0 %v3424
      %3455 = vmatpush.bf16.msra.mxu0 %v3423
      %3456 = vmatpush.bf16.msra.mxu0 %v3422
      %3457 = vmatpush.bf16.msra.mxu0 %v3421
      %3458 = vmatpush.bf16.msra.mxu0 %v3420
      %3459 = vmatpush.bf16.msra.mxu0 %v3419
      %3460 = vmatpush.bf16.msra.mxu0 %v3418
      %3461 = vmatpush.bf16.msra.mxu0 %v3417
      %3462 = vmatmul.bf16.gmra.mxu0 %v3308
      %v3463 = vpop.f32.mrf.mxu0
      %v3464 = vadd.f32 %v3451, %v3463
      %v3465 = vpop.f32.mrf.mxu0
      %3466 = vdwg.mxu0
      %v3467 = vmax.f32 %v3464, 0.0
      %v3468 = vld [vmem:[%s11] sm:$0x1]
      %v3469 = vld [vmem:[#allocation3] sm:$0x1]
      %3471 = vset.pattern.permute.xlu0 0
      %3472 = vperm.xlu0 %3471, %v3469
      %v3473 = vpop.permute.xlu0 %3472
      %v3475 = vperm.slane %v3473, 0
      %3476 = vmatpush.xpose.msra.mxu0 0.0
      %3477 = vmatpush.xpose.msra.mxu0 0.0
      %3478 = vmatpush.xpose.msra.mxu0 0.0
      %3479 = vmatpush.xpose.msra.mxu0 0.0
      %3480 = vmatpush.xpose.msra.mxu0 0.0
      %3481 = vmatpush.xpose.msra.mxu0 0.0
      %3482 = vmatpush.xpose.msra.mxu0 0.0
      %3483 = vmatpush.xpose.msra.mxu0 0.0
      %3484 = vmatpush.xpose.msra.mxu0 0.0
      %3485 = vmatpush.xpose.msra.mxu0 0.0
      %3486 = vmatpush.xpose.msra.mxu0 0.0
      %3487 = vmatpush.xpose.msra.mxu0 0.0
      %3488 = vmatpush.xpose.msra.mxu0 0.0
      %3489 = vmatpush.xpose.msra.mxu0 0.0
      %3490 = vmatpush.xpose.msra.mxu0 0.0
      %3491 = vmatpush.xpose.msra.mxu0 %v3467
      %3492 = vmatmul.f32.gmra.mxu0 %v3468
      %v3493 = vpop.f32.mrf.mxu0
      %v3494 = vadd.f32 %v3475, %v3493
      %3495 = vdwg.mxu0
      %vm3496 = vcmask 8192
      %3497 = vst.msk [vmem:[#allocation7] sm:$0x1] %vm3496, %v3494
    $region65: #{critic_forward.1} parent=1 // pred_fallthru
      _
    // Predicated region
    $region66: #{critic_forward.1} parent=1 // pred_check
      _
    $region67: #{critic_forward.1} parent=1 // pred_check_branch
      %3499 = sbr.rel (0) target = $region69
    $region68: #{critic_forward.1} parent=1 // pred_region
      %3501 = vsyncadd [#allocation6], 0
      %s3503 = sshll.u32 [#allocation7], 4
      %s3504 = int_to_ptr.vmem [resolvable:$true] %s3503
      %s3505 = sshll.u32 %s13, 4
      %s3506 = int_to_ptr.hbm [resolvable:$true] %s3505
      %3508 = dma.vmem_to_hbm [thread:$0]  %s3504, 16, %s3506, [#allocation6]
    $region69: #{critic_forward.1} parent=1 // pred_fallthru
      _
    // Predicated region
    $region70: #{critic_forward.1} parent=1 // pred_check
      _
    $region71: #{critic_forward.1} parent=1 // pred_check_branch
      %3510 = sbr.rel (0) target = $region73
    $region72: #{critic_forward.1} parent=1 // pred_region
      %3512 = dma.done [#allocation6], 16
    $region73: #{critic_forward.1} parent=1 // pred_fallthru
      _
    %3513 = vsyncpa [#allocation5], 1
    %3514 = vsyncpa [#allocation6], 1

</llo_original>
